<compile_context>
chip_gen: v7x
topology: tpu7x:2x2x1
jax: 0.10.0
libtpu: 0.0.40
codegen_flags: <defaults>
</compile_context>

<pallas_src>
import functools
import math

import jax
import jax.numpy as jnp
from jax.experimental import pallas as pl
from jax.experimental.pallas import tpu as pltpu

LN_EPS = 1e-5  # PyTorch nn.LayerNorm default


def _layernorm(v, g, b):
    mu = jnp.mean(v, axis=-1, keepdims=True)
    var = jnp.mean((v - mu) ** 2, axis=-1, keepdims=True)
    return (v - mu) * jax.lax.rsqrt(var + LN_EPS) * g + b


def _gelu_exact(x):
    # exact erf-based GELU (matches PyTorch nn.GELU() default)
    return 0.5 * x * (1.0 + jax.lax.erf(x * (1.0 / math.sqrt(2.0))))


def _pick_batch_block(B, T, target_rows=256, max_rows=2048):
    """Largest divisor BB of B with BB*T <= max_rows, preferring BB*T >= target_rows."""
    divisors = [d for d in range(1, B + 1) if B % d == 0]
    feasible = [d for d in divisors if d * T <= max_rows] or [1]
    for d in feasible:
        if d * T >= target_rows:
            return d
    return feasible[-1]


def _make_kernel(*, num_layers, num_heads, batch_block, seq_len):
    L, NH, BB, T = num_layers, num_heads, batch_block, seq_len

    def kernel(x_ref, w_in_ref, pos_ref,
               ln1_g_ref, ln1_b_ref, wqkv_ref, bqkv_ref, wo_ref, bo_ref,
               ln2_g_ref, ln2_b_ref, w1_ref, b1_ref, w2_ref, b2_ref,
               lnf_g_ref, lnf_b_ref, out_ref):
        C = x_ref.shape[2]
        H = w_in_ref.shape[1]
        dh = H // NH
        M = BB * T       # flattened rows fed to every MXU matmul
        G = BB * NH      # attention batch (all heads of all sequences at once)

        # ---- input projection + positional encodings (bias folded into pos)
        x = x_ref[...].reshape(M, C).astype(jnp.bfloat16)              # (M, C)
        h = jnp.dot(x, w_in_ref[...], preferred_element_type=jnp.float32)
        h = (h.reshape(BB, T, H) + pos_ref[...]).reshape(M, H)         # f32

        def split_heads(z):
            # (M, H) -> (G, T, dh) bf16.
            # TODO(synk): replace the dh-wide lane slices + stack with a single
            # lane-splitting reshape/einshape once Mosaic relayout handles it
            # robustly; slices+stack is the proven-to-lower path.
            zs = [z[:, i * dh:(i + 1) * dh].reshape(BB, T, dh) for i in range(NH)]
            return jnp.stack(zs, axis=0).reshape(G, T, dh).astype(jnp.bfloat16)

        def merge_heads(z):
            # (G, T, dh) -> (M, H)
            z = z.reshape(NH, BB, T, dh)
            return jnp.concatenate([z[i] for i in range(NH)], axis=-1).reshape(M, H)

        def layer_body(l, h):
            # ---- self-attention (pre-norm); 1/sqrt(dh) already folded into wqkv
            y = _layernorm(h, ln1_g_ref[l], ln1_b_ref[l])
            qkv = jnp.dot(y.astype(jnp.bfloat16), wqkv_ref[l],
                          preferred_element_type=jnp.float32) + bqkv_ref[l]
            qh = split_heads(qkv[:, 0 * H:1 * H])
            kh = split_heads(qkv[:, 1 * H:2 * H])
            vh = split_heads(qkv[:, 2 * H:3 * H])

            s = jnp.einsum('gqd,gkd->gqk', qh, kh,
                           preferred_element_type=jnp.float32)         # (G,T,T)
            s = s - jnp.max(s, axis=-1, keepdims=True)
            p = jnp.exp(s)
            p = p * pl.reciprocal(jnp.sum(p, axis=-1, keepdims=True), approx=True)

            ctx = jnp.einsum('gqk,gkd->gqd', p.astype(jnp.bfloat16), vh,
                             preferred_element_type=jnp.float32)       # (G,T,dh)
            attn = jnp.dot(merge_heads(ctx).astype(jnp.bfloat16), wo_ref[l],
                           preferred_element_type=jnp.float32) + bo_ref[l]
            h = h + attn

            # ---- feed-forward (pre-norm)
            y = _layernorm(h, ln2_g_ref[l], ln2_b_ref[l])
            f = jnp.dot(y.astype(jnp.bfloat16), w1_ref[l],
                        preferred_element_type=jnp.float32) + b1_ref[l]
            f = _gelu_exact(f)
            f = jnp.dot(f.astype(jnp.bfloat16), w2_ref[l],
                        preferred_element_type=jnp.float32) + b2_ref[l]
            return h + f

        if L <= 4:
            # small layer counts: fully static unrolled loop, static ref indices
            for l in range(L):
                h = layer_body(l, h)
        else:
            # larger models: rolled loop (bounds live ranges, dynamic ref index)
            h = jax.lax.fori_loop(0, L, layer_body, h)

        out = _layernorm(h, lnf_g_ref[...], lnf_b_ref[...])
        out_ref[...] = out.reshape(BB, T, H).astype(out_ref.dtype)

    return kernel


def prepare_params(params, *, num_heads):
    """One-time parameter prep (NOT per-call): bf16 casts, Q-scale folding,
    spatial+temporal+input-bias pre-combined into one positional table."""
    H = params["w_in"].shape[1]
    dh = H // num_heads
    scale = 1.0 / math.sqrt(dh)

    # fold 1/sqrt(dh) into the Q columns (weights AND bias)
    wqkv = params["wqkv"].at[:, :, :H].multiply(scale)
    bqkv = params["bqkv"].at[:, :, :H].multiply(scale)

    max_t = min(params["spatial"].shape[1], params["temporal"].shape[1])
    pos = (params["spatial"][0, :max_t, :] + params["temporal"][0, :max_t, :]
           + params["b_in"][None, :]).astype(jnp.float32)

    bf16 = jnp.bfloat16
    f32 = jnp.float32
    return {
        "w_in": params["w_in"].astype(bf16),
        "pos": pos,
        "ln1_g": params["ln1_g"].astype(f32), "ln1_b": params["ln1_b"].astype(f32),
        "wqkv": wqkv.astype(bf16), "bqkv": bqkv.astype(f32),
        "wo": params["wo"].astype(bf16), "bo": params["bo"].astype(f32),
        "ln2_g": params["ln2_g"].astype(f32), "ln2_b": params["ln2_b"].astype(f32),
        "w1": params["w1"].astype(bf16), "b1": params["b1"].astype(f32),
        "w2": params["w2"].astype(bf16), "b2": params["b2"].astype(f32),
        "lnf_g": params["lnf_g"].reshape(1, H).astype(f32),
        "lnf_b": params["lnf_b"].reshape(1, H).astype(f32),
    }


def eeg_encoder_forward(eeg_data, prepped, *, num_layers, num_heads,
                        batch_block=None):
    """eeg_data: (B, C, T) float32.  prepped: output of prepare_params().
    Returns dict with last_hidden_state (B, T, H)."""
    B, C, T = eeg_data.shape
    H = prepped["w_in"].shape[1]
    assert H % num_heads == 0
    assert C >= T, "spatial_encoding[:, :T] slice (PyTorch quirk) requires C >= T"
    assert prepped["pos"].shape[0] >= T

    BB = batch_block or _pick_batch_block(B, T)
    assert B % BB == 0
    num_blocks = B // BB
    # NOTE: on v7x prefer an even num_blocks so the "parallel" axis splits
    # across both TensorCores.

    # small per-call glue: (B,C,T) -> (B,T,C) so the input projection is a
    # plain (BB*T, C) @ (C, H) MXU matmul inside the kernel.
    x = jnp.transpose(eeg_data, (0, 2, 1)).astype(jnp.float32)
    pos = prepped["pos"][:T]

    inputs = [
        x, prepped["w_in"], pos,
        prepped["ln1_g"], prepped["ln1_b"], prepped["wqkv"], prepped["bqkv"],
        prepped["wo"], prepped["bo"], prepped["ln2_g"], prepped["ln2_b"],
        prepped["w1"], prepped["b1"], prepped["w2"], prepped["b2"],
        prepped["lnf_g"], prepped["lnf_b"],
    ]

    def const_spec(a):
        r = a.ndim
        return pl.BlockSpec(a.shape, lambda b, _r=r: (0,) * _r)

    in_specs = [pl.BlockSpec((BB, T, C), lambda b: (b, 0, 0))]
    in_specs += [const_spec(a) for a in inputs[1:]]

    # explicit, modest VMEM budget (don't request all of v7x's 64 MiB)
    weight_bytes = sum(int(a.size) * a.dtype.itemsize for a in inputs[1:])
    act_bytes = BB * T * 4 * H * 4 * 8          # rough f32 activation working set
    io_bytes = (BB * T * C + BB * T * H) * 4 * 2
    vmem_limit = int(min(48 * 1024 * 1024,
                         max(8 * 1024 * 1024,
                             2 * weight_bytes + act_bytes + io_bytes + (2 << 20))))

    kernel = _make_kernel(num_layers=num_layers, num_heads=num_heads,
                          batch_block=BB, seq_len=T)

    last_hidden = pl.pallas_call(
        kernel,
        out_shape=jax.ShapeDtypeStruct((B, T, H), jnp.float32),
        grid=(num_blocks,),
        in_specs=in_specs,
        out_specs=pl.BlockSpec((BB, T, H), lambda b: (b, 0, 0)),
        compiler_params=pltpu.CompilerParams(
            dimension_semantics=("parallel",),
            vmem_limit_bytes=vmem_limit),
    )(*inputs)

    attention_mask = jnp.ones((B, T), dtype=jnp.bool_)
    return {"last_hidden_state": last_hidden, "attention_mask": attention_mask}


def eeg_encoder_reference(eeg_data, params, *, num_layers, num_heads):
    """Pure-JAX f32 reference (uses the RAW, un-prepped params)."""
    B, C, T = eeg_data.shape
    H = params["w_in"].shape[1]
    dh = H // num_heads
    h = jnp.transpose(eeg_data, (0, 2, 1)).astype(jnp.float32) @ params["w_in"]
    h = h + params["b_in"]
    h = h + params["spatial"][:, :T, :] + params["temporal"][:, :T, :]
    for l in range(num_layers):
        y = _layernorm(h, params["ln1_g"][l], params["ln1_b"][l])
        qkv = y @ params["wqkv"][l] + params["bqkv"][l]
        q, k, v = qkv[..., :H], qkv[..., H:2 * H], qkv[..., 2 * H:]
        q = q.reshape(B, T, num_heads, dh).transpose(0, 2, 1, 3) / math.sqrt(dh)
        k = k.reshape(B, T, num_heads, dh).transpose(0, 2, 1, 3)
        v = v.reshape(B, T, num_heads, dh).transpose(0, 2, 1, 3)
        p = jax.nn.softmax(q @ jnp.swapaxes(k, -1, -2), axis=-1)
        ctx = (p @ v).transpose(0, 2, 1, 3).reshape(B, T, H)
        h = h + (ctx @ params["wo"][l] + params["bo"][l])
        y = _layernorm(h, params["ln2_g"][l], params["ln2_b"][l])
        f = _gelu_exact(y @ params["w1"][l] + params["b1"][l])
        h = h + (f @ params["w2"][l] + params["b2"][l])
    return _layernorm(h, params["lnf_g"], params["lnf_b"])


def init_params(key, *, input_channels, hidden_dim, num_layers,
                max_sequence_length):
    C, H, L = input_channels, hidden_dim, num_layers
    ks = jax.random.split(key, 16)

    def xavier(k, shape):
        fan_in, fan_out = shape[-2], shape[-1]
        a = math.sqrt(6.0 / (fan_in + fan_out))
        return jax.random.uniform(k, shape, jnp.float32, -a, a)

    return {
        # input projection (stored transposed: (C, H) so x @ w)
        "w_in": xavier(ks[0], (C, H)),
        "b_in": jnp.zeros((H,), jnp.float32),
        # positional encodings (same shapes as the nn.Parameters)
        "spatial": 0.02 * jax.random.normal(ks[1], (1, C, H), jnp.float32),
        "temporal": 0.02 * jax.random.normal(
            ks[2], (1, max_sequence_length, H), jnp.float32),
        # per-layer parameters, stacked along a leading L axis
        "ln1_g": jnp.ones((L, 1, H), jnp.float32),
        "ln1_b": jnp.zeros((L, 1, H), jnp.float32),
        "wqkv": xavier(ks[3], (L, H, 3 * H)),       # in_proj_weight.T
        "bqkv": jnp.zeros((L, 1, 3 * H), jnp.float32),
        "wo": xavier(ks[4], (L, H, H)),             # out_proj.weight.T
        "bo": jnp.zeros((L, 1, H), jnp.float32),
        "ln2_g": jnp.ones((L, 1, H), jnp.float32),
        "ln2_b": jnp.zeros((L, 1, H), jnp.float32),
        "w1": xavier(ks[5], (L, H, 4 * H)),
        "b1": 0.01 * jax.random.normal(ks[6], (L, 1, 4 * H), jnp.float32),
        "w2": xavier(ks[7], (L, 4 * H, H)),
        "b2": 0.01 * jax.random.normal(ks[8], (L, 1, H), jnp.float32),
        # final LayerNorm
        "lnf_g": jnp.ones((H,), jnp.float32),
        "lnf_b": jnp.zeros((H,), jnp.float32),
    }


if __name__ == "__main__":
    # small config: batch=2, input_channels=16, seq_len=8, hidden=128 (lane
    # dense), heads=4, layers=2, max_sequence_length=16  (C >= T required)
    B, C, T = 2, 16, 8
    H, NH, L, MAXSEQ = 128, 4, 2, 16

    key = jax.random.PRNGKey(0)
    k_data, k_params = jax.random.split(key)

    # eeg_data has the PyTorch layout (batch, channels, time)
    eeg_data = jax.random.normal(k_data, (B, C, T), jnp.float32)
    params = init_params(k_params, input_channels=C, hidden_dim=H,
                         num_layers=L, max_sequence_length=MAXSEQ)

    # one-time weight prep (bf16 cast, Q-scale fold, pos/bias pre-combine)
    prepped = prepare_params(params, num_heads=NH)

    fwd = functools.partial(eeg_encoder_forward, num_layers=L, num_heads=NH)
    out = fwd(eeg_data, prepped)
    jax.block_until_ready(out["last_hidden_state"])

    assert out["last_hidden_state"].shape == (B, T, H)
    assert out["attention_mask"].shape == (B, T)

    # loose tolerance: kernel uses bf16 matmul inputs + approx reciprocal
    ref = eeg_encoder_reference(eeg_data, params, num_layers=L, num_heads=NH)
    err = float(jnp.max(jnp.abs(out["last_hidden_state"] - ref)))
    assert err < 0.2, f"kernel vs f32 reference max abs error too large: {err}"

    print("KERNEL_OK")
</pallas_src>

<mosaic_0001>
module attributes {stable_mosaic.version = 11 : i64} {
  func.func @kernel(%arg0: i32, %arg1: memref<2x8x16xf32, #tpu.memory_space<vmem>>, %arg2: memref<16x128xbf16, #tpu.memory_space<vmem>>, %arg3: memref<8x128xf32, #tpu.memory_space<vmem>>, %arg4: memref<2x1x128xf32, #tpu.memory_space<vmem>>, %arg5: memref<2x1x128xf32, #tpu.memory_space<vmem>>, %arg6: memref<2x128x384xbf16, #tpu.memory_space<vmem>>, %arg7: memref<2x1x384xf32, #tpu.memory_space<vmem>>, %arg8: memref<2x128x128xbf16, #tpu.memory_space<vmem>>, %arg9: memref<2x1x128xf32, #tpu.memory_space<vmem>>, %arg10: memref<2x1x128xf32, #tpu.memory_space<vmem>>, %arg11: memref<2x1x128xf32, #tpu.memory_space<vmem>>, %arg12: memref<2x128x512xbf16, #tpu.memory_space<vmem>>, %arg13: memref<2x1x512xf32, #tpu.memory_space<vmem>>, %arg14: memref<2x512x128xbf16, #tpu.memory_space<vmem>>, %arg15: memref<2x1x128xf32, #tpu.memory_space<vmem>>, %arg16: memref<1x128xf32, #tpu.memory_space<vmem>>, %arg17: memref<1x128xf32, #tpu.memory_space<vmem>>, %arg18: memref<2x8x128xf32, #tpu.memory_space<vmem>>) attributes {dimension_semantics = [#tpu.dimension_semantics<parallel>], iteration_bounds = array<i64: 1>, scalar_prefetch = 0 : i64, scratch_operands = 0 : i64, tpu.core_type = #tpu.core_type<tc>, window_params = [{transform_indices = @transform_0, window_bounds = array<i64: 2, 8, 16>}, {pipeline_mode = #tpu.pipeline_mode<synchronous>, transform_indices = @transform_1, window_bounds = array<i64: 16, 128>}, {pipeline_mode = #tpu.pipeline_mode<synchronous>, transform_indices = @transform_2, window_bounds = array<i64: 8, 128>}, {pipeline_mode = #tpu.pipeline_mode<synchronous>, transform_indices = @transform_3, window_bounds = array<i64: 2, 1, 128>}, {pipeline_mode = #tpu.pipeline_mode<synchronous>, transform_indices = @transform_4, window_bounds = array<i64: 2, 1, 128>}, {pipeline_mode = #tpu.pipeline_mode<synchronous>, transform_indices = @transform_5, window_bounds = array<i64: 2, 128, 384>}, {pipeline_mode = #tpu.pipeline_mode<synchronous>, transform_indices = @transform_6, window_bounds = array<i64: 2, 1, 384>}, {pipeline_mode = #tpu.pipeline_mode<synchronous>, transform_indices = @transform_7, window_bounds = array<i64: 2, 128, 128>}, {pipeline_mode = #tpu.pipeline_mode<synchronous>, transform_indices = @transform_8, window_bounds = array<i64: 2, 1, 128>}, {pipeline_mode = #tpu.pipeline_mode<synchronous>, transform_indices = @transform_9, window_bounds = array<i64: 2, 1, 128>}, {pipeline_mode = #tpu.pipeline_mode<synchronous>, transform_indices = @transform_10, window_bounds = array<i64: 2, 1, 128>}, {pipeline_mode = #tpu.pipeline_mode<synchronous>, transform_indices = @transform_11, window_bounds = array<i64: 2, 128, 512>}, {pipeline_mode = #tpu.pipeline_mode<synchronous>, transform_indices = @transform_12, window_bounds = array<i64: 2, 1, 512>}, {pipeline_mode = #tpu.pipeline_mode<synchronous>, transform_indices = @transform_13, window_bounds = array<i64: 2, 512, 128>}, {pipeline_mode = #tpu.pipeline_mode<synchronous>, transform_indices = @transform_14, window_bounds = array<i64: 2, 1, 128>}, {pipeline_mode = #tpu.pipeline_mode<synchronous>, transform_indices = @transform_15, window_bounds = array<i64: 1, 128>}, {pipeline_mode = #tpu.pipeline_mode<synchronous>, transform_indices = @transform_16, window_bounds = array<i64: 1, 128>}, {transform_indices = @transform_17, window_bounds = array<i64: 2, 8, 128>}]} {
    %c0 = arith.constant 0 : index
    %c0_0 = arith.constant 0 : index
    %c0_1 = arith.constant 0 : index
    %0 = vector.load %arg1[%c0, %c0_0, %c0_1] : memref<2x8x16xf32, #tpu.memory_space<vmem>>, vector<2x8x16xf32>
    %1 = vector.shape_cast %0 : vector<2x8x16xf32> to vector<16x16xf32>
    %2 = arith.truncf %1 : vector<16x16xf32> to vector<16x16xbf16>
    %c0_2 = arith.constant 0 : index
    %c0_3 = arith.constant 0 : index
    %3 = vector.load %arg2[%c0_2, %c0_3] : memref<16x128xbf16, #tpu.memory_space<vmem>>, vector<16x128xbf16>
    %cst = arith.constant dense<0.000000e+00> : vector<16x128xf32>
    %4 = tpu.matmul %2, %3, %cst {dimension_numbers = #tpu.dot_dimension_numbers<[1], [0], [0], [1], [0, 0, 1, 1], [], []>} : vector<16x16xbf16>, vector<16x128xbf16>, vector<16x128xf32> -> vector<16x128xf32>
    %5 = vector.shape_cast %4 : vector<16x128xf32> to vector<2x8x128xf32>
    %c0_4 = arith.constant 0 : index
    %c0_5 = arith.constant 0 : index
    %6 = vector.load %arg3[%c0_4, %c0_5] : memref<8x128xf32, #tpu.memory_space<vmem>>, vector<8x128xf32>
    %7 = vector.shape_cast %6 : vector<8x128xf32> to vector<1x8x128xf32>
    %8 = vector.broadcast %7 : vector<1x8x128xf32> to vector<2x8x128xf32>
    %9 = arith.addf %5, %8 : vector<2x8x128xf32>
    %10 = vector.shape_cast %9 : vector<2x8x128xf32> to vector<16x128xf32>
    %c0_6 = arith.constant 0 : index
    %c0_7 = arith.constant 0 : index
    %c0_8 = arith.constant 0 : index
    %11 = vector.load %arg4[%c0_6, %c0_7, %c0_8] : memref<2x1x128xf32, #tpu.memory_space<vmem>>, vector<1x1x128xf32>
    %12 = vector.shape_cast %11 : vector<1x1x128xf32> to vector<1x128xf32>
    %c0_9 = arith.constant 0 : index
    %c0_10 = arith.constant 0 : index
    %c0_11 = arith.constant 0 : index
    %13 = vector.load %arg5[%c0_9, %c0_10, %c0_11] : memref<2x1x128xf32, #tpu.memory_space<vmem>>, vector<1x1x128xf32>
    %14 = vector.shape_cast %13 : vector<1x1x128xf32> to vector<1x128xf32>
    %cst_12 = arith.constant dense<0.000000e+00> : vector<16xf32>
    %15 = vector.multi_reduction <add>, %10, %cst_12 [1] : vector<16x128xf32> to vector<16xf32>
    %16 = vector.shape_cast %15 : vector<16xf32> to vector<16x1xf32>
    %cst_13 = arith.constant 1.280000e+02 : f32
    %17 = vector.broadcast %cst_13 : f32 to vector<16x1xf32>
    %18 = arith.divf %16, %17 : vector<16x1xf32>
    %19 = vector.broadcast %18 : vector<16x1xf32> to vector<16x128xf32>
    %20 = arith.subf %10, %19 : vector<16x128xf32>
    %21 = arith.mulf %20, %20 : vector<16x128xf32>
    %cst_14 = arith.constant dense<0.000000e+00> : vector<16xf32>
    %22 = vector.multi_reduction <add>, %21, %cst_14 [1] : vector<16x128xf32> to vector<16xf32>
    %23 = vector.shape_cast %22 : vector<16xf32> to vector<16x1xf32>
    %cst_15 = arith.constant 1.280000e+02 : f32
    %24 = vector.broadcast %cst_15 : f32 to vector<16x1xf32>
    %25 = arith.divf %23, %24 : vector<16x1xf32>
    %26 = vector.broadcast %18 : vector<16x1xf32> to vector<16x128xf32>
    %27 = arith.subf %10, %26 : vector<16x128xf32>
    %cst_16 = arith.constant 9.99999974E-6 : f32
    %28 = vector.broadcast %cst_16 : f32 to vector<16x1xf32>
    %29 = arith.addf %25, %28 : vector<16x1xf32>
    %30 = math.rsqrt %29 : vector<16x1xf32>
    %31 = vector.broadcast %30 : vector<16x1xf32> to vector<16x128xf32>
    %32 = arith.mulf %27, %31 : vector<16x128xf32>
    %33 = vector.broadcast %12 : vector<1x128xf32> to vector<16x128xf32>
    %34 = arith.mulf %32, %33 : vector<16x128xf32>
    %35 = vector.broadcast %14 : vector<1x128xf32> to vector<16x128xf32>
    %36 = arith.addf %34, %35 : vector<16x128xf32>
    %37 = arith.truncf %36 : vector<16x128xf32> to vector<16x128xbf16>
    %c0_17 = arith.constant 0 : index
    %c0_18 = arith.constant 0 : index
    %c0_19 = arith.constant 0 : index
    %38 = vector.load %arg6[%c0_17, %c0_18, %c0_19] : memref<2x128x384xbf16, #tpu.memory_space<vmem>>, vector<1x128x384xbf16>
    %39 = vector.shape_cast %38 : vector<1x128x384xbf16> to vector<128x384xbf16>
    %cst_20 = arith.constant dense<0.000000e+00> : vector<16x384xf32>
    %40 = tpu.matmul %37, %39, %cst_20 {dimension_numbers = #tpu.dot_dimension_numbers<[1], [0], [0], [1], [0, 0, 1, 1], [], []>} : vector<16x128xbf16>, vector<128x384xbf16>, vector<16x384xf32> -> vector<16x384xf32>
    %c0_21 = arith.constant 0 : index
    %c0_22 = arith.constant 0 : index
    %c0_23 = arith.constant 0 : index
    %41 = vector.load %arg7[%c0_21, %c0_22, %c0_23] : memref<2x1x384xf32, #tpu.memory_space<vmem>>, vector<1x1x384xf32>
    %42 = vector.shape_cast %41 : vector<1x1x384xf32> to vector<1x384xf32>
    %43 = vector.broadcast %42 : vector<1x384xf32> to vector<16x384xf32>
    %44 = arith.addf %40, %43 : vector<16x384xf32>
    %45 = vector.extract_strided_slice %44 {offsets = [0, 0], sizes = [16, 128], strides = [1, 1]} : vector<16x384xf32> to vector<16x128xf32>
    %46 = vector.extract_strided_slice %45 {offsets = [0, 0], sizes = [16, 32], strides = [1, 1]} : vector<16x128xf32> to vector<16x32xf32>
    %47 = vector.shape_cast %46 : vector<16x32xf32> to vector<2x8x32xf32>
    %48 = vector.extract_strided_slice %45 {offsets = [0, 32], sizes = [16, 32], strides = [1, 1]} : vector<16x128xf32> to vector<16x32xf32>
    %49 = vector.shape_cast %48 : vector<16x32xf32> to vector<2x8x32xf32>
    %50 = vector.extract_strided_slice %45 {offsets = [0, 64], sizes = [16, 32], strides = [1, 1]} : vector<16x128xf32> to vector<16x32xf32>
    %51 = vector.shape_cast %50 : vector<16x32xf32> to vector<2x8x32xf32>
    %52 = vector.extract_strided_slice %45 {offsets = [0, 96], sizes = [16, 32], strides = [1, 1]} : vector<16x128xf32> to vector<16x32xf32>
    %53 = vector.shape_cast %52 : vector<16x32xf32> to vector<2x8x32xf32>
    %54 = vector.shape_cast %47 : vector<2x8x32xf32> to vector<1x2x8x32xf32>
    %55 = vector.shape_cast %49 : vector<2x8x32xf32> to vector<1x2x8x32xf32>
    %56 = vector.shape_cast %51 : vector<2x8x32xf32> to vector<1x2x8x32xf32>
    %57 = vector.shape_cast %53 : vector<2x8x32xf32> to vector<1x2x8x32xf32>
    %58 = tpu.concatenate %54, %55, %56, %57 in 0 : vector<1x2x8x32xf32>, vector<1x2x8x32xf32>, vector<1x2x8x32xf32>, vector<1x2x8x32xf32> -> vector<4x2x8x32xf32>
    %59 = vector.shape_cast %58 : vector<4x2x8x32xf32> to vector<8x8x32xf32>
    %60 = arith.truncf %59 : vector<8x8x32xf32> to vector<8x8x32xbf16>
    %61 = vector.extract_strided_slice %44 {offsets = [0, 128], sizes = [16, 128], strides = [1, 1]} : vector<16x384xf32> to vector<16x128xf32>
    %62 = vector.extract_strided_slice %61 {offsets = [0, 0], sizes = [16, 32], strides = [1, 1]} : vector<16x128xf32> to vector<16x32xf32>
    %63 = vector.shape_cast %62 : vector<16x32xf32> to vector<2x8x32xf32>
    %64 = vector.extract_strided_slice %61 {offsets = [0, 32], sizes = [16, 32], strides = [1, 1]} : vector<16x128xf32> to vector<16x32xf32>
    %65 = vector.shape_cast %64 : vector<16x32xf32> to vector<2x8x32xf32>
    %66 = vector.extract_strided_slice %61 {offsets = [0, 64], sizes = [16, 32], strides = [1, 1]} : vector<16x128xf32> to vector<16x32xf32>
    %67 = vector.shape_cast %66 : vector<16x32xf32> to vector<2x8x32xf32>
    %68 = vector.extract_strided_slice %61 {offsets = [0, 96], sizes = [16, 32], strides = [1, 1]} : vector<16x128xf32> to vector<16x32xf32>
    %69 = vector.shape_cast %68 : vector<16x32xf32> to vector<2x8x32xf32>
    %70 = vector.shape_cast %63 : vector<2x8x32xf32> to vector<1x2x8x32xf32>
    %71 = vector.shape_cast %65 : vector<2x8x32xf32> to vector<1x2x8x32xf32>
    %72 = vector.shape_cast %67 : vector<2x8x32xf32> to vector<1x2x8x32xf32>
    %73 = vector.shape_cast %69 : vector<2x8x32xf32> to vector<1x2x8x32xf32>
    %74 = tpu.concatenate %70, %71, %72, %73 in 0 : vector<1x2x8x32xf32>, vector<1x2x8x32xf32>, vector<1x2x8x32xf32>, vector<1x2x8x32xf32> -> vector<4x2x8x32xf32>
    %75 = vector.shape_cast %74 : vector<4x2x8x32xf32> to vector<8x8x32xf32>
    %76 = arith.truncf %75 : vector<8x8x32xf32> to vector<8x8x32xbf16>
    %77 = vector.extract_strided_slice %44 {offsets = [0, 256], sizes = [16, 128], strides = [1, 1]} : vector<16x384xf32> to vector<16x128xf32>
    %78 = vector.extract_strided_slice %77 {offsets = [0, 0], sizes = [16, 32], strides = [1, 1]} : vector<16x128xf32> to vector<16x32xf32>
    %79 = vector.shape_cast %78 : vector<16x32xf32> to vector<2x8x32xf32>
    %80 = vector.extract_strided_slice %77 {offsets = [0, 32], sizes = [16, 32], strides = [1, 1]} : vector<16x128xf32> to vector<16x32xf32>
    %81 = vector.shape_cast %80 : vector<16x32xf32> to vector<2x8x32xf32>
    %82 = vector.extract_strided_slice %77 {offsets = [0, 64], sizes = [16, 32], strides = [1, 1]} : vector<16x128xf32> to vector<16x32xf32>
    %83 = vector.shape_cast %82 : vector<16x32xf32> to vector<2x8x32xf32>
    %84 = vector.extract_strided_slice %77 {offsets = [0, 96], sizes = [16, 32], strides = [1, 1]} : vector<16x128xf32> to vector<16x32xf32>
    %85 = vector.shape_cast %84 : vector<16x32xf32> to vector<2x8x32xf32>
    %86 = vector.shape_cast %79 : vector<2x8x32xf32> to vector<1x2x8x32xf32>
    %87 = vector.shape_cast %81 : vector<2x8x32xf32> to vector<1x2x8x32xf32>
    %88 = vector.shape_cast %83 : vector<2x8x32xf32> to vector<1x2x8x32xf32>
    %89 = vector.shape_cast %85 : vector<2x8x32xf32> to vector<1x2x8x32xf32>
    %90 = tpu.concatenate %86, %87, %88, %89 in 0 : vector<1x2x8x32xf32>, vector<1x2x8x32xf32>, vector<1x2x8x32xf32>, vector<1x2x8x32xf32> -> vector<4x2x8x32xf32>
    %91 = vector.shape_cast %90 : vector<4x2x8x32xf32> to vector<8x8x32xf32>
    %92 = arith.truncf %91 : vector<8x8x32xf32> to vector<8x8x32xbf16>
    "tpu.trace_start"() <{level = 10 : i32, message = "gqd,gkd->gqk"}> : () -> ()
    %cst_24 = arith.constant dense<0.000000e+00> : vector<8x8x8xf32>
    %93 = tpu.matmul %60, %76, %cst_24 {dimension_numbers = #tpu.dot_dimension_numbers<[2], [2], [1], [1], [0, 0, 0, 1, 1, 1], [0], [0]>} : vector<8x8x32xbf16>, vector<8x8x32xbf16>, vector<8x8x8xf32> -> vector<8x8x8xf32>
    "tpu.trace_stop"() : () -> ()
    %cst_25 = arith.constant dense<0xFF800000> : vector<8x8xf32>
    %94 = vector.multi_reduction <maximumf>, %93, %cst_25 [2] : vector<8x8x8xf32> to vector<8x8xf32>
    %95 = vector.shape_cast %94 : vector<8x8xf32> to vector<8x8x1xf32>
    %96 = vector.broadcast %95 : vector<8x8x1xf32> to vector<8x8x8xf32>
    %97 = arith.subf %93, %96 : vector<8x8x8xf32>
    %98 = math.exp %97 : vector<8x8x8xf32>
    %cst_26 = arith.constant dense<0.000000e+00> : vector<8x8xf32>
    %99 = vector.multi_reduction <add>, %98, %cst_26 [2] : vector<8x8x8xf32> to vector<8x8xf32>
    %100 = vector.shape_cast %99 : vector<8x8xf32> to vector<8x8x1xf32>
    %101 = tpu.reciprocal %100 {approx = true} : vector<8x8x1xf32> -> vector<8x8x1xf32>
    %102 = vector.broadcast %101 : vector<8x8x1xf32> to vector<8x8x8xf32>
    %103 = arith.mulf %98, %102 : vector<8x8x8xf32>
    %104 = arith.truncf %103 : vector<8x8x8xf32> to vector<8x8x8xbf16>
    "tpu.trace_start"() <{level = 10 : i32, message = "gqk,gkd->gqd"}> : () -> ()
    %cst_27 = arith.constant dense<0.000000e+00> : vector<8x8x32xf32>
    %105 = tpu.matmul %104, %92, %cst_27 {dimension_numbers = #tpu.dot_dimension_numbers<[2], [1], [1], [2], [0, 0, 0, 1, 1, 2], [0], [0]>} : vector<8x8x8xbf16>, vector<8x8x32xbf16>, vector<8x8x32xf32> -> vector<8x8x32xf32>
    "tpu.trace_stop"() : () -> ()
    %106 = vector.shape_cast %105 : vector<8x8x32xf32> to vector<4x2x8x32xf32>
    %107 = vector.extract_strided_slice %106 {offsets = [0, 0, 0, 0], sizes = [1, 2, 8, 32], strides = [1, 1, 1, 1]} : vector<4x2x8x32xf32> to vector<1x2x8x32xf32>
    %108 = vector.shape_cast %107 : vector<1x2x8x32xf32> to vector<2x8x32xf32>
    %109 = vector.extract_strided_slice %106 {offsets = [1, 0, 0, 0], sizes = [1, 2, 8, 32], strides = [1, 1, 1, 1]} : vector<4x2x8x32xf32> to vector<1x2x8x32xf32>
    %110 = vector.shape_cast %109 : vector<1x2x8x32xf32> to vector<2x8x32xf32>
    %111 = vector.extract_strided_slice %106 {offsets = [2, 0, 0, 0], sizes = [1, 2, 8, 32], strides = [1, 1, 1, 1]} : vector<4x2x8x32xf32> to vector<1x2x8x32xf32>
    %112 = vector.shape_cast %111 : vector<1x2x8x32xf32> to vector<2x8x32xf32>
    %113 = vector.extract_strided_slice %106 {offsets = [3, 0, 0, 0], sizes = [1, 2, 8, 32], strides = [1, 1, 1, 1]} : vector<4x2x8x32xf32> to vector<1x2x8x32xf32>
    %114 = vector.shape_cast %113 : vector<1x2x8x32xf32> to vector<2x8x32xf32>
    %115 = tpu.concatenate %108, %110, %112, %114 in 2 : vector<2x8x32xf32>, vector<2x8x32xf32>, vector<2x8x32xf32>, vector<2x8x32xf32> -> vector<2x8x128xf32>
    %116 = vector.shape_cast %115 : vector<2x8x128xf32> to vector<16x128xf32>
    %117 = arith.truncf %116 : vector<16x128xf32> to vector<16x128xbf16>
    %c0_28 = arith.constant 0 : index
    %c0_29 = arith.constant 0 : index
    %c0_30 = arith.constant 0 : index
    %118 = vector.load %arg8[%c0_28, %c0_29, %c0_30] : memref<2x128x128xbf16, #tpu.memory_space<vmem>>, vector<1x128x128xbf16>
    %119 = vector.shape_cast %118 : vector<1x128x128xbf16> to vector<128x128xbf16>
    %cst_31 = arith.constant dense<0.000000e+00> : vector<16x128xf32>
    %120 = tpu.matmul %117, %119, %cst_31 {dimension_numbers = #tpu.dot_dimension_numbers<[1], [0], [0], [1], [0, 0, 1, 1], [], []>} : vector<16x128xbf16>, vector<128x128xbf16>, vector<16x128xf32> -> vector<16x128xf32>
    %c0_32 = arith.constant 0 : index
    %c0_33 = arith.constant 0 : index
    %c0_34 = arith.constant 0 : index
    %121 = vector.load %arg9[%c0_32, %c0_33, %c0_34] : memref<2x1x128xf32, #tpu.memory_space<vmem>>, vector<1x1x128xf32>
    %122 = vector.shape_cast %121 : vector<1x1x128xf32> to vector<1x128xf32>
    %123 = vector.broadcast %122 : vector<1x128xf32> to vector<16x128xf32>
    %124 = arith.addf %120, %123 : vector<16x128xf32>
    %125 = arith.addf %10, %124 : vector<16x128xf32>
    %c0_35 = arith.constant 0 : index
    %c0_36 = arith.constant 0 : index
    %c0_37 = arith.constant 0 : index
    %126 = vector.load %arg10[%c0_35, %c0_36, %c0_37] : memref<2x1x128xf32, #tpu.memory_space<vmem>>, vector<1x1x128xf32>
    %127 = vector.shape_cast %126 : vector<1x1x128xf32> to vector<1x128xf32>
    %c0_38 = arith.constant 0 : index
    %c0_39 = arith.constant 0 : index
    %c0_40 = arith.constant 0 : index
    %128 = vector.load %arg11[%c0_38, %c0_39, %c0_40] : memref<2x1x128xf32, #tpu.memory_space<vmem>>, vector<1x1x128xf32>
    %129 = vector.shape_cast %128 : vector<1x1x128xf32> to vector<1x128xf32>
    %cst_41 = arith.constant dense<0.000000e+00> : vector<16xf32>
    %130 = vector.multi_reduction <add>, %125, %cst_41 [1] : vector<16x128xf32> to vector<16xf32>
    %131 = vector.shape_cast %130 : vector<16xf32> to vector<16x1xf32>
    %cst_42 = arith.constant 1.280000e+02 : f32
    %132 = vector.broadcast %cst_42 : f32 to vector<16x1xf32>
    %133 = arith.divf %131, %132 : vector<16x1xf32>
    %134 = vector.broadcast %133 : vector<16x1xf32> to vector<16x128xf32>
    %135 = arith.subf %125, %134 : vector<16x128xf32>
    %136 = arith.mulf %135, %135 : vector<16x128xf32>
    %cst_43 = arith.constant dense<0.000000e+00> : vector<16xf32>
    %137 = vector.multi_reduction <add>, %136, %cst_43 [1] : vector<16x128xf32> to vector<16xf32>
    %138 = vector.shape_cast %137 : vector<16xf32> to vector<16x1xf32>
    %cst_44 = arith.constant 1.280000e+02 : f32
    %139 = vector.broadcast %cst_44 : f32 to vector<16x1xf32>
    %140 = arith.divf %138, %139 : vector<16x1xf32>
    %141 = vector.broadcast %133 : vector<16x1xf32> to vector<16x128xf32>
    %142 = arith.subf %125, %141 : vector<16x128xf32>
    %cst_45 = arith.constant 9.99999974E-6 : f32
    %143 = vector.broadcast %cst_45 : f32 to vector<16x1xf32>
    %144 = arith.addf %140, %143 : vector<16x1xf32>
    %145 = math.rsqrt %144 : vector<16x1xf32>
    %146 = vector.broadcast %145 : vector<16x1xf32> to vector<16x128xf32>
    %147 = arith.mulf %142, %146 : vector<16x128xf32>
    %148 = vector.broadcast %127 : vector<1x128xf32> to vector<16x128xf32>
    %149 = arith.mulf %147, %148 : vector<16x128xf32>
    %150 = vector.broadcast %129 : vector<1x128xf32> to vector<16x128xf32>
    %151 = arith.addf %149, %150 : vector<16x128xf32>
    %152 = arith.truncf %151 : vector<16x128xf32> to vector<16x128xbf16>
    %c0_46 = arith.constant 0 : index
    %c0_47 = arith.constant 0 : index
    %c0_48 = arith.constant 0 : index
    %153 = vector.load %arg12[%c0_46, %c0_47, %c0_48] : memref<2x128x512xbf16, #tpu.memory_space<vmem>>, vector<1x128x512xbf16>
    %154 = vector.shape_cast %153 : vector<1x128x512xbf16> to vector<128x512xbf16>
    %cst_49 = arith.constant dense<0.000000e+00> : vector<16x512xf32>
    %155 = tpu.matmul %152, %154, %cst_49 {dimension_numbers = #tpu.dot_dimension_numbers<[1], [0], [0], [1], [0, 0, 1, 1], [], []>} : vector<16x128xbf16>, vector<128x512xbf16>, vector<16x512xf32> -> vector<16x512xf32>
    %c0_50 = arith.constant 0 : index
    %c0_51 = arith.constant 0 : index
    %c0_52 = arith.constant 0 : index
    %156 = vector.load %arg13[%c0_50, %c0_51, %c0_52] : memref<2x1x512xf32, #tpu.memory_space<vmem>>, vector<1x1x512xf32>
    %157 = vector.shape_cast %156 : vector<1x1x512xf32> to vector<1x512xf32>
    %158 = vector.broadcast %157 : vector<1x512xf32> to vector<16x512xf32>
    %159 = arith.addf %155, %158 : vector<16x512xf32>
    %cst_53 = arith.constant 5.000000e-01 : f32
    %160 = vector.broadcast %cst_53 : f32 to vector<16x512xf32>
    %161 = arith.mulf %160, %159 : vector<16x512xf32>
    %cst_54 = arith.constant 0.707106769 : f32
    %162 = vector.broadcast %cst_54 : f32 to vector<16x512xf32>
    %163 = arith.mulf %159, %162 : vector<16x512xf32>
    %164 = math.erf %163 : vector<16x512xf32>
    %cst_55 = arith.constant 1.000000e+00 : f32
    %165 = vector.broadcast %cst_55 : f32 to vector<16x512xf32>
    %166 = arith.addf %165, %164 : vector<16x512xf32>
    %167 = arith.mulf %161, %166 : vector<16x512xf32>
    %168 = arith.truncf %167 : vector<16x512xf32> to vector<16x512xbf16>
    %c0_56 = arith.constant 0 : index
    %c0_57 = arith.constant 0 : index
    %c0_58 = arith.constant 0 : index
    %169 = vector.load %arg14[%c0_56, %c0_57, %c0_58] : memref<2x512x128xbf16, #tpu.memory_space<vmem>>, vector<1x512x128xbf16>
    %170 = vector.shape_cast %169 : vector<1x512x128xbf16> to vector<512x128xbf16>
    %cst_59 = arith.constant dense<0.000000e+00> : vector<16x128xf32>
    %171 = tpu.matmul %168, %170, %cst_59 {dimension_numbers = #tpu.dot_dimension_numbers<[1], [0], [0], [1], [0, 0, 1, 1], [], []>} : vector<16x512xbf16>, vector<512x128xbf16>, vector<16x128xf32> -> vector<16x128xf32>
    %c0_60 = arith.constant 0 : index
    %c0_61 = arith.constant 0 : index
    %c0_62 = arith.constant 0 : index
    %172 = vector.load %arg15[%c0_60, %c0_61, %c0_62] : memref<2x1x128xf32, #tpu.memory_space<vmem>>, vector<1x1x128xf32>
    %173 = vector.shape_cast %172 : vector<1x1x128xf32> to vector<1x128xf32>
    %174 = vector.broadcast %173 : vector<1x128xf32> to vector<16x128xf32>
    %175 = arith.addf %171, %174 : vector<16x128xf32>
    %176 = arith.addf %125, %175 : vector<16x128xf32>
    %c1 = arith.constant 1 : index
    %c0_63 = arith.constant 0 : index
    %c0_64 = arith.constant 0 : index
    %177 = vector.load %arg4[%c1, %c0_63, %c0_64] : memref<2x1x128xf32, #tpu.memory_space<vmem>>, vector<1x1x128xf32>
    %178 = vector.shape_cast %177 : vector<1x1x128xf32> to vector<1x128xf32>
    %c1_65 = arith.constant 1 : index
    %c0_66 = arith.constant 0 : index
    %c0_67 = arith.constant 0 : index
    %179 = vector.load %arg5[%c1_65, %c0_66, %c0_67] : memref<2x1x128xf32, #tpu.memory_space<vmem>>, vector<1x1x128xf32>
    %180 = vector.shape_cast %179 : vector<1x1x128xf32> to vector<1x128xf32>
    %cst_68 = arith.constant dense<0.000000e+00> : vector<16xf32>
    %181 = vector.multi_reduction <add>, %176, %cst_68 [1] : vector<16x128xf32> to vector<16xf32>
    %182 = vector.shape_cast %181 : vector<16xf32> to vector<16x1xf32>
    %cst_69 = arith.constant 1.280000e+02 : f32
    %183 = vector.broadcast %cst_69 : f32 to vector<16x1xf32>
    %184 = arith.divf %182, %183 : vector<16x1xf32>
    %185 = vector.broadcast %184 : vector<16x1xf32> to vector<16x128xf32>
    %186 = arith.subf %176, %185 : vector<16x128xf32>
    %187 = arith.mulf %186, %186 : vector<16x128xf32>
    %cst_70 = arith.constant dense<0.000000e+00> : vector<16xf32>
    %188 = vector.multi_reduction <add>, %187, %cst_70 [1] : vector<16x128xf32> to vector<16xf32>
    %189 = vector.shape_cast %188 : vector<16xf32> to vector<16x1xf32>
    %cst_71 = arith.constant 1.280000e+02 : f32
    %190 = vector.broadcast %cst_71 : f32 to vector<16x1xf32>
    %191 = arith.divf %189, %190 : vector<16x1xf32>
    %192 = vector.broadcast %184 : vector<16x1xf32> to vector<16x128xf32>
    %193 = arith.subf %176, %192 : vector<16x128xf32>
    %cst_72 = arith.constant 9.99999974E-6 : f32
    %194 = vector.broadcast %cst_72 : f32 to vector<16x1xf32>
    %195 = arith.addf %191, %194 : vector<16x1xf32>
    %196 = math.rsqrt %195 : vector<16x1xf32>
    %197 = vector.broadcast %196 : vector<16x1xf32> to vector<16x128xf32>
    %198 = arith.mulf %193, %197 : vector<16x128xf32>
    %199 = vector.broadcast %178 : vector<1x128xf32> to vector<16x128xf32>
    %200 = arith.mulf %198, %199 : vector<16x128xf32>
    %201 = vector.broadcast %180 : vector<1x128xf32> to vector<16x128xf32>
    %202 = arith.addf %200, %201 : vector<16x128xf32>
    %203 = arith.truncf %202 : vector<16x128xf32> to vector<16x128xbf16>
    %c1_73 = arith.constant 1 : index
    %c0_74 = arith.constant 0 : index
    %c0_75 = arith.constant 0 : index
    %204 = vector.load %arg6[%c1_73, %c0_74, %c0_75] : memref<2x128x384xbf16, #tpu.memory_space<vmem>>, vector<1x128x384xbf16>
    %205 = vector.shape_cast %204 : vector<1x128x384xbf16> to vector<128x384xbf16>
    %cst_76 = arith.constant dense<0.000000e+00> : vector<16x384xf32>
    %206 = tpu.matmul %203, %205, %cst_76 {dimension_numbers = #tpu.dot_dimension_numbers<[1], [0], [0], [1], [0, 0, 1, 1], [], []>} : vector<16x128xbf16>, vector<128x384xbf16>, vector<16x384xf32> -> vector<16x384xf32>
    %c1_77 = arith.constant 1 : index
    %c0_78 = arith.constant 0 : index
    %c0_79 = arith.constant 0 : index
    %207 = vector.load %arg7[%c1_77, %c0_78, %c0_79] : memref<2x1x384xf32, #tpu.memory_space<vmem>>, vector<1x1x384xf32>
    %208 = vector.shape_cast %207 : vector<1x1x384xf32> to vector<1x384xf32>
    %209 = vector.broadcast %208 : vector<1x384xf32> to vector<16x384xf32>
    %210 = arith.addf %206, %209 : vector<16x384xf32>
    %211 = vector.extract_strided_slice %210 {offsets = [0, 0], sizes = [16, 128], strides = [1, 1]} : vector<16x384xf32> to vector<16x128xf32>
    %212 = vector.extract_strided_slice %211 {offsets = [0, 0], sizes = [16, 32], strides = [1, 1]} : vector<16x128xf32> to vector<16x32xf32>
    %213 = vector.shape_cast %212 : vector<16x32xf32> to vector<2x8x32xf32>
    %214 = vector.extract_strided_slice %211 {offsets = [0, 32], sizes = [16, 32], strides = [1, 1]} : vector<16x128xf32> to vector<16x32xf32>
    %215 = vector.shape_cast %214 : vector<16x32xf32> to vector<2x8x32xf32>
    %216 = vector.extract_strided_slice %211 {offsets = [0, 64], sizes = [16, 32], strides = [1, 1]} : vector<16x128xf32> to vector<16x32xf32>
    %217 = vector.shape_cast %216 : vector<16x32xf32> to vector<2x8x32xf32>
    %218 = vector.extract_strided_slice %211 {offsets = [0, 96], sizes = [16, 32], strides = [1, 1]} : vector<16x128xf32> to vector<16x32xf32>
    %219 = vector.shape_cast %218 : vector<16x32xf32> to vector<2x8x32xf32>
    %220 = vector.shape_cast %213 : vector<2x8x32xf32> to vector<1x2x8x32xf32>
    %221 = vector.shape_cast %215 : vector<2x8x32xf32> to vector<1x2x8x32xf32>
    %222 = vector.shape_cast %217 : vector<2x8x32xf32> to vector<1x2x8x32xf32>
    %223 = vector.shape_cast %219 : vector<2x8x32xf32> to vector<1x2x8x32xf32>
    %224 = tpu.concatenate %220, %221, %222, %223 in 0 : vector<1x2x8x32xf32>, vector<1x2x8x32xf32>, vector<1x2x8x32xf32>, vector<1x2x8x32xf32> -> vector<4x2x8x32xf32>
    %225 = vector.shape_cast %224 : vector<4x2x8x32xf32> to vector<8x8x32xf32>
    %226 = arith.truncf %225 : vector<8x8x32xf32> to vector<8x8x32xbf16>
    %227 = vector.extract_strided_slice %210 {offsets = [0, 128], sizes = [16, 128], strides = [1, 1]} : vector<16x384xf32> to vector<16x128xf32>
    %228 = vector.extract_strided_slice %227 {offsets = [0, 0], sizes = [16, 32], strides = [1, 1]} : vector<16x128xf32> to vector<16x32xf32>
    %229 = vector.shape_cast %228 : vector<16x32xf32> to vector<2x8x32xf32>
    %230 = vector.extract_strided_slice %227 {offsets = [0, 32], sizes = [16, 32], strides = [1, 1]} : vector<16x128xf32> to vector<16x32xf32>
    %231 = vector.shape_cast %230 : vector<16x32xf32> to vector<2x8x32xf32>
    %232 = vector.extract_strided_slice %227 {offsets = [0, 64], sizes = [16, 32], strides = [1, 1]} : vector<16x128xf32> to vector<16x32xf32>
    %233 = vector.shape_cast %232 : vector<16x32xf32> to vector<2x8x32xf32>
    %234 = vector.extract_strided_slice %227 {offsets = [0, 96], sizes = [16, 32], strides = [1, 1]} : vector<16x128xf32> to vector<16x32xf32>
    %235 = vector.shape_cast %234 : vector<16x32xf32> to vector<2x8x32xf32>
    %236 = vector.shape_cast %229 : vector<2x8x32xf32> to vector<1x2x8x32xf32>
    %237 = vector.shape_cast %231 : vector<2x8x32xf32> to vector<1x2x8x32xf32>
    %238 = vector.shape_cast %233 : vector<2x8x32xf32> to vector<1x2x8x32xf32>
    %239 = vector.shape_cast %235 : vector<2x8x32xf32> to vector<1x2x8x32xf32>
    %240 = tpu.concatenate %236, %237, %238, %239 in 0 : vector<1x2x8x32xf32>, vector<1x2x8x32xf32>, vector<1x2x8x32xf32>, vector<1x2x8x32xf32> -> vector<4x2x8x32xf32>
    %241 = vector.shape_cast %240 : vector<4x2x8x32xf32> to vector<8x8x32xf32>
    %242 = arith.truncf %241 : vector<8x8x32xf32> to vector<8x8x32xbf16>
    %243 = vector.extract_strided_slice %210 {offsets = [0, 256], sizes = [16, 128], strides = [1, 1]} : vector<16x384xf32> to vector<16x128xf32>
    %244 = vector.extract_strided_slice %243 {offsets = [0, 0], sizes = [16, 32], strides = [1, 1]} : vector<16x128xf32> to vector<16x32xf32>
    %245 = vector.shape_cast %244 : vector<16x32xf32> to vector<2x8x32xf32>
    %246 = vector.extract_strided_slice %243 {offsets = [0, 32], sizes = [16, 32], strides = [1, 1]} : vector<16x128xf32> to vector<16x32xf32>
    %247 = vector.shape_cast %246 : vector<16x32xf32> to vector<2x8x32xf32>
    %248 = vector.extract_strided_slice %243 {offsets = [0, 64], sizes = [16, 32], strides = [1, 1]} : vector<16x128xf32> to vector<16x32xf32>
    %249 = vector.shape_cast %248 : vector<16x32xf32> to vector<2x8x32xf32>
    %250 = vector.extract_strided_slice %243 {offsets = [0, 96], sizes = [16, 32], strides = [1, 1]} : vector<16x128xf32> to vector<16x32xf32>
    %251 = vector.shape_cast %250 : vector<16x32xf32> to vector<2x8x32xf32>
    %252 = vector.shape_cast %245 : vector<2x8x32xf32> to vector<1x2x8x32xf32>
    %253 = vector.shape_cast %247 : vector<2x8x32xf32> to vector<1x2x8x32xf32>
    %254 = vector.shape_cast %249 : vector<2x8x32xf32> to vector<1x2x8x32xf32>
    %255 = vector.shape_cast %251 : vector<2x8x32xf32> to vector<1x2x8x32xf32>
    %256 = tpu.concatenate %252, %253, %254, %255 in 0 : vector<1x2x8x32xf32>, vector<1x2x8x32xf32>, vector<1x2x8x32xf32>, vector<1x2x8x32xf32> -> vector<4x2x8x32xf32>
    %257 = vector.shape_cast %256 : vector<4x2x8x32xf32> to vector<8x8x32xf32>
    %258 = arith.truncf %257 : vector<8x8x32xf32> to vector<8x8x32xbf16>
    "tpu.trace_start"() <{level = 10 : i32, message = "gqd,gkd->gqk"}> : () -> ()
    %cst_80 = arith.constant dense<0.000000e+00> : vector<8x8x8xf32>
    %259 = tpu.matmul %226, %242, %cst_80 {dimension_numbers = #tpu.dot_dimension_numbers<[2], [2], [1], [1], [0, 0, 0, 1, 1, 1], [0], [0]>} : vector<8x8x32xbf16>, vector<8x8x32xbf16>, vector<8x8x8xf32> -> vector<8x8x8xf32>
    "tpu.trace_stop"() : () -> ()
    %cst_81 = arith.constant dense<0xFF800000> : vector<8x8xf32>
    %260 = vector.multi_reduction <maximumf>, %259, %cst_81 [2] : vector<8x8x8xf32> to vector<8x8xf32>
    %261 = vector.shape_cast %260 : vector<8x8xf32> to vector<8x8x1xf32>
    %262 = vector.broadcast %261 : vector<8x8x1xf32> to vector<8x8x8xf32>
    %263 = arith.subf %259, %262 : vector<8x8x8xf32>
    %264 = math.exp %263 : vector<8x8x8xf32>
    %cst_82 = arith.constant dense<0.000000e+00> : vector<8x8xf32>
    %265 = vector.multi_reduction <add>, %264, %cst_82 [2] : vector<8x8x8xf32> to vector<8x8xf32>
    %266 = vector.shape_cast %265 : vector<8x8xf32> to vector<8x8x1xf32>
    %267 = tpu.reciprocal %266 {approx = true} : vector<8x8x1xf32> -> vector<8x8x1xf32>
    %268 = vector.broadcast %267 : vector<8x8x1xf32> to vector<8x8x8xf32>
    %269 = arith.mulf %264, %268 : vector<8x8x8xf32>
    %270 = arith.truncf %269 : vector<8x8x8xf32> to vector<8x8x8xbf16>
    "tpu.trace_start"() <{level = 10 : i32, message = "gqk,gkd->gqd"}> : () -> ()
    %cst_83 = arith.constant dense<0.000000e+00> : vector<8x8x32xf32>
    %271 = tpu.matmul %270, %258, %cst_83 {dimension_numbers = #tpu.dot_dimension_numbers<[2], [1], [1], [2], [0, 0, 0, 1, 1, 2], [0], [0]>} : vector<8x8x8xbf16>, vector<8x8x32xbf16>, vector<8x8x32xf32> -> vector<8x8x32xf32>
    "tpu.trace_stop"() : () -> ()
    %272 = vector.shape_cast %271 : vector<8x8x32xf32> to vector<4x2x8x32xf32>
    %273 = vector.extract_strided_slice %272 {offsets = [0, 0, 0, 0], sizes = [1, 2, 8, 32], strides = [1, 1, 1, 1]} : vector<4x2x8x32xf32> to vector<1x2x8x32xf32>
    %274 = vector.shape_cast %273 : vector<1x2x8x32xf32> to vector<2x8x32xf32>
    %275 = vector.extract_strided_slice %272 {offsets = [1, 0, 0, 0], sizes = [1, 2, 8, 32], strides = [1, 1, 1, 1]} : vector<4x2x8x32xf32> to vector<1x2x8x32xf32>
    %276 = vector.shape_cast %275 : vector<1x2x8x32xf32> to vector<2x8x32xf32>
    %277 = vector.extract_strided_slice %272 {offsets = [2, 0, 0, 0], sizes = [1, 2, 8, 32], strides = [1, 1, 1, 1]} : vector<4x2x8x32xf32> to vector<1x2x8x32xf32>
    %278 = vector.shape_cast %277 : vector<1x2x8x32xf32> to vector<2x8x32xf32>
    %279 = vector.extract_strided_slice %272 {offsets = [3, 0, 0, 0], sizes = [1, 2, 8, 32], strides = [1, 1, 1, 1]} : vector<4x2x8x32xf32> to vector<1x2x8x32xf32>
    %280 = vector.shape_cast %279 : vector<1x2x8x32xf32> to vector<2x8x32xf32>
    %281 = tpu.concatenate %274, %276, %278, %280 in 2 : vector<2x8x32xf32>, vector<2x8x32xf32>, vector<2x8x32xf32>, vector<2x8x32xf32> -> vector<2x8x128xf32>
    %282 = vector.shape_cast %281 : vector<2x8x128xf32> to vector<16x128xf32>
    %283 = arith.truncf %282 : vector<16x128xf32> to vector<16x128xbf16>
    %c1_84 = arith.constant 1 : index
    %c0_85 = arith.constant 0 : index
    %c0_86 = arith.constant 0 : index
    %284 = vector.load %arg8[%c1_84, %c0_85, %c0_86] : memref<2x128x128xbf16, #tpu.memory_space<vmem>>, vector<1x128x128xbf16>
    %285 = vector.shape_cast %284 : vector<1x128x128xbf16> to vector<128x128xbf16>
    %cst_87 = arith.constant dense<0.000000e+00> : vector<16x128xf32>
    %286 = tpu.matmul %283, %285, %cst_87 {dimension_numbers = #tpu.dot_dimension_numbers<[1], [0], [0], [1], [0, 0, 1, 1], [], []>} : vector<16x128xbf16>, vector<128x128xbf16>, vector<16x128xf32> -> vector<16x128xf32>
    %c1_88 = arith.constant 1 : index
    %c0_89 = arith.constant 0 : index
    %c0_90 = arith.constant 0 : index
    %287 = vector.load %arg9[%c1_88, %c0_89, %c0_90] : memref<2x1x128xf32, #tpu.memory_space<vmem>>, vector<1x1x128xf32>
    %288 = vector.shape_cast %287 : vector<1x1x128xf32> to vector<1x128xf32>
    %289 = vector.broadcast %288 : vector<1x128xf32> to vector<16x128xf32>
    %290 = arith.addf %286, %289 : vector<16x128xf32>
    %291 = arith.addf %176, %290 : vector<16x128xf32>
    %c1_91 = arith.constant 1 : index
    %c0_92 = arith.constant 0 : index
    %c0_93 = arith.constant 0 : index
    %292 = vector.load %arg10[%c1_91, %c0_92, %c0_93] : memref<2x1x128xf32, #tpu.memory_space<vmem>>, vector<1x1x128xf32>
    %293 = vector.shape_cast %292 : vector<1x1x128xf32> to vector<1x128xf32>
    %c1_94 = arith.constant 1 : index
    %c0_95 = arith.constant 0 : index
    %c0_96 = arith.constant 0 : index
    %294 = vector.load %arg11[%c1_94, %c0_95, %c0_96] : memref<2x1x128xf32, #tpu.memory_space<vmem>>, vector<1x1x128xf32>
    %295 = vector.shape_cast %294 : vector<1x1x128xf32> to vector<1x128xf32>
    %cst_97 = arith.constant dense<0.000000e+00> : vector<16xf32>
    %296 = vector.multi_reduction <add>, %291, %cst_97 [1] : vector<16x128xf32> to vector<16xf32>
    %297 = vector.shape_cast %296 : vector<16xf32> to vector<16x1xf32>
    %cst_98 = arith.constant 1.280000e+02 : f32
    %298 = vector.broadcast %cst_98 : f32 to vector<16x1xf32>
    %299 = arith.divf %297, %298 : vector<16x1xf32>
    %300 = vector.broadcast %299 : vector<16x1xf32> to vector<16x128xf32>
    %301 = arith.subf %291, %300 : vector<16x128xf32>
    %302 = arith.mulf %301, %301 : vector<16x128xf32>
    %cst_99 = arith.constant dense<0.000000e+00> : vector<16xf32>
    %303 = vector.multi_reduction <add>, %302, %cst_99 [1] : vector<16x128xf32> to vector<16xf32>
    %304 = vector.shape_cast %303 : vector<16xf32> to vector<16x1xf32>
    %cst_100 = arith.constant 1.280000e+02 : f32
    %305 = vector.broadcast %cst_100 : f32 to vector<16x1xf32>
    %306 = arith.divf %304, %305 : vector<16x1xf32>
    %307 = vector.broadcast %299 : vector<16x1xf32> to vector<16x128xf32>
    %308 = arith.subf %291, %307 : vector<16x128xf32>
    %cst_101 = arith.constant 9.99999974E-6 : f32
    %309 = vector.broadcast %cst_101 : f32 to vector<16x1xf32>
    %310 = arith.addf %306, %309 : vector<16x1xf32>
    %311 = math.rsqrt %310 : vector<16x1xf32>
    %312 = vector.broadcast %311 : vector<16x1xf32> to vector<16x128xf32>
    %313 = arith.mulf %308, %312 : vector<16x128xf32>
    %314 = vector.broadcast %293 : vector<1x128xf32> to vector<16x128xf32>
    %315 = arith.mulf %313, %314 : vector<16x128xf32>
    %316 = vector.broadcast %295 : vector<1x128xf32> to vector<16x128xf32>
    %317 = arith.addf %315, %316 : vector<16x128xf32>
    %318 = arith.truncf %317 : vector<16x128xf32> to vector<16x128xbf16>
    %c1_102 = arith.constant 1 : index
    %c0_103 = arith.constant 0 : index
    %c0_104 = arith.constant 0 : index
    %319 = vector.load %arg12[%c1_102, %c0_103, %c0_104] : memref<2x128x512xbf16, #tpu.memory_space<vmem>>, vector<1x128x512xbf16>
    %320 = vector.shape_cast %319 : vector<1x128x512xbf16> to vector<128x512xbf16>
    %cst_105 = arith.constant dense<0.000000e+00> : vector<16x512xf32>
    %321 = tpu.matmul %318, %320, %cst_105 {dimension_numbers = #tpu.dot_dimension_numbers<[1], [0], [0], [1], [0, 0, 1, 1], [], []>} : vector<16x128xbf16>, vector<128x512xbf16>, vector<16x512xf32> -> vector<16x512xf32>
    %c1_106 = arith.constant 1 : index
    %c0_107 = arith.constant 0 : index
    %c0_108 = arith.constant 0 : index
    %322 = vector.load %arg13[%c1_106, %c0_107, %c0_108] : memref<2x1x512xf32, #tpu.memory_space<vmem>>, vector<1x1x512xf32>
    %323 = vector.shape_cast %322 : vector<1x1x512xf32> to vector<1x512xf32>
    %324 = vector.broadcast %323 : vector<1x512xf32> to vector<16x512xf32>
    %325 = arith.addf %321, %324 : vector<16x512xf32>
    %cst_109 = arith.constant 5.000000e-01 : f32
    %326 = vector.broadcast %cst_109 : f32 to vector<16x512xf32>
    %327 = arith.mulf %326, %325 : vector<16x512xf32>
    %cst_110 = arith.constant 0.707106769 : f32
    %328 = vector.broadcast %cst_110 : f32 to vector<16x512xf32>
    %329 = arith.mulf %325, %328 : vector<16x512xf32>
    %330 = math.erf %329 : vector<16x512xf32>
    %cst_111 = arith.constant 1.000000e+00 : f32
    %331 = vector.broadcast %cst_111 : f32 to vector<16x512xf32>
    %332 = arith.addf %331, %330 : vector<16x512xf32>
    %333 = arith.mulf %327, %332 : vector<16x512xf32>
    %334 = arith.truncf %333 : vector<16x512xf32> to vector<16x512xbf16>
    %c1_112 = arith.constant 1 : index
    %c0_113 = arith.constant 0 : index
    %c0_114 = arith.constant 0 : index
    %335 = vector.load %arg14[%c1_112, %c0_113, %c0_114] : memref<2x512x128xbf16, #tpu.memory_space<vmem>>, vector<1x512x128xbf16>
    %336 = vector.shape_cast %335 : vector<1x512x128xbf16> to vector<512x128xbf16>
    %cst_115 = arith.constant dense<0.000000e+00> : vector<16x128xf32>
    %337 = tpu.matmul %334, %336, %cst_115 {dimension_numbers = #tpu.dot_dimension_numbers<[1], [0], [0], [1], [0, 0, 1, 1], [], []>} : vector<16x512xbf16>, vector<512x128xbf16>, vector<16x128xf32> -> vector<16x128xf32>
    %c1_116 = arith.constant 1 : index
    %c0_117 = arith.constant 0 : index
    %c0_118 = arith.constant 0 : index
    %338 = vector.load %arg15[%c1_116, %c0_117, %c0_118] : memref<2x1x128xf32, #tpu.memory_space<vmem>>, vector<1x1x128xf32>
    %339 = vector.shape_cast %338 : vector<1x1x128xf32> to vector<1x128xf32>
    %340 = vector.broadcast %339 : vector<1x128xf32> to vector<16x128xf32>
    %341 = arith.addf %337, %340 : vector<16x128xf32>
    %342 = arith.addf %291, %341 : vector<16x128xf32>
    %c0_119 = arith.constant 0 : index
    %c0_120 = arith.constant 0 : index
    %343 = vector.load %arg16[%c0_119, %c0_120] : memref<1x128xf32, #tpu.memory_space<vmem>>, vector<1x128xf32>
    %c0_121 = arith.constant 0 : index
    %c0_122 = arith.constant 0 : index
    %344 = vector.load %arg17[%c0_121, %c0_122] : memref<1x128xf32, #tpu.memory_space<vmem>>, vector<1x128xf32>
    %cst_123 = arith.constant dense<0.000000e+00> : vector<16xf32>
    %345 = vector.multi_reduction <add>, %342, %cst_123 [1] : vector<16x128xf32> to vector<16xf32>
    %346 = vector.shape_cast %345 : vector<16xf32> to vector<16x1xf32>
    %cst_124 = arith.constant 1.280000e+02 : f32
    %347 = vector.broadcast %cst_124 : f32 to vector<16x1xf32>
    %348 = arith.divf %346, %347 : vector<16x1xf32>
    %349 = vector.broadcast %348 : vector<16x1xf32> to vector<16x128xf32>
    %350 = arith.subf %342, %349 : vector<16x128xf32>
    %351 = arith.mulf %350, %350 : vector<16x128xf32>
    %cst_125 = arith.constant dense<0.000000e+00> : vector<16xf32>
    %352 = vector.multi_reduction <add>, %351, %cst_125 [1] : vector<16x128xf32> to vector<16xf32>
    %353 = vector.shape_cast %352 : vector<16xf32> to vector<16x1xf32>
    %cst_126 = arith.constant 1.280000e+02 : f32
    %354 = vector.broadcast %cst_126 : f32 to vector<16x1xf32>
    %355 = arith.divf %353, %354 : vector<16x1xf32>
    %356 = vector.broadcast %348 : vector<16x1xf32> to vector<16x128xf32>
    %357 = arith.subf %342, %356 : vector<16x128xf32>
    %cst_127 = arith.constant 9.99999974E-6 : f32
    %358 = vector.broadcast %cst_127 : f32 to vector<16x1xf32>
    %359 = arith.addf %355, %358 : vector<16x1xf32>
    %360 = math.rsqrt %359 : vector<16x1xf32>
    %361 = vector.broadcast %360 : vector<16x1xf32> to vector<16x128xf32>
    %362 = arith.mulf %357, %361 : vector<16x128xf32>
    %363 = vector.broadcast %343 : vector<1x128xf32> to vector<16x128xf32>
    %364 = arith.mulf %362, %363 : vector<16x128xf32>
    %365 = vector.broadcast %344 : vector<1x128xf32> to vector<16x128xf32>
    %366 = arith.addf %364, %365 : vector<16x128xf32>
    %367 = vector.shape_cast %366 : vector<16x128xf32> to vector<2x8x128xf32>
    %c0_128 = arith.constant 0 : index
    %c0_129 = arith.constant 0 : index
    %c0_130 = arith.constant 0 : index
    %368 = vector.load %arg18[%c0_128, %c0_129, %c0_130] : memref<2x8x128xf32, #tpu.memory_space<vmem>>, vector<2x8x128xf32>
    tpu.vector_store %arg18[%c0_128, %c0_129, %c0_130], %367 {strides = array<i32>} : memref<2x8x128xf32, #tpu.memory_space<vmem>>, vector<2x8x128xf32>,
    return
  }
  func.func @transform_0(%arg0: i32) -> (i32, i32, i32) {
    %c0_i32 = arith.constant 0 : i32
    %c0_i32_0 = arith.constant 0 : i32
    %c0_i32_1 = arith.constant 0 : i32
    return %arg0, %c0_i32, %c0_i32_0 : i32, i32, i32
  }
  func.func @transform_1(%arg0: i32) -> (i32, i32) {
    %c0_i32 = arith.constant 0 : i32
    %c0_i32_0 = arith.constant 0 : i32
    %c0_i32_1 = arith.constant 0 : i32
    return %c0_i32, %c0_i32_0 : i32, i32
  }
  func.func @transform_2(%arg0: i32) -> (i32, i32) {
    %c0_i32 = arith.constant 0 : i32
    %c0_i32_0 = arith.constant 0 : i32
    %c0_i32_1 = arith.constant 0 : i32
    return %c0_i32, %c0_i32_0 : i32, i32
  }
  func.func @transform_3(%arg0: i32) -> (i32, i32, i32) {
    %c0_i32 = arith.constant 0 : i32
    %c0_i32_0 = arith.constant 0 : i32
    %c0_i32_1 = arith.constant 0 : i32
    %c0_i32_2 = arith.constant 0 : i32
    return %c0_i32, %c0_i32_0, %c0_i32_1 : i32, i32, i32
  }
  func.func @transform_4(%arg0: i32) -> (i32, i32, i32) {
    %c0_i32 = arith.constant 0 : i32
    %c0_i32_0 = arith.constant 0 : i32
    %c0_i32_1 = arith.constant 0 : i32
    %c0_i32_2 = arith.constant 0 : i32
    return %c0_i32, %c0_i32_0, %c0_i32_1 : i32, i32, i32
  }
  func.func @transform_5(%arg0: i32) -> (i32, i32, i32) {
    %c0_i32 = arith.constant 0 : i32
    %c0_i32_0 = arith.constant 0 : i32
    %c0_i32_1 = arith.constant 0 : i32
    %c0_i32_2 = arith.constant 0 : i32
    return %c0_i32, %c0_i32_0, %c0_i32_1 : i32, i32, i32
  }
  func.func @transform_6(%arg0: i32) -> (i32, i32, i32) {
    %c0_i32 = arith.constant 0 : i32
    %c0_i32_0 = arith.constant 0 : i32
    %c0_i32_1 = arith.constant 0 : i32
    %c0_i32_2 = arith.constant 0 : i32
    return %c0_i32, %c0_i32_0, %c0_i32_1 : i32, i32, i32
  }
  func.func @transform_7(%arg0: i32) -> (i32, i32, i32) {
    %c0_i32 = arith.constant 0 : i32
    %c0_i32_0 = arith.constant 0 : i32
    %c0_i32_1 = arith.constant 0 : i32
    %c0_i32_2 = arith.constant 0 : i32
    return %c0_i32, %c0_i32_0, %c0_i32_1 : i32, i32, i32
  }
  func.func @transform_8(%arg0: i32) -> (i32, i32, i32) {
    %c0_i32 = arith.constant 0 : i32
    %c0_i32_0 = arith.constant 0 : i32
    %c0_i32_1 = arith.constant 0 : i32
    %c0_i32_2 = arith.constant 0 : i32
    return %c0_i32, %c0_i32_0, %c0_i32_1 : i32, i32, i32
  }
  func.func @transform_9(%arg0: i32) -> (i32, i32, i32) {
    %c0_i32 = arith.constant 0 : i32
    %c0_i32_0 = arith.constant 0 : i32
    %c0_i32_1 = arith.constant 0 : i32
    %c0_i32_2 = arith.constant 0 : i32
    return %c0_i32, %c0_i32_0, %c0_i32_1 : i32, i32, i32
  }
  func.func @transform_10(%arg0: i32) -> (i32, i32, i32) {
    %c0_i32 = arith.constant 0 : i32
    %c0_i32_0 = arith.constant 0 : i32
    %c0_i32_1 = arith.constant 0 : i32
    %c0_i32_2 = arith.constant 0 : i32
    return %c0_i32, %c0_i32_0, %c0_i32_1 : i32, i32, i32
  }
  func.func @transform_11(%arg0: i32) -> (i32, i32, i32) {
    %c0_i32 = arith.constant 0 : i32
    %c0_i32_0 = arith.constant 0 : i32
    %c0_i32_1 = arith.constant 0 : i32
    %c0_i32_2 = arith.constant 0 : i32
    return %c0_i32, %c0_i32_0, %c0_i32_1 : i32, i32, i32
  }
  func.func @transform_12(%arg0: i32) -> (i32, i32, i32) {
    %c0_i32 = arith.constant 0 : i32
    %c0_i32_0 = arith.constant 0 : i32
    %c0_i32_1 = arith.constant 0 : i32
    %c0_i32_2 = arith.constant 0 : i32
    return %c0_i32, %c0_i32_0, %c0_i32_1 : i32, i32, i32
  }
  func.func @transform_13(%arg0: i32) -> (i32, i32, i32) {
    %c0_i32 = arith.constant 0 : i32
    %c0_i32_0 = arith.constant 0 : i32
    %c0_i32_1 = arith.constant 0 : i32
    %c0_i32_2 = arith.constant 0 : i32
    return %c0_i32, %c0_i32_0, %c0_i32_1 : i32, i32, i32
  }
  func.func @transform_14(%arg0: i32) -> (i32, i32, i32) {
    %c0_i32 = arith.constant 0 : i32
    %c0_i32_0 = arith.constant 0 : i32
    %c0_i32_1 = arith.constant 0 : i32
    %c0_i32_2 = arith.constant 0 : i32
    return %c0_i32, %c0_i32_0, %c0_i32_1 : i32, i32, i32
  }
  func.func @transform_15(%arg0: i32) -> (i32, i32) {
    %c0_i32 = arith.constant 0 : i32
    %c0_i32_0 = arith.constant 0 : i32
    %c0_i32_1 = arith.constant 0 : i32
    return %c0_i32, %c0_i32_0 : i32, i32
  }
  func.func @transform_16(%arg0: i32) -> (i32, i32) {
    %c0_i32 = arith.constant 0 : i32
    %c0_i32_0 = arith.constant 0 : i32
    %c0_i32_1 = arith.constant 0 : i32
    return %c0_i32, %c0_i32_0 : i32, i32
  }
  func.func @transform_17(%arg0: i32) -> (i32, i32, i32) {
    %c0_i32 = arith.constant 0 : i32
    %c0_i32_0 = arith.constant 0 : i32
    %c0_i32_1 = arith.constant 0 : i32
    return %arg0, %c0_i32, %c0_i32_0 : i32, i32, i32
  }
}

</mosaic_0001>

<llo_original>
// kernel: tpu_custom_call.1
$region0: #{tpu_custom_call.1}
  #allocation0 [shape = 'u32[]', space=smem, size = 0x4, offset = 0x4, fixed_abs, tag = 'smem constant byte address 0x4 - core index']
  #allocation1 [shape = 'u32[144,128]{1,0:T(1,128)}', space=vmem, size = 0x12000, scoped, tag = 'internal scratch']
  %s0 = inlined_call_operand.hbm [shape: f32[2,8,16], index: 0, kind: input, shape index: {}]
  %s1 = inlined_call_operand.hbm [shape: bf16[16,128], index: 1, kind: input, shape index: {}]
  %s2 = inlined_call_operand.hbm [shape: f32[8,128], index: 2, kind: input, shape index: {}]
  %s3 = inlined_call_operand.hbm [shape: f32[2,1,128], index: 3, kind: input, shape index: {}]
  %s4 = inlined_call_operand.hbm [shape: f32[2,1,128], index: 4, kind: input, shape index: {}]
  %s5 = inlined_call_operand.hbm [shape: bf16[2,128,384], index: 5, kind: input, shape index: {}]
  %s6 = inlined_call_operand.vmem [shape: f32[2,1,384], index: 6, kind: input, shape index: {}]
  %s7 = inlined_call_operand.hbm [shape: bf16[2,128,128], index: 7, kind: input, shape index: {}]
  %s8 = inlined_call_operand.vmem [shape: f32[2,1,128], index: 8, kind: input, shape index: {}]
  %s9 = inlined_call_operand.vmem [shape: f32[2,1,128], index: 9, kind: input, shape index: {}]
  %s10 = inlined_call_operand.vmem [shape: f32[2,1,128], index: 10, kind: input, shape index: {}]
  %s11 = inlined_call_operand.hbm [shape: bf16[2,128,512], index: 11, kind: input, shape index: {}]
  %s12 = inlined_call_operand.vmem [shape: f32[2,1,512], index: 12, kind: input, shape index: {}]
  %s13 = inlined_call_operand.hbm [shape: bf16[2,512,128], index: 13, kind: input, shape index: {}]
  %s14 = inlined_call_operand.vmem [shape: f32[2,1,128], index: 14, kind: input, shape index: {}]
  %s15 = inlined_call_operand.vmem [shape: f32[1,128], index: 15, kind: input, shape index: {}]
  %s16 = inlined_call_operand.vmem [shape: f32[1,128], index: 16, kind: input, shape index: {}]
  %s17 = inlined_call_operand.hbm [shape: f32[2,8,128], index: 17, kind: output, shape index: {}]
  %s18 = sld [smem:[#allocation0]]
  $region114: #{tpu_custom_call.1} parent=0
    _
  %s20 = ssub.s32 1, %s18
  %s21 = scalar_select 0, %s20, %s18
  $region1: #{tpu_custom_call.1} parent=0
    #allocation2 [shape = 'u8[8192]{0}', space=vmem, size = 0x2000, scoped, tag = 'input window, operand 0, single buffered']
    #allocation3 [shape = 's32[1]{0}', space=sflag, size = 0x4, scoped, tag = 'scoped memory for tpu_custom_call.1']
    #allocation4 [shape = 's32[1]{0}', space=sflag, size = 0x4, scoped, tag = 'scoped memory for tpu_custom_call.1']
    #allocation5 [shape = 'u8[4096]{0}', space=vmem, size = 0x1000, scoped, tag = 'input window, operand 1, single buffered']
    #allocation6 [shape = 's32[1]{0}', space=sflag, size = 0x4, scoped, tag = 'scoped memory for tpu_custom_call.1']
    #allocation7 [shape = 'u8[4096]{0}', space=vmem, size = 0x1000, scoped, tag = 'input window, operand 2, single buffered']
    #allocation8 [shape = 'u8[1024]{0}', space=vmem, size = 0x400, scoped, tag = 'input window, operand 3, single buffered']
    #allocation9 [shape = 's32[1]{0}', space=sflag, size = 0x4, scoped, tag = 'scoped memory for tpu_custom_call.1']
    #allocation10 [shape = 'u8[1024]{0}', space=vmem, size = 0x400, scoped, tag = 'input window, operand 4, single buffered']
    #allocation11 [shape = 'u8[196608]{0}', space=vmem, size = 0x30000, scoped, tag = 'input window, operand 5, single buffered']
    #allocation12 [shape = 's32[1]{0}', space=sflag, size = 0x4, scoped, tag = 'scoped memory for tpu_custom_call.1']
    #allocation13 [shape = 'u8[65536]{0}', space=vmem, size = 0x10000, scoped, tag = 'input window, operand 7, single buffered']
    #allocation14 [shape = 'u8[262144]{0}', space=vmem, size = 0x40000, scoped, tag = 'input window, operand 11, single buffered']
    #allocation15 [shape = 's32[1]{0}', space=sflag, size = 0x4, scoped, tag = 'scoped memory for tpu_custom_call.1']
    #allocation16 [shape = 'u8[262144]{0}', space=vmem, size = 0x40000, scoped, tag = 'input window, operand 13, single buffered']
    #allocation17 [shape = 'u8[8192]{0}', space=vmem, size = 0x2000, scoped, tag = 'output window, operand 0, single buffered']
    %22 = vsyncpa [#allocation3], 0
    %23 = vsyncpa [#allocation6], 0
    %24 = vsyncpa [#allocation9], 0
    %25 = vsyncpa [#allocation12], 0
    %26 = vsyncpa [#allocation15], 0
    %27 = vsyncpa [#allocation4], 0
    // Predicated region
    $region2: #{tpu_custom_call.1} parent=1 // pred_check
      _
    $region3: #{tpu_custom_call.1} parent=1 // pred_check_branch
      %29 = sbr.rel (0) target = $region5
    $region4: #{tpu_custom_call.1} parent=1 // pred_region
      %s31 = ssub.s32 256, 256
      %32 = vsyncadd [#allocation3], %s31
      %s33 = sshll.u32 [#allocation2], 4
      %s34 = int_to_ptr.vmem [resolvable:$true] %s33
      %39 = dma.hbm_to_vmem [thread:$0]  %s0, 256, %s34, [#allocation3], 128, 128, 8
    $region5: #{tpu_custom_call.1} parent=1 // pred_fallthru
      _
    // Predicated region
    $region6: #{tpu_custom_call.1} parent=1 // pred_check
      _
    $region7: #{tpu_custom_call.1} parent=1 // pred_check_branch
      %41 = sbr.rel (0) target = $region9
    $region8: #{tpu_custom_call.1} parent=1 // pred_region
      %s43 = ssub.s32 128, 128
      %44 = vsyncadd [#allocation6], %s43
      %s45 = sshll.u32 [#allocation5], 4
      %s46 = int_to_ptr.vmem [resolvable:$true] %s45
      %51 = dma.hbm_to_vmem [thread:$0]  %s1, 128, %s46, [#allocation6], 64, 64, 4
    $region9: #{tpu_custom_call.1} parent=1 // pred_fallthru
      _
    // Predicated region
    $region10: #{tpu_custom_call.1} parent=1 // pred_check
      _
    $region11: #{tpu_custom_call.1} parent=1 // pred_check_branch
      %53 = sbr.rel (0) target = $region13
    $region12: #{tpu_custom_call.1} parent=1 // pred_region
      %s55 = ssub.s32 128, 128
      %56 = vsyncadd [#allocation6], %s55
      %s58 = sshll.u32 [#allocation7], 4
      %s59 = int_to_ptr.vmem [resolvable:$true] %s58
      %61 = dma.hbm_to_vmem [thread:$0]  %s2, 128, %s59, [#allocation6]
    $region13: #{tpu_custom_call.1} parent=1 // pred_fallthru
      _
    // Predicated region
    $region14: #{tpu_custom_call.1} parent=1 // pred_check
      _
    $region15: #{tpu_custom_call.1} parent=1 // pred_check_branch
      %63 = sbr.rel (0) target = $region17
    $region16: #{tpu_custom_call.1} parent=1 // pred_region
      %s65 = ssub.s32 32, 32
      %66 = vsyncadd [#allocation9], %s65
      %s67 = sshll.u32 [#allocation8], 4
      %s68 = int_to_ptr.vmem [resolvable:$true] %s67
      %73 = dma.hbm_to_vmem [thread:$0]  %s3, 32, %s68, [#allocation9], 16, 16, 1
    $region17: #{tpu_custom_call.1} parent=1 // pred_fallthru
      _
    // Predicated region
    $region18: #{tpu_custom_call.1} parent=1 // pred_check
      _
    $region19: #{tpu_custom_call.1} parent=1 // pred_check_branch
      %75 = sbr.rel (0) target = $region21
    $region20: #{tpu_custom_call.1} parent=1 // pred_region
      %s77 = ssub.s32 32, 32
      %78 = vsyncadd [#allocation9], %s77
      %s79 = sshll.u32 [#allocation10], 4
      %s80 = int_to_ptr.vmem [resolvable:$true] %s79
      %85 = dma.hbm_to_vmem [thread:$0]  %s4, 32, %s80, [#allocation9], 16, 16, 1
    $region21: #{tpu_custom_call.1} parent=1 // pred_fallthru
      _
    // Predicated region
    $region22: #{tpu_custom_call.1} parent=1 // pred_check
      _
    $region23: #{tpu_custom_call.1} parent=1 // pred_check_branch
      %87 = sbr.rel (0) target = $region25
    $region24: #{tpu_custom_call.1} parent=1 // pred_region
      %s89 = ssub.s32 6144, 6144
      %90 = vsyncadd [#allocation12], %s89
      %s91 = sshll.u32 [#allocation11], 4
      %s92 = int_to_ptr.vmem [resolvable:$true] %s91
      %97 = dma.hbm_to_vmem [thread:$0]  %s5, 6144, %s92, [#allocation12], 192, 192, 12
    $region25: #{tpu_custom_call.1} parent=1 // pred_fallthru
      _
    // Predicated region
    $region26: #{tpu_custom_call.1} parent=1 // pred_check
      _
    $region27: #{tpu_custom_call.1} parent=1 // pred_check_branch
      %99 = sbr.rel (0) target = $region29
    $region28: #{tpu_custom_call.1} parent=1 // pred_region
      _
    $region29: #{tpu_custom_call.1} parent=1 // pred_fallthru
      _
    // Predicated region
    $region30: #{tpu_custom_call.1} parent=1 // pred_check
      _
    $region31: #{tpu_custom_call.1} parent=1 // pred_check_branch
      %101 = sbr.rel (0) target = $region33
    $region32: #{tpu_custom_call.1} parent=1 // pred_region
      %s103 = ssub.s32 2048, 2048
      %104 = vsyncadd [#allocation12], %s103
      %s105 = sshll.u32 [#allocation13], 4
      %s106 = int_to_ptr.vmem [resolvable:$true] %s105
      %111 = dma.hbm_to_vmem [thread:$0]  %s7, 2048, %s106, [#allocation12], 64, 64, 4
    $region33: #{tpu_custom_call.1} parent=1 // pred_fallthru
      _
    // Predicated region
    $region34: #{tpu_custom_call.1} parent=1 // pred_check
      _
    $region35: #{tpu_custom_call.1} parent=1 // pred_check_branch
      %113 = sbr.rel (0) target = $region37
    $region36: #{tpu_custom_call.1} parent=1 // pred_region
      _
    $region37: #{tpu_custom_call.1} parent=1 // pred_fallthru
      _
    // Predicated region
    $region38: #{tpu_custom_call.1} parent=1 // pred_check
      _
    $region39: #{tpu_custom_call.1} parent=1 // pred_check_branch
      %115 = sbr.rel (0) target = $region41
    $region40: #{tpu_custom_call.1} parent=1 // pred_region
      _
    $region41: #{tpu_custom_call.1} parent=1 // pred_fallthru
      _
    // Predicated region
    $region42: #{tpu_custom_call.1} parent=1 // pred_check
      _
    $region43: #{tpu_custom_call.1} parent=1 // pred_check_branch
      %117 = sbr.rel (0) target = $region45
    $region44: #{tpu_custom_call.1} parent=1 // pred_region
      _
    $region45: #{tpu_custom_call.1} parent=1 // pred_fallthru
      _
    // Predicated region
    $region46: #{tpu_custom_call.1} parent=1 // pred_check
      _
    $region47: #{tpu_custom_call.1} parent=1 // pred_check_branch
      %119 = sbr.rel (0) target = $region49
    $region48: #{tpu_custom_call.1} parent=1 // pred_region
      %s121 = ssub.s32 8192, 8192
      %122 = vsyncadd [#allocation15], %s121
      %s123 = sshll.u32 [#allocation14], 4
      %s124 = int_to_ptr.vmem [resolvable:$true] %s123
      %129 = dma.hbm_to_vmem [thread:$0]  %s11, 8192, %s124, [#allocation15], 256, 256, 16
    $region49: #{tpu_custom_call.1} parent=1 // pred_fallthru
      _
    // Predicated region
    $region50: #{tpu_custom_call.1} parent=1 // pred_check
      _
    $region51: #{tpu_custom_call.1} parent=1 // pred_check_branch
      %131 = sbr.rel (0) target = $region53
    $region52: #{tpu_custom_call.1} parent=1 // pred_region
      _
    $region53: #{tpu_custom_call.1} parent=1 // pred_fallthru
      _
    // Predicated region
    $region54: #{tpu_custom_call.1} parent=1 // pred_check
      _
    $region55: #{tpu_custom_call.1} parent=1 // pred_check_branch
      %133 = sbr.rel (0) target = $region57
    $region56: #{tpu_custom_call.1} parent=1 // pred_region
      %s135 = ssub.s32 8192, 8192
      %136 = vsyncadd [#allocation15], %s135
      %s137 = sshll.u32 [#allocation16], 4
      %s138 = int_to_ptr.vmem [resolvable:$true] %s137
      %143 = dma.hbm_to_vmem [thread:$0]  %s13, 8192, %s138, [#allocation15], 64, 64, 4
    $region57: #{tpu_custom_call.1} parent=1 // pred_fallthru
      _
    // Predicated region
    $region58: #{tpu_custom_call.1} parent=1 // pred_check
      _
    $region59: #{tpu_custom_call.1} parent=1 // pred_check_branch
      %145 = sbr.rel (0) target = $region61
    $region60: #{tpu_custom_call.1} parent=1 // pred_region
      _
    $region61: #{tpu_custom_call.1} parent=1 // pred_fallthru
      _
    // Predicated region
    $region62: #{tpu_custom_call.1} parent=1 // pred_check
      _
    $region63: #{tpu_custom_call.1} parent=1 // pred_check_branch
      %147 = sbr.rel (0) target = $region65
    $region64: #{tpu_custom_call.1} parent=1 // pred_region
      _
    $region65: #{tpu_custom_call.1} parent=1 // pred_fallthru
      _
    // Predicated region
    $region66: #{tpu_custom_call.1} parent=1 // pred_check
      _
    $region67: #{tpu_custom_call.1} parent=1 // pred_check_branch
      %149 = sbr.rel (0) target = $region69
    $region68: #{tpu_custom_call.1} parent=1 // pred_region
      _
    $region69: #{tpu_custom_call.1} parent=1 // pred_fallthru
      _
    // Predicated region
    $region70: #{tpu_custom_call.1} parent=1 // pred_check
      _
    $region71: #{tpu_custom_call.1} parent=1 // pred_check_branch
      %151 = sbr.rel (0) target = $region73
    $region72: #{tpu_custom_call.1} parent=1 // pred_region
      %152 = dma.done [#allocation3], 256
    $region73: #{tpu_custom_call.1} parent=1 // pred_fallthru
      _
    // Predicated region
    $region74: #{tpu_custom_call.1} parent=1 // pred_check
      _
    $region75: #{tpu_custom_call.1} parent=1 // pred_check_branch
      %154 = sbr.rel (0) target = $region77
    $region76: #{tpu_custom_call.1} parent=1 // pred_region
      %155 = dma.done [#allocation6], 128
    $region77: #{tpu_custom_call.1} parent=1 // pred_fallthru
      _
    // Predicated region
    $region78: #{tpu_custom_call.1} parent=1 // pred_check
      _
    $region79: #{tpu_custom_call.1} parent=1 // pred_check_branch
      %157 = sbr.rel (0) target = $region81
    $region80: #{tpu_custom_call.1} parent=1 // pred_region
      %158 = dma.done [#allocation6], 128
    $region81: #{tpu_custom_call.1} parent=1 // pred_fallthru
      _
    // Predicated region
    $region82: #{tpu_custom_call.1} parent=1 // pred_check
      _
    $region83: #{tpu_custom_call.1} parent=1 // pred_check_branch
      %160 = sbr.rel (0) target = $region85
    $region84: #{tpu_custom_call.1} parent=1 // pred_region
      %161 = dma.done [#allocation9], 32
    $region85: #{tpu_custom_call.1} parent=1 // pred_fallthru
      _
    // Predicated region
    $region86: #{tpu_custom_call.1} parent=1 // pred_check
      _
    $region87: #{tpu_custom_call.1} parent=1 // pred_check_branch
      %163 = sbr.rel (0) target = $region89
    $region88: #{tpu_custom_call.1} parent=1 // pred_region
      %164 = dma.done [#allocation9], 32
    $region89: #{tpu_custom_call.1} parent=1 // pred_fallthru
      _
    // Predicated region
    $region90: #{tpu_custom_call.1} parent=1 // pred_check
      _
    $region91: #{tpu_custom_call.1} parent=1 // pred_check_branch
      %166 = sbr.rel (0) target = $region93
    $region92: #{tpu_custom_call.1} parent=1 // pred_region
      %167 = dma.done [#allocation12], 6144
    $region93: #{tpu_custom_call.1} parent=1 // pred_fallthru
      _
    // Predicated region
    $region94: #{tpu_custom_call.1} parent=1 // pred_check
      _
    $region95: #{tpu_custom_call.1} parent=1 // pred_check_branch
      %169 = sbr.rel (0) target = $region97
    $region96: #{tpu_custom_call.1} parent=1 // pred_region
      %170 = dma.done [#allocation12], 2048
    $region97: #{tpu_custom_call.1} parent=1 // pred_fallthru
      _
    // Predicated region
    $region98: #{tpu_custom_call.1} parent=1 // pred_check
      _
    $region99: #{tpu_custom_call.1} parent=1 // pred_check_branch
      %172 = sbr.rel (0) target = $region101
    $region100: #{tpu_custom_call.1} parent=1 // pred_region
      %173 = dma.done [#allocation15], 8192
    $region101: #{tpu_custom_call.1} parent=1 // pred_fallthru
      _
    // Predicated region
    $region102: #{tpu_custom_call.1} parent=1 // pred_check
      _
    $region103: #{tpu_custom_call.1} parent=1 // pred_check_branch
      %175 = sbr.rel (0) target = $region105
    $region104: #{tpu_custom_call.1} parent=1 // pred_region
      %176 = dma.done [#allocation15], 8192
    $region105: #{tpu_custom_call.1} parent=1 // pred_fallthru
      _
    %v178 = vld [vmem:[#allocation2] sm:$0xff]
    %v179 = vld [vmem:[#allocation2 + $0x8] sm:$0xff]
    %v180 = vpack.c.bf16 %v179, %v178
    %v181 = vld [vmem:[#allocation5] sm:$0xf]
    %v182 = vld [vmem:[#allocation5 + $0x4] sm:$0xf]
    %v185 = vunpack.c.l.b16 %v181
    %v186 = vunpack.c.l.b16 %v182
    %v187 = vpack.c.b16 %v186, %v185
    %vm189 = vcmask 130048
    %v191 = vsel %vm189, %v180, 0
    %193 = vmatprep.subr.bf16.mxu0 0
    %194 = vmatpush1.bf16.msra.mxu0 %v187
    %195 = vmatprep.subr.bf16.mxu0 0
    %196 = vmatpush1.bf16.msra.mxu0 0
    %197 = vmatprep.subr.bf16.mxu0 0
    %198 = vmatpush1.bf16.msra.mxu0 0
    %199 = vmatprep.subr.bf16.mxu0 0
    %200 = vmatpush1.bf16.msra.mxu0 0
    %201 = vmatprep.subr.bf16.mxu0 0
    %202 = vmatpush1.bf16.msra.mxu0 0
    %203 = vmatprep.subr.bf16.mxu0 0
    %204 = vmatpush1.bf16.msra.mxu0 0
    %205 = vmatprep.subr.bf16.mxu0 0
    %206 = vmatpush1.bf16.msra.mxu0 0
    %207 = vmatprep.subr.bf16.mxu0 0
    %208 = vmatpush1.bf16.msra.mxu0 0
    %209 = vmatprep.subr.bf16.mxu0 0
    %210 = vmatpush1.bf16.msra.mxu0 0
    %211 = vmatprep.subr.bf16.mxu0 0
    %212 = vmatpush1.bf16.msra.mxu0 0
    %213 = vmatprep.subr.bf16.mxu0 0
    %214 = vmatpush1.bf16.msra.mxu0 0
    %215 = vmatprep.subr.bf16.mxu0 0
    %216 = vmatpush1.bf16.msra.mxu0 0
    %217 = vmatprep.subr.bf16.mxu0 0
    %218 = vmatpush1.bf16.msra.mxu0 0
    %219 = vmatprep.subr.bf16.mxu0 0
    %220 = vmatpush1.bf16.msra.mxu0 0
    %221 = vmatprep.subr.bf16.mxu0 0
    %222 = vmatpush1.bf16.msra.mxu0 0
    %223 = vmatprep.subr.bf16.mxu0 0
    %224 = vmatpush1.bf16.msra.mxu0 0
    %225 = vmatprep.mubr.bf16.mxu0 0
    %226 = vmatmul.mubr.bf16.gmra.mrb[0].mxu0 %v191
    %v227 = vpop.f32.mrb[0].mxu0
    %v228 = vadd.f32 0.0, %v227
    %v229 = vpop.f32.mrb[0].mxu0
    %v230 = vpop.f32.mrb[0].mxu0
    %v231 = vadd.f32 0.0, %v230
    %v232 = vpop.f32.mrb[0].mxu0
    %233 = vdwg.mxu0
    %v234 = vld [vmem:[#allocation7] sm:$0xff]
    %v235 = vadd.f32 %v228, %v234
    %v236 = vadd.f32 %v231, %v234
    %v237 = vld [vmem:[#allocation8] sm:$0x1]
    %v238 = vld [vmem:[#allocation10] sm:$0x1]
    %239 = vadd.xlane.f32.xlu0 %v235
    %v240 = vpop.xlane.xlu0 %239
    %241 = vadd.xlane.f32.xlu0 %v236
    %v242 = vpop.xlane.xlu0 %241
    %v243 = vrcp.pop 128.0
    %v244 = vmul.f32 %v240, %v243
    %v245 = vmul.f32 %v242, %v243
    %v246 = vsub.f32 %v235, %v244
    %v247 = vsub.f32 %v236, %v245
    %v248 = vmul.f32 %v246, %v246
    %v249 = vmul.f32 %v247, %v247
    %250 = vadd.xlane.f32.xlu0 %v248
    %v251 = vpop.xlane.xlu0 %250
    %252 = vadd.xlane.f32.xlu0 %v249
    %v253 = vpop.xlane.xlu0 %252
    %v254 = vmul.f32 %v251, %v243
    %v255 = vmul.f32 %v253, %v243
    %v256 = vadd.f32 %v254, 1e-05
    %v257 = vadd.f32 %v255, 1e-05
    %v258 = vrsqrt.pop %v256
    %v259 = vrsqrt.pop %v257
    %v260 = vmul.f32 %v246, %v258
    %v261 = vmul.f32 %v247, %v259
    %v263 = vlaneseq
    %v264 = vshrl.u32 %v263, 7
    %v265 = vsub.s32 0, %v264
    %v266 = vrot.slane %v237, %v265
    %v268 = vmul.f32 %v260, %v266
    %v269 = vmul.f32 %v261, %v266
    %v271 = vlaneseq
    %v272 = vshrl.u32 %v271, 7
    %v273 = vsub.s32 0, %v272
    %v274 = vrot.slane %v238, %v273
    %v276 = vadd.f32 %v268, %v274
    %v277 = vadd.f32 %v269, %v274
    %v278 = vpack.c.bf16 %v277, %v276
    %v279 = vld [vmem:[#allocation11] sm:$0xff]
    %v280 = vld [vmem:[#allocation11 + $0x8] sm:$0xf]
    %v281 = vld [vmem:[#allocation11 + $0xc] sm:$0xff]
    %v282 = vld [vmem:[#allocation11 + $0x14] sm:$0xf]
    %v283 = vld [vmem:[#allocation11 + $0x18] sm:$0xff]
    %v284 = vld [vmem:[#allocation11 + $0x20] sm:$0xf]
    %v285 = vld [vmem:[#allocation11 + $0x24] sm:$0xff]
    %v286 = vld [vmem:[#allocation11 + $0x2c] sm:$0xf]
    %v287 = vld [vmem:[#allocation11 + $0x30] sm:$0xff]
    %v288 = vld [vmem:[#allocation11 + $0x38] sm:$0xf]
    %v289 = vld [vmem:[#allocation11 + $0x3c] sm:$0xff]
    %v290 = vld [vmem:[#allocation11 + $0x44] sm:$0xf]
    %v291 = vld [vmem:[#allocation11 + $0x48] sm:$0xff]
    %v292 = vld [vmem:[#allocation11 + $0x50] sm:$0xf]
    %v293 = vld [vmem:[#allocation11 + $0x54] sm:$0xff]
    %v294 = vld [vmem:[#allocation11 + $0x5c] sm:$0xf]
    %v295 = vld [vmem:[#allocation11 + $0x60] sm:$0xff]
    %v296 = vld [vmem:[#allocation11 + $0x68] sm:$0xf]
    %v297 = vld [vmem:[#allocation11 + $0x6c] sm:$0xff]
    %v298 = vld [vmem:[#allocation11 + $0x74] sm:$0xf]
    %v299 = vld [vmem:[#allocation11 + $0x78] sm:$0xff]
    %v300 = vld [vmem:[#allocation11 + $0x80] sm:$0xf]
    %v301 = vld [vmem:[#allocation11 + $0x84] sm:$0xff]
    %v302 = vld [vmem:[#allocation11 + $0x8c] sm:$0xf]
    %v303 = vld [vmem:[#allocation11 + $0x90] sm:$0xff]
    %v304 = vld [vmem:[#allocation11 + $0x98] sm:$0xf]
    %v305 = vld [vmem:[#allocation11 + $0x9c] sm:$0xff]
    %v306 = vld [vmem:[#allocation11 + $0xa4] sm:$0xf]
    %v307 = vld [vmem:[#allocation11 + $0xa8] sm:$0xff]
    %v308 = vld [vmem:[#allocation11 + $0xb0] sm:$0xf]
    %v309 = vld [vmem:[#allocation11 + $0xb4] sm:$0xff]
    %v310 = vld [vmem:[#allocation11 + $0xbc] sm:$0xf]
    %v311 = vld [vmem:[%s6] sm:$0x7]
    %v313 = vlaneseq
    %v314 = vshrl.u32 %v313, 7
    %v315 = vsub.s32 0, %v314
    %v316 = vrot.slane %v311, %v315
    %v317 = vlaneseq
    %v318 = vshrl.u32 %v317, 7
    %v319 = vsub.s32 1, %v318
    %v320 = vrot.slane %v311, %v319
    %v321 = vlaneseq
    %v322 = vshrl.u32 %v321, 7
    %v323 = vsub.s32 2, %v322
    %v324 = vrot.slane %v311, %v323
    %v360 = vunpack.c.l.b16 %v279
    %v361 = vunpack.c.h.b16 %v279
    %v362 = vunpack.c.l.b16 %v280
    %v363 = vunpack.c.l.b16 %v281
    %v364 = vunpack.c.h.b16 %v281
    %v365 = vunpack.c.l.b16 %v282
    %v366 = vunpack.c.l.b16 %v283
    %v367 = vunpack.c.h.b16 %v283
    %v368 = vunpack.c.l.b16 %v284
    %v369 = vunpack.c.l.b16 %v285
    %v370 = vunpack.c.h.b16 %v285
    %v371 = vunpack.c.l.b16 %v286
    %v372 = vunpack.c.l.b16 %v287
    %v373 = vunpack.c.h.b16 %v287
    %v374 = vunpack.c.l.b16 %v288
    %v375 = vunpack.c.l.b16 %v289
    %v376 = vunpack.c.h.b16 %v289
    %v377 = vunpack.c.l.b16 %v290
    %v378 = vunpack.c.l.b16 %v291
    %v379 = vunpack.c.h.b16 %v291
    %v380 = vunpack.c.l.b16 %v292
    %v381 = vunpack.c.l.b16 %v293
    %v382 = vunpack.c.h.b16 %v293
    %v383 = vunpack.c.l.b16 %v294
    %v384 = vunpack.c.l.b16 %v295
    %v385 = vunpack.c.h.b16 %v295
    %v386 = vunpack.c.l.b16 %v296
    %v387 = vunpack.c.l.b16 %v297
    %v388 = vunpack.c.h.b16 %v297
    %v389 = vunpack.c.l.b16 %v298
    %v390 = vunpack.c.l.b16 %v299
    %v391 = vunpack.c.h.b16 %v299
    %v392 = vunpack.c.l.b16 %v300
    %v393 = vunpack.c.l.b16 %v301
    %v394 = vunpack.c.h.b16 %v301
    %v395 = vunpack.c.l.b16 %v302
    %v396 = vunpack.c.l.b16 %v303
    %v397 = vunpack.c.h.b16 %v303
    %v398 = vunpack.c.l.b16 %v304
    %v399 = vunpack.c.l.b16 %v305
    %v400 = vunpack.c.h.b16 %v305
    %v401 = vunpack.c.l.b16 %v306
    %v402 = vunpack.c.l.b16 %v307
    %v403 = vunpack.c.h.b16 %v307
    %v404 = vunpack.c.l.b16 %v308
    %v405 = vunpack.c.l.b16 %v309
    %v406 = vunpack.c.h.b16 %v309
    %v407 = vunpack.c.l.b16 %v310
    %v408 = vpack.c.b16 %v363, %v360
    %v409 = vpack.c.b16 %v364, %v361
    %v410 = vpack.c.b16 %v365, %v362
    %v411 = vpack.c.b16 %v369, %v366
    %v412 = vpack.c.b16 %v370, %v367
    %v413 = vpack.c.b16 %v371, %v368
    %v414 = vpack.c.b16 %v375, %v372
    %v415 = vpack.c.b16 %v376, %v373
    %v416 = vpack.c.b16 %v377, %v374
    %v417 = vpack.c.b16 %v381, %v378
    %v418 = vpack.c.b16 %v382, %v379
    %v419 = vpack.c.b16 %v383, %v380
    %v420 = vpack.c.b16 %v387, %v384
    %v421 = vpack.c.b16 %v388, %v385
    %v422 = vpack.c.b16 %v389, %v386
    %v423 = vpack.c.b16 %v393, %v390
    %v424 = vpack.c.b16 %v394, %v391
    %v425 = vpack.c.b16 %v395, %v392
    %v426 = vpack.c.b16 %v399, %v396
    %v427 = vpack.c.b16 %v400, %v397
    %v428 = vpack.c.b16 %v401, %v398
    %v429 = vpack.c.b16 %v405, %v402
    %v430 = vpack.c.b16 %v406, %v403
    %v431 = vpack.c.b16 %v407, %v404
    %456 = vmatprep.subr.bf16.mxu0 %v409
    %457 = vmatpush1.bf16.msra.mxu0 %v408
    %458 = vmatprep.subr.bf16.mxu0 %v412
    %459 = vmatpush1.bf16.msra.mxu0 %v411
    %460 = vmatprep.subr.bf16.mxu0 %v415
    %461 = vmatpush1.bf16.msra.mxu0 %v414
    %462 = vmatprep.subr.bf16.mxu0 %v418
    %463 = vmatpush1.bf16.msra.mxu0 %v417
    %464 = vmatprep.subr.bf16.mxu0 %v421
    %465 = vmatpush1.bf16.msra.mxu0 %v420
    %466 = vmatprep.subr.bf16.mxu0 %v424
    %467 = vmatpush1.bf16.msra.mxu0 %v423
    %468 = vmatprep.subr.bf16.mxu0 %v427
    %469 = vmatpush1.bf16.msra.mxu0 %v426
    %470 = vmatprep.subr.bf16.mxu0 %v430
    %471 = vmatpush1.bf16.msra.mxu0 %v429
    %472 = vmatprep.subr.bf16.mxu0 0
    %473 = vmatpush1.bf16.msra.mxu0 0
    %474 = vmatprep.subr.bf16.mxu0 0
    %475 = vmatpush1.bf16.msra.mxu0 0
    %476 = vmatprep.subr.bf16.mxu0 0
    %477 = vmatpush1.bf16.msra.mxu0 0
    %478 = vmatprep.subr.bf16.mxu0 0
    %479 = vmatpush1.bf16.msra.mxu0 0
    %480 = vmatprep.subr.bf16.mxu0 0
    %481 = vmatpush1.bf16.msra.mxu0 0
    %482 = vmatprep.subr.bf16.mxu0 0
    %483 = vmatpush1.bf16.msra.mxu0 0
    %484 = vmatprep.subr.bf16.mxu0 0
    %485 = vmatpush1.bf16.msra.mxu0 0
    %486 = vmatprep.subr.bf16.mxu0 0
    %487 = vmatpush1.bf16.msra.mxu0 0
    %488 = vmatprep.mubr.bf16.mxu0 0
    %489 = vmatmul.mubr.bf16.gmra.mrb[0].mxu0 %v278
    %v490 = vpop.f32.mrb[0].mxu0
    %v491 = vadd.f32 %v316, %v490
    %v492 = vpop.f32.mrb[0].mxu0
    %v493 = vadd.f32 %v320, %v492
    %v494 = vpop.f32.mrb[0].mxu0
    %v495 = vadd.f32 %v316, %v494
    %v496 = vpop.f32.mrb[0].mxu0
    %v497 = vadd.f32 %v320, %v496
    %498 = vdwg.mxu0
    %499 = vmatprep.subr.bf16.mxu0 0
    %500 = vmatpush1.bf16.msra.mxu0 %v410
    %501 = vmatprep.subr.bf16.mxu0 0
    %502 = vmatpush1.bf16.msra.mxu0 %v413
    %503 = vmatprep.subr.bf16.mxu0 0
    %504 = vmatpush1.bf16.msra.mxu0 %v416
    %505 = vmatprep.subr.bf16.mxu0 0
    %506 = vmatpush1.bf16.msra.mxu0 %v419
    %507 = vmatprep.subr.bf16.mxu0 0
    %508 = vmatpush1.bf16.msra.mxu0 %v422
    %509 = vmatprep.subr.bf16.mxu0 0
    %510 = vmatpush1.bf16.msra.mxu0 %v425
    %511 = vmatprep.subr.bf16.mxu0 0
    %512 = vmatpush1.bf16.msra.mxu0 %v428
    %513 = vmatprep.subr.bf16.mxu0 0
    %514 = vmatpush1.bf16.msra.mxu0 %v431
    %515 = vmatprep.subr.bf16.mxu0 0
    %516 = vmatpush1.bf16.msra.mxu0 0
    %517 = vmatprep.subr.bf16.mxu0 0
    %518 = vmatpush1.bf16.msra.mxu0 0
    %519 = vmatprep.subr.bf16.mxu0 0
    %520 = vmatpush1.bf16.msra.mxu0 0
    %521 = vmatprep.subr.bf16.mxu0 0
    %522 = vmatpush1.bf16.msra.mxu0 0
    %523 = vmatprep.subr.bf16.mxu0 0
    %524 = vmatpush1.bf16.msra.mxu0 0
    %525 = vmatprep.subr.bf16.mxu0 0
    %526 = vmatpush1.bf16.msra.mxu0 0
    %527 = vmatprep.subr.bf16.mxu0 0
    %528 = vmatpush1.bf16.msra.mxu0 0
    %529 = vmatprep.subr.bf16.mxu0 0
    %530 = vmatpush1.bf16.msra.mxu0 0
    %531 = vmatprep.mubr.bf16.mxu0 0
    %532 = vmatmul.mubr.bf16.gmra.mrb[0].mxu0 %v278
    %v533 = vpop.f32.mrb[0].mxu0
    %v534 = vadd.f32 %v324, %v533
    %v535 = vpop.f32.mrb[0].mxu0
    %v536 = vpop.f32.mrb[0].mxu0
    %v537 = vadd.f32 %v324, %v536
    %v538 = vpop.f32.mrb[0].mxu0
    %539 = vdwg.mxu0
    %542 = vrot.lane.b32.xlu0 %v491, 96
    %v543 = vpop.permute.xlu0 %542
    %544 = vrot.lane.b32.xlu0 %v495, 96
    %v545 = vpop.permute.xlu0 %544
    %548 = vrot.lane.b32.xlu0 %v491, 64
    %v549 = vpop.permute.xlu0 %548
    %550 = vrot.lane.b32.xlu0 %v495, 64
    %v551 = vpop.permute.xlu0 %550
    %554 = vrot.lane.b32.xlu0 %v491, 32
    %v555 = vpop.permute.xlu0 %554
    %556 = vrot.lane.b32.xlu0 %v495, 32
    %v557 = vpop.permute.xlu0 %556
    %v560 = vpack.c.bf16 %v491, %v491
    %v561 = vpack.c.bf16 %v495, %v495
    %v562 = vpack.c.bf16 %v543, %v543
    %v563 = vpack.c.bf16 %v545, %v545
    %v564 = vpack.c.bf16 %v549, %v549
    %v565 = vpack.c.bf16 %v551, %v551
    %v566 = vpack.c.bf16 %v555, %v555
    %v567 = vpack.c.bf16 %v557, %v557
    %570 = vrot.lane.b32.xlu0 %v493, 96
    %v571 = vpop.permute.xlu0 %570
    %572 = vrot.lane.b32.xlu0 %v497, 96
    %v573 = vpop.permute.xlu0 %572
    %576 = vrot.lane.b32.xlu0 %v493, 64
    %v577 = vpop.permute.xlu0 %576
    %578 = vrot.lane.b32.xlu0 %v497, 64
    %v579 = vpop.permute.xlu0 %578
    %582 = vrot.lane.b32.xlu0 %v493, 32
    %v583 = vpop.permute.xlu0 %582
    %584 = vrot.lane.b32.xlu0 %v497, 32
    %v585 = vpop.permute.xlu0 %584
    %v588 = vpack.c.bf16 %v493, %v493
    %v589 = vpack.c.bf16 %v497, %v497
    %v590 = vpack.c.bf16 %v571, %v571
    %v591 = vpack.c.bf16 %v573, %v573
    %v592 = vpack.c.bf16 %v577, %v577
    %v593 = vpack.c.bf16 %v579, %v579
    %v594 = vpack.c.bf16 %v583, %v583
    %v595 = vpack.c.bf16 %v585, %v585
    %598 = vrot.lane.b32.xlu0 %v534, 96
    %v599 = vpop.permute.xlu0 %598
    %600 = vrot.lane.b32.xlu0 %v537, 96
    %v601 = vpop.permute.xlu0 %600
    %604 = vrot.lane.b32.xlu0 %v534, 64
    %v605 = vpop.permute.xlu0 %604
    %606 = vrot.lane.b32.xlu0 %v537, 64
    %v607 = vpop.permute.xlu0 %606
    %610 = vrot.lane.b32.xlu0 %v534, 32
    %v611 = vpop.permute.xlu0 %610
    %612 = vrot.lane.b32.xlu0 %v537, 32
    %v613 = vpop.permute.xlu0 %612
    %v616 = vpack.c.bf16 %v534, %v534
    %v617 = vpack.c.bf16 %v537, %v537
    %v618 = vpack.c.bf16 %v599, %v599
    %v619 = vpack.c.bf16 %v601, %v601
    %v620 = vpack.c.bf16 %v605, %v605
    %v621 = vpack.c.bf16 %v607, %v607
    %v622 = vpack.c.bf16 %v611, %v611
    %v623 = vpack.c.bf16 %v613, %v613
    %vm624 = vcmask 261120
    %v626 = vsel %vm624, %v560, 0
    %v629 = vsel %vm624, %v588, 0
    %631 = vmatprep.subr.bf16.mxu0 0
    %632 = vmatpush1.bf16.xpose.msra.mxu0 %v629
    %633 = vmatprep.subr.bf16.mxu0 0
    %634 = vmatpush1.bf16.xpose.msra.mxu0 0
    %635 = vmatprep.subr.bf16.mxu0 0
    %636 = vmatpush1.bf16.xpose.msra.mxu0 0
    %637 = vmatprep.subr.bf16.mxu0 0
    %638 = vmatpush1.bf16.xpose.msra.mxu0 0
    %639 = vmatprep.subr.bf16.mxu0 0
    %640 = vmatpush1.bf16.xpose.msra.mxu0 0
    %641 = vmatprep.subr.bf16.mxu0 0
    %642 = vmatpush1.bf16.xpose.msra.mxu0 0
    %643 = vmatprep.subr.bf16.mxu0 0
    %644 = vmatpush1.bf16.xpose.msra.mxu0 0
    %645 = vmatprep.subr.bf16.mxu0 0
    %646 = vmatpush1.bf16.xpose.msra.mxu0 0
    %647 = vmatprep.subr.bf16.mxu0 0
    %648 = vmatpush1.bf16.xpose.msra.mxu0 0
    %649 = vmatprep.subr.bf16.mxu0 0
    %650 = vmatpush1.bf16.xpose.msra.mxu0 0
    %651 = vmatprep.subr.bf16.mxu0 0
    %652 = vmatpush1.bf16.xpose.msra.mxu0 0
    %653 = vmatprep.subr.bf16.mxu0 0
    %654 = vmatpush1.bf16.xpose.msra.mxu0 0
    %655 = vmatprep.subr.bf16.mxu0 0
    %656 = vmatpush1.bf16.xpose.msra.mxu0 0
    %657 = vmatprep.subr.bf16.mxu0 0
    %658 = vmatpush1.bf16.xpose.msra.mxu0 0
    %659 = vmatprep.subr.bf16.mxu0 0
    %660 = vmatpush1.bf16.xpose.msra.mxu0 0
    %661 = vmatprep.subr.bf16.mxu0 0
    %662 = vmatpush1.bf16.xpose.msra.mxu0 0
    %663 = vmatprep.mubr.bf16.mxu0 0
    %664 = vmatmul.mubr.bf16.gmra.mrb[0].mxu0 %v626
    %v665 = vpop.f32.mrb[0].mxu0
    %v666 = vadd.f32 0.0, %v665
    %v667 = vpop.f32.mrb[0].mxu0
    %v668 = vpop.f32.mrb[0].mxu0
    %v669 = vpop.f32.mrb[0].mxu0
    %670 = vdwg.mxu0
    %v672 = vsel %vm624, %v561, 0
    %v675 = vsel %vm624, %v589, 0
    %677 = vmatprep.subr.bf16.mxu0 0
    %678 = vmatpush1.bf16.xpose.msra.mxu0 %v675
    %679 = vmatprep.subr.bf16.mxu0 0
    %680 = vmatpush1.bf16.xpose.msra.mxu0 0
    %681 = vmatprep.subr.bf16.mxu0 0
    %682 = vmatpush1.bf16.xpose.msra.mxu0 0
    %683 = vmatprep.subr.bf16.mxu0 0
    %684 = vmatpush1.bf16.xpose.msra.mxu0 0
    %685 = vmatprep.subr.bf16.mxu0 0
    %686 = vmatpush1.bf16.xpose.msra.mxu0 0
    %687 = vmatprep.subr.bf16.mxu0 0
    %688 = vmatpush1.bf16.xpose.msra.mxu0 0
    %689 = vmatprep.subr.bf16.mxu0 0
    %690 = vmatpush1.bf16.xpose.msra.mxu0 0
    %691 = vmatprep.subr.bf16.mxu0 0
    %692 = vmatpush1.bf16.xpose.msra.mxu0 0
    %693 = vmatprep.subr.bf16.mxu0 0
    %694 = vmatpush1.bf16.xpose.msra.mxu0 0
    %695 = vmatprep.subr.bf16.mxu0 0
    %696 = vmatpush1.bf16.xpose.msra.mxu0 0
    %697 = vmatprep.subr.bf16.mxu0 0
    %698 = vmatpush1.bf16.xpose.msra.mxu0 0
    %699 = vmatprep.subr.bf16.mxu0 0
    %700 = vmatpush1.bf16.xpose.msra.mxu0 0
    %701 = vmatprep.subr.bf16.mxu0 0
    %702 = vmatpush1.bf16.xpose.msra.mxu0 0
    %703 = vmatprep.subr.bf16.mxu0 0
    %704 = vmatpush1.bf16.xpose.msra.mxu0 0
    %705 = vmatprep.subr.bf16.mxu0 0
    %706 = vmatpush1.bf16.xpose.msra.mxu0 0
    %707 = vmatprep.subr.bf16.mxu0 0
    %708 = vmatpush1.bf16.xpose.msra.mxu0 0
    %709 = vmatprep.mubr.bf16.mxu0 0
    %710 = vmatmul.mubr.bf16.gmra.mrb[0].mxu0 %v672
    %v711 = vpop.f32.mrb[0].mxu0
    %v712 = vadd.f32 0.0, %v711
    %v713 = vpop.f32.mrb[0].mxu0
    %v714 = vpop.f32.mrb[0].mxu0
    %v715 = vpop.f32.mrb[0].mxu0
    %716 = vdwg.mxu0
    %v718 = vsel %vm624, %v562, 0
    %v721 = vsel %vm624, %v590, 0
    %723 = vmatprep.subr.bf16.mxu0 0
    %724 = vmatpush1.bf16.xpose.msra.mxu0 %v721
    %725 = vmatprep.subr.bf16.mxu0 0
    %726 = vmatpush1.bf16.xpose.msra.mxu0 0
    %727 = vmatprep.subr.bf16.mxu0 0
    %728 = vmatpush1.bf16.xpose.msra.mxu0 0
    %729 = vmatprep.subr.bf16.mxu0 0
    %730 = vmatpush1.bf16.xpose.msra.mxu0 0
    %731 = vmatprep.subr.bf16.mxu0 0
    %732 = vmatpush1.bf16.xpose.msra.mxu0 0
    %733 = vmatprep.subr.bf16.mxu0 0
    %734 = vmatpush1.bf16.xpose.msra.mxu0 0
    %735 = vmatprep.subr.bf16.mxu0 0
    %736 = vmatpush1.bf16.xpose.msra.mxu0 0
    %737 = vmatprep.subr.bf16.mxu0 0
    %738 = vmatpush1.bf16.xpose.msra.mxu0 0
    %739 = vmatprep.subr.bf16.mxu0 0
    %740 = vmatpush1.bf16.xpose.msra.mxu0 0
    %741 = vmatprep.subr.bf16.mxu0 0
    %742 = vmatpush1.bf16.xpose.msra.mxu0 0
    %743 = vmatprep.subr.bf16.mxu0 0
    %744 = vmatpush1.bf16.xpose.msra.mxu0 0
    %745 = vmatprep.subr.bf16.mxu0 0
    %746 = vmatpush1.bf16.xpose.msra.mxu0 0
    %747 = vmatprep.subr.bf16.mxu0 0
    %748 = vmatpush1.bf16.xpose.msra.mxu0 0
    %749 = vmatprep.subr.bf16.mxu0 0
    %750 = vmatpush1.bf16.xpose.msra.mxu0 0
    %751 = vmatprep.subr.bf16.mxu0 0
    %752 = vmatpush1.bf16.xpose.msra.mxu0 0
    %753 = vmatprep.subr.bf16.mxu0 0
    %754 = vmatpush1.bf16.xpose.msra.mxu0 0
    %755 = vmatprep.mubr.bf16.mxu0 0
    %756 = vmatmul.mubr.bf16.gmra.mrb[0].mxu0 %v718
    %v757 = vpop.f32.mrb[0].mxu0
    %v758 = vadd.f32 0.0, %v757
    %v759 = vpop.f32.mrb[0].mxu0
    %v760 = vpop.f32.mrb[0].mxu0
    %v761 = vpop.f32.mrb[0].mxu0
    %762 = vdwg.mxu0
    %v764 = vsel %vm624, %v563, 0
    %v767 = vsel %vm624, %v591, 0
    %769 = vmatprep.subr.bf16.mxu0 0
    %770 = vmatpush1.bf16.xpose.msra.mxu0 %v767
    %771 = vmatprep.subr.bf16.mxu0 0
    %772 = vmatpush1.bf16.xpose.msra.mxu0 0
    %773 = vmatprep.subr.bf16.mxu0 0
    %774 = vmatpush1.bf16.xpose.msra.mxu0 0
    %775 = vmatprep.subr.bf16.mxu0 0
    %776 = vmatpush1.bf16.xpose.msra.mxu0 0
    %777 = vmatprep.subr.bf16.mxu0 0
    %778 = vmatpush1.bf16.xpose.msra.mxu0 0
    %779 = vmatprep.subr.bf16.mxu0 0
    %780 = vmatpush1.bf16.xpose.msra.mxu0 0
    %781 = vmatprep.subr.bf16.mxu0 0
    %782 = vmatpush1.bf16.xpose.msra.mxu0 0
    %783 = vmatprep.subr.bf16.mxu0 0
    %784 = vmatpush1.bf16.xpose.msra.mxu0 0
    %785 = vmatprep.subr.bf16.mxu0 0
    %786 = vmatpush1.bf16.xpose.msra.mxu0 0
    %787 = vmatprep.subr.bf16.mxu0 0
    %788 = vmatpush1.bf16.xpose.msra.mxu0 0
    %789 = vmatprep.subr.bf16.mxu0 0
    %790 = vmatpush1.bf16.xpose.msra.mxu0 0
    %791 = vmatprep.subr.bf16.mxu0 0
    %792 = vmatpush1.bf16.xpose.msra.mxu0 0
    %793 = vmatprep.subr.bf16.mxu0 0
    %794 = vmatpush1.bf16.xpose.msra.mxu0 0
    %795 = vmatprep.subr.bf16.mxu0 0
    %796 = vmatpush1.bf16.xpose.msra.mxu0 0
    %797 = vmatprep.subr.bf16.mxu0 0
    %798 = vmatpush1.bf16.xpose.msra.mxu0 0
    %799 = vmatprep.subr.bf16.mxu0 0
    %800 = vmatpush1.bf16.xpose.msra.mxu0 0
    %801 = vmatprep.mubr.bf16.mxu0 0
    %802 = vmatmul.mubr.bf16.gmra.mrb[0].mxu0 %v764
    %v803 = vpop.f32.mrb[0].mxu0
    %v804 = vadd.f32 0.0, %v803
    %v805 = vpop.f32.mrb[0].mxu0
    %v806 = vpop.f32.mrb[0].mxu0
    %v807 = vpop.f32.mrb[0].mxu0
    %808 = vdwg.mxu0
    %v810 = vsel %vm624, %v564, 0
    %v813 = vsel %vm624, %v592, 0
    %815 = vmatprep.subr.bf16.mxu0 0
    %816 = vmatpush1.bf16.xpose.msra.mxu0 %v813
    %817 = vmatprep.subr.bf16.mxu0 0
    %818 = vmatpush1.bf16.xpose.msra.mxu0 0
    %819 = vmatprep.subr.bf16.mxu0 0
    %820 = vmatpush1.bf16.xpose.msra.mxu0 0
    %821 = vmatprep.subr.bf16.mxu0 0
    %822 = vmatpush1.bf16.xpose.msra.mxu0 0
    %823 = vmatprep.subr.bf16.mxu0 0
    %824 = vmatpush1.bf16.xpose.msra.mxu0 0
    %825 = vmatprep.subr.bf16.mxu0 0
    %826 = vmatpush1.bf16.xpose.msra.mxu0 0
    %827 = vmatprep.subr.bf16.mxu0 0
    %828 = vmatpush1.bf16.xpose.msra.mxu0 0
    %829 = vmatprep.subr.bf16.mxu0 0
    %830 = vmatpush1.bf16.xpose.msra.mxu0 0
    %831 = vmatprep.subr.bf16.mxu0 0
    %832 = vmatpush1.bf16.xpose.msra.mxu0 0
    %833 = vmatprep.subr.bf16.mxu0 0
    %834 = vmatpush1.bf16.xpose.msra.mxu0 0
    %835 = vmatprep.subr.bf16.mxu0 0
    %836 = vmatpush1.bf16.xpose.msra.mxu0 0
    %837 = vmatprep.subr.bf16.mxu0 0
    %838 = vmatpush1.bf16.xpose.msra.mxu0 0
    %839 = vmatprep.subr.bf16.mxu0 0
    %840 = vmatpush1.bf16.xpose.msra.mxu0 0
    %841 = vmatprep.subr.bf16.mxu0 0
    %842 = vmatpush1.bf16.xpose.msra.mxu0 0
    %843 = vmatprep.subr.bf16.mxu0 0
    %844 = vmatpush1.bf16.xpose.msra.mxu0 0
    %845 = vmatprep.subr.bf16.mxu0 0
    %846 = vmatpush1.bf16.xpose.msra.mxu0 0
    %847 = vmatprep.mubr.bf16.mxu0 0
    %848 = vmatmul.mubr.bf16.gmra.mrb[0].mxu0 %v810
    %v849 = vpop.f32.mrb[0].mxu0
    %v850 = vadd.f32 0.0, %v849
    %v851 = vpop.f32.mrb[0].mxu0
    %v852 = vpop.f32.mrb[0].mxu0
    %v853 = vpop.f32.mrb[0].mxu0
    %854 = vdwg.mxu0
    %v856 = vsel %vm624, %v565, 0
    %v859 = vsel %vm624, %v593, 0
    %861 = vmatprep.subr.bf16.mxu0 0
    %862 = vmatpush1.bf16.xpose.msra.mxu0 %v859
    %863 = vmatprep.subr.bf16.mxu0 0
    %864 = vmatpush1.bf16.xpose.msra.mxu0 0
    %865 = vmatprep.subr.bf16.mxu0 0
    %866 = vmatpush1.bf16.xpose.msra.mxu0 0
    %867 = vmatprep.subr.bf16.mxu0 0
    %868 = vmatpush1.bf16.xpose.msra.mxu0 0
    %869 = vmatprep.subr.bf16.mxu0 0
    %870 = vmatpush1.bf16.xpose.msra.mxu0 0
    %871 = vmatprep.subr.bf16.mxu0 0
    %872 = vmatpush1.bf16.xpose.msra.mxu0 0
    %873 = vmatprep.subr.bf16.mxu0 0
    %874 = vmatpush1.bf16.xpose.msra.mxu0 0
    %875 = vmatprep.subr.bf16.mxu0 0
    %876 = vmatpush1.bf16.xpose.msra.mxu0 0
    %877 = vmatprep.subr.bf16.mxu0 0
    %878 = vmatpush1.bf16.xpose.msra.mxu0 0
    %879 = vmatprep.subr.bf16.mxu0 0
    %880 = vmatpush1.bf16.xpose.msra.mxu0 0
    %881 = vmatprep.subr.bf16.mxu0 0
    %882 = vmatpush1.bf16.xpose.msra.mxu0 0
    %883 = vmatprep.subr.bf16.mxu0 0
    %884 = vmatpush1.bf16.xpose.msra.mxu0 0
    %885 = vmatprep.subr.bf16.mxu0 0
    %886 = vmatpush1.bf16.xpose.msra.mxu0 0
    %887 = vmatprep.subr.bf16.mxu0 0
    %888 = vmatpush1.bf16.xpose.msra.mxu0 0
    %889 = vmatprep.subr.bf16.mxu0 0
    %890 = vmatpush1.bf16.xpose.msra.mxu0 0
    %891 = vmatprep.subr.bf16.mxu0 0
    %892 = vmatpush1.bf16.xpose.msra.mxu0 0
    %893 = vmatprep.mubr.bf16.mxu0 0
    %894 = vmatmul.mubr.bf16.gmra.mrb[0].mxu0 %v856
    %v895 = vpop.f32.mrb[0].mxu0
    %v896 = vadd.f32 0.0, %v895
    %v897 = vpop.f32.mrb[0].mxu0
    %v898 = vpop.f32.mrb[0].mxu0
    %v899 = vpop.f32.mrb[0].mxu0
    %900 = vdwg.mxu0
    %v902 = vsel %vm624, %v566, 0
    %v905 = vsel %vm624, %v594, 0
    %907 = vmatprep.subr.bf16.mxu0 0
    %908 = vmatpush1.bf16.xpose.msra.mxu0 %v905
    %909 = vmatprep.subr.bf16.mxu0 0
    %910 = vmatpush1.bf16.xpose.msra.mxu0 0
    %911 = vmatprep.subr.bf16.mxu0 0
    %912 = vmatpush1.bf16.xpose.msra.mxu0 0
    %913 = vmatprep.subr.bf16.mxu0 0
    %914 = vmatpush1.bf16.xpose.msra.mxu0 0
    %915 = vmatprep.subr.bf16.mxu0 0
    %916 = vmatpush1.bf16.xpose.msra.mxu0 0
    %917 = vmatprep.subr.bf16.mxu0 0
    %918 = vmatpush1.bf16.xpose.msra.mxu0 0
    %919 = vmatprep.subr.bf16.mxu0 0
    %920 = vmatpush1.bf16.xpose.msra.mxu0 0
    %921 = vmatprep.subr.bf16.mxu0 0
    %922 = vmatpush1.bf16.xpose.msra.mxu0 0
    %923 = vmatprep.subr.bf16.mxu0 0
    %924 = vmatpush1.bf16.xpose.msra.mxu0 0
    %925 = vmatprep.subr.bf16.mxu0 0
    %926 = vmatpush1.bf16.xpose.msra.mxu0 0
    %927 = vmatprep.subr.bf16.mxu0 0
    %928 = vmatpush1.bf16.xpose.msra.mxu0 0
    %929 = vmatprep.subr.bf16.mxu0 0
    %930 = vmatpush1.bf16.xpose.msra.mxu0 0
    %931 = vmatprep.subr.bf16.mxu0 0
    %932 = vmatpush1.bf16.xpose.msra.mxu0 0
    %933 = vmatprep.subr.bf16.mxu0 0
    %934 = vmatpush1.bf16.xpose.msra.mxu0 0
    %935 = vmatprep.subr.bf16.mxu0 0
    %936 = vmatpush1.bf16.xpose.msra.mxu0 0
    %937 = vmatprep.subr.bf16.mxu0 0
    %938 = vmatpush1.bf16.xpose.msra.mxu0 0
    %939 = vmatprep.mubr.bf16.mxu0 0
    %940 = vmatmul.mubr.bf16.gmra.mrb[0].mxu0 %v902
    %v941 = vpop.f32.mrb[0].mxu0
    %v942 = vadd.f32 0.0, %v941
    %v943 = vpop.f32.mrb[0].mxu0
    %v944 = vpop.f32.mrb[0].mxu0
    %v945 = vpop.f32.mrb[0].mxu0
    %946 = vdwg.mxu0
    %v948 = vsel %vm624, %v567, 0
    %v951 = vsel %vm624, %v595, 0
    %953 = vmatprep.subr.bf16.mxu0 0
    %954 = vmatpush1.bf16.xpose.msra.mxu0 %v951
    %955 = vmatprep.subr.bf16.mxu0 0
    %956 = vmatpush1.bf16.xpose.msra.mxu0 0
    %957 = vmatprep.subr.bf16.mxu0 0
    %958 = vmatpush1.bf16.xpose.msra.mxu0 0
    %959 = vmatprep.subr.bf16.mxu0 0
    %960 = vmatpush1.bf16.xpose.msra.mxu0 0
    %961 = vmatprep.subr.bf16.mxu0 0
    %962 = vmatpush1.bf16.xpose.msra.mxu0 0
    %963 = vmatprep.subr.bf16.mxu0 0
    %964 = vmatpush1.bf16.xpose.msra.mxu0 0
    %965 = vmatprep.subr.bf16.mxu0 0
    %966 = vmatpush1.bf16.xpose.msra.mxu0 0
    %967 = vmatprep.subr.bf16.mxu0 0
    %968 = vmatpush1.bf16.xpose.msra.mxu0 0
    %969 = vmatprep.subr.bf16.mxu0 0
    %970 = vmatpush1.bf16.xpose.msra.mxu0 0
    %971 = vmatprep.subr.bf16.mxu0 0
    %972 = vmatpush1.bf16.xpose.msra.mxu0 0
    %973 = vmatprep.subr.bf16.mxu0 0
    %974 = vmatpush1.bf16.xpose.msra.mxu0 0
    %975 = vmatprep.subr.bf16.mxu0 0
    %976 = vmatpush1.bf16.xpose.msra.mxu0 0
    %977 = vmatprep.subr.bf16.mxu0 0
    %978 = vmatpush1.bf16.xpose.msra.mxu0 0
    %979 = vmatprep.subr.bf16.mxu0 0
    %980 = vmatpush1.bf16.xpose.msra.mxu0 0
    %981 = vmatprep.subr.bf16.mxu0 0
    %982 = vmatpush1.bf16.xpose.msra.mxu0 0
    %983 = vmatprep.subr.bf16.mxu0 0
    %984 = vmatpush1.bf16.xpose.msra.mxu0 0
    %985 = vmatprep.mubr.bf16.mxu0 0
    %986 = vmatmul.mubr.bf16.gmra.mrb[0].mxu0 %v948
    %v987 = vpop.f32.mrb[0].mxu0
    %v988 = vadd.f32 0.0, %v987
    %v989 = vpop.f32.mrb[0].mxu0
    %v990 = vpop.f32.mrb[0].mxu0
    %v991 = vpop.f32.mrb[0].mxu0
    %992 = vdwg.mxu0
    %vm993 = vcmask 64512
    %v994 = vsel %vm993, %v666, -inf
    %995 = vmax.xlane.f32.xlu0 %v994
    %v996 = vpop.xlane.xlu0 %995
    %v997 = vsel %vm993, %v712, -inf
    %998 = vmax.xlane.f32.xlu0 %v997
    %v999 = vpop.xlane.xlu0 %998
    %v1000 = vsel %vm993, %v758, -inf
    %1001 = vmax.xlane.f32.xlu0 %v1000
    %v1002 = vpop.xlane.xlu0 %1001
    %v1003 = vsel %vm993, %v804, -inf
    %1004 = vmax.xlane.f32.xlu0 %v1003
    %v1005 = vpop.xlane.xlu0 %1004
    %v1006 = vsel %vm993, %v850, -inf
    %1007 = vmax.xlane.f32.xlu0 %v1006
    %v1008 = vpop.xlane.xlu0 %1007
    %v1009 = vsel %vm993, %v896, -inf
    %1010 = vmax.xlane.f32.xlu0 %v1009
    %v1011 = vpop.xlane.xlu0 %1010
    %v1012 = vsel %vm993, %v942, -inf
    %1013 = vmax.xlane.f32.xlu0 %v1012
    %v1014 = vpop.xlane.xlu0 %1013
    %v1015 = vsel %vm993, %v988, -inf
    %1016 = vmax.xlane.f32.xlu0 %v1015
    %v1017 = vpop.xlane.xlu0 %1016
    %v1018 = vsub.f32 %v666, %v996
    %v1019 = vsub.f32 %v712, %v999
    %v1020 = vsub.f32 %v758, %v1002
    %v1021 = vsub.f32 %v804, %v1005
    %v1022 = vsub.f32 %v850, %v1008
    %v1023 = vsub.f32 %v896, %v1011
    %v1024 = vsub.f32 %v942, %v1014
    %v1025 = vsub.f32 %v988, %v1017
    %v1026 = vmul.f32 %v1018, 1.442695
    %v1027 = vpow.pop %v1026
    %v1028 = vmul.f32 %v1019, 1.442695
    %v1029 = vpow.pop %v1028
    %v1030 = vmul.f32 %v1020, 1.442695
    %v1031 = vpow.pop %v1030
    %v1032 = vmul.f32 %v1021, 1.442695
    %v1033 = vpow.pop %v1032
    %v1034 = vmul.f32 %v1022, 1.442695
    %v1035 = vpow.pop %v1034
    %v1036 = vmul.f32 %v1023, 1.442695
    %v1037 = vpow.pop %v1036
    %v1038 = vmul.f32 %v1024, 1.442695
    %v1039 = vpow.pop %v1038
    %v1040 = vmul.f32 %v1025, 1.442695
    %v1041 = vpow.pop %v1040
    %v1042 = vsel %vm993, %v1027, 0.0
    %1043 = vadd.xlane.f32.xlu0 %v1042
    %v1044 = vpop.xlane.xlu0 %1043
    %v1045 = vsel %vm993, %v1029, 0.0
    %1046 = vadd.xlane.f32.xlu0 %v1045
    %v1047 = vpop.xlane.xlu0 %1046
    %v1048 = vsel %vm993, %v1031, 0.0
    %1049 = vadd.xlane.f32.xlu0 %v1048
    %v1050 = vpop.xlane.xlu0 %1049
    %v1051 = vsel %vm993, %v1033, 0.0
    %1052 = vadd.xlane.f32.xlu0 %v1051
    %v1053 = vpop.xlane.xlu0 %1052
    %v1054 = vsel %vm993, %v1035, 0.0
    %1055 = vadd.xlane.f32.xlu0 %v1054
    %v1056 = vpop.xlane.xlu0 %1055
    %v1057 = vsel %vm993, %v1037, 0.0
    %1058 = vadd.xlane.f32.xlu0 %v1057
    %v1059 = vpop.xlane.xlu0 %1058
    %v1060 = vsel %vm993, %v1039, 0.0
    %1061 = vadd.xlane.f32.xlu0 %v1060
    %v1062 = vpop.xlane.xlu0 %1061
    %v1063 = vsel %vm993, %v1041, 0.0
    %1064 = vadd.xlane.f32.xlu0 %v1063
    %v1065 = vpop.xlane.xlu0 %1064
    %v1066 = vrcp.pop %v1044
    %v1067 = vrcp.pop %v1047
    %v1068 = vrcp.pop %v1050
    %v1069 = vrcp.pop %v1053
    %v1070 = vrcp.pop %v1056
    %v1071 = vrcp.pop %v1059
    %v1072 = vrcp.pop %v1062
    %v1073 = vrcp.pop %v1065
    %v1074 = vmul.f32 %v1027, %v1066
    %v1075 = vmul.f32 %v1029, %v1067
    %v1076 = vmul.f32 %v1031, %v1068
    %v1077 = vmul.f32 %v1033, %v1069
    %v1078 = vmul.f32 %v1035, %v1070
    %v1079 = vmul.f32 %v1037, %v1071
    %v1080 = vmul.f32 %v1039, %v1072
    %v1081 = vmul.f32 %v1041, %v1073
    %v1082 = vpack.c.bf16 %v1074, %v1074
    %v1083 = vpack.c.bf16 %v1075, %v1075
    %v1084 = vpack.c.bf16 %v1076, %v1076
    %v1085 = vpack.c.bf16 %v1077, %v1077
    %v1086 = vpack.c.bf16 %v1078, %v1078
    %v1087 = vpack.c.bf16 %v1079, %v1079
    %v1088 = vpack.c.bf16 %v1080, %v1080
    %v1089 = vpack.c.bf16 %v1081, %v1081
    %v1091 = vsel %vm993, %v1082, 0
    %vm1093 = vcmask 1043456
    %v1095 = vsel %vm1093, %v616, 0
    %1097 = vmatprep.subr.bf16.mxu0 0
    %1098 = vmatpush1.bf16.msra.mxu0 %v1095
    %1099 = vmatprep.subr.bf16.mxu0 0
    %1100 = vmatpush1.bf16.msra.mxu0 0
    %1101 = vmatprep.subr.bf16.mxu0 0
    %1102 = vmatpush1.bf16.msra.mxu0 0
    %1103 = vmatprep.subr.bf16.mxu0 0
    %1104 = vmatpush1.bf16.msra.mxu0 0
    %1105 = vmatprep.subr.bf16.mxu0 0
    %1106 = vmatpush1.bf16.msra.mxu0 0
    %1107 = vmatprep.subr.bf16.mxu0 0
    %1108 = vmatpush1.bf16.msra.mxu0 0
    %1109 = vmatprep.subr.bf16.mxu0 0
    %1110 = vmatpush1.bf16.msra.mxu0 0
    %1111 = vmatprep.subr.bf16.mxu0 0
    %1112 = vmatpush1.bf16.msra.mxu0 0
    %1113 = vmatprep.subr.bf16.mxu0 0
    %1114 = vmatpush1.bf16.msra.mxu0 0
    %1115 = vmatprep.subr.bf16.mxu0 0
    %1116 = vmatpush1.bf16.msra.mxu0 0
    %1117 = vmatprep.subr.bf16.mxu0 0
    %1118 = vmatpush1.bf16.msra.mxu0 0
    %1119 = vmatprep.subr.bf16.mxu0 0
    %1120 = vmatpush1.bf16.msra.mxu0 0
    %1121 = vmatprep.subr.bf16.mxu0 0
    %1122 = vmatpush1.bf16.msra.mxu0 0
    %1123 = vmatprep.subr.bf16.mxu0 0
    %1124 = vmatpush1.bf16.msra.mxu0 0
    %1125 = vmatprep.subr.bf16.mxu0 0
    %1126 = vmatpush1.bf16.msra.mxu0 0
    %1127 = vmatprep.subr.bf16.mxu0 0
    %1128 = vmatpush1.bf16.msra.mxu0 0
    %1129 = vmatprep.mubr.bf16.mxu0 0
    %1130 = vmatmul.mubr.bf16.gmra.mrb[0].mxu0 %v1091
    %v1131 = vpop.f32.mrb[0].mxu0
    %v1132 = vadd.f32 0.0, %v1131
    %v1133 = vpop.f32.mrb[0].mxu0
    %v1134 = vpop.f32.mrb[0].mxu0
    %v1135 = vpop.f32.mrb[0].mxu0
    %1136 = vdwg.mxu0
    %v1138 = vsel %vm993, %v1083, 0
    %v1141 = vsel %vm1093, %v617, 0
    %1143 = vmatprep.subr.bf16.mxu0 0
    %1144 = vmatpush1.bf16.msra.mxu0 %v1141
    %1145 = vmatprep.subr.bf16.mxu0 0
    %1146 = vmatpush1.bf16.msra.mxu0 0
    %1147 = vmatprep.subr.bf16.mxu0 0
    %1148 = vmatpush1.bf16.msra.mxu0 0
    %1149 = vmatprep.subr.bf16.mxu0 0
    %1150 = vmatpush1.bf16.msra.mxu0 0
    %1151 = vmatprep.subr.bf16.mxu0 0
    %1152 = vmatpush1.bf16.msra.mxu0 0
    %1153 = vmatprep.subr.bf16.mxu0 0
    %1154 = vmatpush1.bf16.msra.mxu0 0
    %1155 = vmatprep.subr.bf16.mxu0 0
    %1156 = vmatpush1.bf16.msra.mxu0 0
    %1157 = vmatprep.subr.bf16.mxu0 0
    %1158 = vmatpush1.bf16.msra.mxu0 0
    %1159 = vmatprep.subr.bf16.mxu0 0
    %1160 = vmatpush1.bf16.msra.mxu0 0
    %1161 = vmatprep.subr.bf16.mxu0 0
    %1162 = vmatpush1.bf16.msra.mxu0 0
    %1163 = vmatprep.subr.bf16.mxu0 0
    %1164 = vmatpush1.bf16.msra.mxu0 0
    %1165 = vmatprep.subr.bf16.mxu0 0
    %1166 = vmatpush1.bf16.msra.mxu0 0
    %1167 = vmatprep.subr.bf16.mxu0 0
    %1168 = vmatpush1.bf16.msra.mxu0 0
    %1169 = vmatprep.subr.bf16.mxu0 0
    %1170 = vmatpush1.bf16.msra.mxu0 0
    %1171 = vmatprep.subr.bf16.mxu0 0
    %1172 = vmatpush1.bf16.msra.mxu0 0
    %1173 = vmatprep.subr.bf16.mxu0 0
    %1174 = vmatpush1.bf16.msra.mxu0 0
    %1175 = vmatprep.mubr.bf16.mxu0 0
    %1176 = vmatmul.mubr.bf16.gmra.mrb[0].mxu0 %v1138
    %v1177 = vpop.f32.mrb[0].mxu0
    %v1178 = vadd.f32 0.0, %v1177
    %v1179 = vpop.f32.mrb[0].mxu0
    %v1180 = vpop.f32.mrb[0].mxu0
    %v1181 = vpop.f32.mrb[0].mxu0
    %1182 = vdwg.mxu0
    %v1184 = vsel %vm993, %v1084, 0
    %v1187 = vsel %vm1093, %v618, 0
    %1189 = vmatprep.subr.bf16.mxu0 0
    %1190 = vmatpush1.bf16.msra.mxu0 %v1187
    %1191 = vmatprep.subr.bf16.mxu0 0
    %1192 = vmatpush1.bf16.msra.mxu0 0
    %1193 = vmatprep.subr.bf16.mxu0 0
    %1194 = vmatpush1.bf16.msra.mxu0 0
    %1195 = vmatprep.subr.bf16.mxu0 0
    %1196 = vmatpush1.bf16.msra.mxu0 0
    %1197 = vmatprep.subr.bf16.mxu0 0
    %1198 = vmatpush1.bf16.msra.mxu0 0
    %1199 = vmatprep.subr.bf16.mxu0 0
    %1200 = vmatpush1.bf16.msra.mxu0 0
    %1201 = vmatprep.subr.bf16.mxu0 0
    %1202 = vmatpush1.bf16.msra.mxu0 0
    %1203 = vmatprep.subr.bf16.mxu0 0
    %1204 = vmatpush1.bf16.msra.mxu0 0
    %1205 = vmatprep.subr.bf16.mxu0 0
    %1206 = vmatpush1.bf16.msra.mxu0 0
    %1207 = vmatprep.subr.bf16.mxu0 0
    %1208 = vmatpush1.bf16.msra.mxu0 0
    %1209 = vmatprep.subr.bf16.mxu0 0
    %1210 = vmatpush1.bf16.msra.mxu0 0
    %1211 = vmatprep.subr.bf16.mxu0 0
    %1212 = vmatpush1.bf16.msra.mxu0 0
    %1213 = vmatprep.subr.bf16.mxu0 0
    %1214 = vmatpush1.bf16.msra.mxu0 0
    %1215 = vmatprep.subr.bf16.mxu0 0
    %1216 = vmatpush1.bf16.msra.mxu0 0
    %1217 = vmatprep.subr.bf16.mxu0 0
    %1218 = vmatpush1.bf16.msra.mxu0 0
    %1219 = vmatprep.subr.bf16.mxu0 0
    %1220 = vmatpush1.bf16.msra.mxu0 0
    %1221 = vmatprep.mubr.bf16.mxu0 0
    %1222 = vmatmul.mubr.bf16.gmra.mrb[0].mxu0 %v1184
    %v1223 = vpop.f32.mrb[0].mxu0
    %v1224 = vadd.f32 0.0, %v1223
    %v1225 = vpop.f32.mrb[0].mxu0
    %v1226 = vpop.f32.mrb[0].mxu0
    %v1227 = vpop.f32.mrb[0].mxu0
    %1228 = vdwg.mxu0
    %v1230 = vsel %vm993, %v1085, 0
    %v1233 = vsel %vm1093, %v619, 0
    %1235 = vmatprep.subr.bf16.mxu0 0
    %1236 = vmatpush1.bf16.msra.mxu0 %v1233
    %1237 = vmatprep.subr.bf16.mxu0 0
    %1238 = vmatpush1.bf16.msra.mxu0 0
    %1239 = vmatprep.subr.bf16.mxu0 0
    %1240 = vmatpush1.bf16.msra.mxu0 0
    %1241 = vmatprep.subr.bf16.mxu0 0
    %1242 = vmatpush1.bf16.msra.mxu0 0
    %1243 = vmatprep.subr.bf16.mxu0 0
    %1244 = vmatpush1.bf16.msra.mxu0 0
    %1245 = vmatprep.subr.bf16.mxu0 0
    %1246 = vmatpush1.bf16.msra.mxu0 0
    %1247 = vmatprep.subr.bf16.mxu0 0
    %1248 = vmatpush1.bf16.msra.mxu0 0
    %1249 = vmatprep.subr.bf16.mxu0 0
    %1250 = vmatpush1.bf16.msra.mxu0 0
    %1251 = vmatprep.subr.bf16.mxu0 0
    %1252 = vmatpush1.bf16.msra.mxu0 0
    %1253 = vmatprep.subr.bf16.mxu0 0
    %1254 = vmatpush1.bf16.msra.mxu0 0
    %1255 = vmatprep.subr.bf16.mxu0 0
    %1256 = vmatpush1.bf16.msra.mxu0 0
    %1257 = vmatprep.subr.bf16.mxu0 0
    %1258 = vmatpush1.bf16.msra.mxu0 0
    %1259 = vmatprep.subr.bf16.mxu0 0
    %1260 = vmatpush1.bf16.msra.mxu0 0
    %1261 = vmatprep.subr.bf16.mxu0 0
    %1262 = vmatpush1.bf16.msra.mxu0 0
    %1263 = vmatprep.subr.bf16.mxu0 0
    %1264 = vmatpush1.bf16.msra.mxu0 0
    %1265 = vmatprep.subr.bf16.mxu0 0
    %1266 = vmatpush1.bf16.msra.mxu0 0
    %1267 = vmatprep.mubr.bf16.mxu0 0
    %1268 = vmatmul.mubr.bf16.gmra.mrb[0].mxu0 %v1230
    %v1269 = vpop.f32.mrb[0].mxu0
    %v1270 = vadd.f32 0.0, %v1269
    %v1271 = vpop.f32.mrb[0].mxu0
    %v1272 = vpop.f32.mrb[0].mxu0
    %v1273 = vpop.f32.mrb[0].mxu0
    %1274 = vdwg.mxu0
    %v1276 = vsel %vm993, %v1086, 0
    %v1279 = vsel %vm1093, %v620, 0
    %1281 = vmatprep.subr.bf16.mxu0 0
    %1282 = vmatpush1.bf16.msra.mxu0 %v1279
    %1283 = vmatprep.subr.bf16.mxu0 0
    %1284 = vmatpush1.bf16.msra.mxu0 0
    %1285 = vmatprep.subr.bf16.mxu0 0
    %1286 = vmatpush1.bf16.msra.mxu0 0
    %1287 = vmatprep.subr.bf16.mxu0 0
    %1288 = vmatpush1.bf16.msra.mxu0 0
    %1289 = vmatprep.subr.bf16.mxu0 0
    %1290 = vmatpush1.bf16.msra.mxu0 0
    %1291 = vmatprep.subr.bf16.mxu0 0
    %1292 = vmatpush1.bf16.msra.mxu0 0
    %1293 = vmatprep.subr.bf16.mxu0 0
    %1294 = vmatpush1.bf16.msra.mxu0 0
    %1295 = vmatprep.subr.bf16.mxu0 0
    %1296 = vmatpush1.bf16.msra.mxu0 0
    %1297 = vmatprep.subr.bf16.mxu0 0
    %1298 = vmatpush1.bf16.msra.mxu0 0
    %1299 = vmatprep.subr.bf16.mxu0 0
    %1300 = vmatpush1.bf16.msra.mxu0 0
    %1301 = vmatprep.subr.bf16.mxu0 0
    %1302 = vmatpush1.bf16.msra.mxu0 0
    %1303 = vmatprep.subr.bf16.mxu0 0
    %1304 = vmatpush1.bf16.msra.mxu0 0
    %1305 = vmatprep.subr.bf16.mxu0 0
    %1306 = vmatpush1.bf16.msra.mxu0 0
    %1307 = vmatprep.subr.bf16.mxu0 0
    %1308 = vmatpush1.bf16.msra.mxu0 0
    %1309 = vmatprep.subr.bf16.mxu0 0
    %1310 = vmatpush1.bf16.msra.mxu0 0
    %1311 = vmatprep.subr.bf16.mxu0 0
    %1312 = vmatpush1.bf16.msra.mxu0 0
    %1313 = vmatprep.mubr.bf16.mxu0 0
    %1314 = vmatmul.mubr.bf16.gmra.mrb[0].mxu0 %v1276
    %v1315 = vpop.f32.mrb[0].mxu0
    %v1316 = vadd.f32 0.0, %v1315
    %v1317 = vpop.f32.mrb[0].mxu0
    %v1318 = vpop.f32.mrb[0].mxu0
    %v1319 = vpop.f32.mrb[0].mxu0
    %1320 = vdwg.mxu0
    %v1322 = vsel %vm993, %v1087, 0
    %v1325 = vsel %vm1093, %v621, 0
    %1327 = vmatprep.subr.bf16.mxu0 0
    %1328 = vmatpush1.bf16.msra.mxu0 %v1325
    %1329 = vmatprep.subr.bf16.mxu0 0
    %1330 = vmatpush1.bf16.msra.mxu0 0
    %1331 = vmatprep.subr.bf16.mxu0 0
    %1332 = vmatpush1.bf16.msra.mxu0 0
    %1333 = vmatprep.subr.bf16.mxu0 0
    %1334 = vmatpush1.bf16.msra.mxu0 0
    %1335 = vmatprep.subr.bf16.mxu0 0
    %1336 = vmatpush1.bf16.msra.mxu0 0
    %1337 = vmatprep.subr.bf16.mxu0 0
    %1338 = vmatpush1.bf16.msra.mxu0 0
    %1339 = vmatprep.subr.bf16.mxu0 0
    %1340 = vmatpush1.bf16.msra.mxu0 0
    %1341 = vmatprep.subr.bf16.mxu0 0
    %1342 = vmatpush1.bf16.msra.mxu0 0
    %1343 = vmatprep.subr.bf16.mxu0 0
    %1344 = vmatpush1.bf16.msra.mxu0 0
    %1345 = vmatprep.subr.bf16.mxu0 0
    %1346 = vmatpush1.bf16.msra.mxu0 0
    %1347 = vmatprep.subr.bf16.mxu0 0
    %1348 = vmatpush1.bf16.msra.mxu0 0
    %1349 = vmatprep.subr.bf16.mxu0 0
    %1350 = vmatpush1.bf16.msra.mxu0 0
    %1351 = vmatprep.subr.bf16.mxu0 0
    %1352 = vmatpush1.bf16.msra.mxu0 0
    %1353 = vmatprep.subr.bf16.mxu0 0
    %1354 = vmatpush1.bf16.msra.mxu0 0
    %1355 = vmatprep.subr.bf16.mxu0 0
    %1356 = vmatpush1.bf16.msra.mxu0 0
    %1357 = vmatprep.subr.bf16.mxu0 0
    %1358 = vmatpush1.bf16.msra.mxu0 0
    %1359 = vmatprep.mubr.bf16.mxu0 0
    %1360 = vmatmul.mubr.bf16.gmra.mrb[0].mxu0 %v1322
    %v1361 = vpop.f32.mrb[0].mxu0
    %v1362 = vadd.f32 0.0, %v1361
    %v1363 = vpop.f32.mrb[0].mxu0
    %v1364 = vpop.f32.mrb[0].mxu0
    %v1365 = vpop.f32.mrb[0].mxu0
    %1366 = vdwg.mxu0
    %v1368 = vsel %vm993, %v1088, 0
    %v1371 = vsel %vm1093, %v622, 0
    %1373 = vmatprep.subr.bf16.mxu0 0
    %1374 = vmatpush1.bf16.msra.mxu0 %v1371
    %1375 = vmatprep.subr.bf16.mxu0 0
    %1376 = vmatpush1.bf16.msra.mxu0 0
    %1377 = vmatprep.subr.bf16.mxu0 0
    %1378 = vmatpush1.bf16.msra.mxu0 0
    %1379 = vmatprep.subr.bf16.mxu0 0
    %1380 = vmatpush1.bf16.msra.mxu0 0
    %1381 = vmatprep.subr.bf16.mxu0 0
    %1382 = vmatpush1.bf16.msra.mxu0 0
    %1383 = vmatprep.subr.bf16.mxu0 0
    %1384 = vmatpush1.bf16.msra.mxu0 0
    %1385 = vmatprep.subr.bf16.mxu0 0
    %1386 = vmatpush1.bf16.msra.mxu0 0
    %1387 = vmatprep.subr.bf16.mxu0 0
    %1388 = vmatpush1.bf16.msra.mxu0 0
    %1389 = vmatprep.subr.bf16.mxu0 0
    %1390 = vmatpush1.bf16.msra.mxu0 0
    %1391 = vmatprep.subr.bf16.mxu0 0
    %1392 = vmatpush1.bf16.msra.mxu0 0
    %1393 = vmatprep.subr.bf16.mxu0 0
    %1394 = vmatpush1.bf16.msra.mxu0 0
    %1395 = vmatprep.subr.bf16.mxu0 0
    %1396 = vmatpush1.bf16.msra.mxu0 0
    %1397 = vmatprep.subr.bf16.mxu0 0
    %1398 = vmatpush1.bf16.msra.mxu0 0
    %1399 = vmatprep.subr.bf16.mxu0 0
    %1400 = vmatpush1.bf16.msra.mxu0 0
    %1401 = vmatprep.subr.bf16.mxu0 0
    %1402 = vmatpush1.bf16.msra.mxu0 0
    %1403 = vmatprep.subr.bf16.mxu0 0
    %1404 = vmatpush1.bf16.msra.mxu0 0
    %1405 = vmatprep.mubr.bf16.mxu0 0
    %1406 = vmatmul.mubr.bf16.gmra.mrb[0].mxu0 %v1368
    %v1407 = vpop.f32.mrb[0].mxu0
    %v1408 = vadd.f32 0.0, %v1407
    %v1409 = vpop.f32.mrb[0].mxu0
    %v1410 = vpop.f32.mrb[0].mxu0
    %v1411 = vpop.f32.mrb[0].mxu0
    %1412 = vdwg.mxu0
    %v1414 = vsel %vm993, %v1089, 0
    %v1417 = vsel %vm1093, %v623, 0
    %1419 = vmatprep.subr.bf16.mxu0 0
    %1420 = vmatpush1.bf16.msra.mxu0 %v1417
    %1421 = vmatprep.subr.bf16.mxu0 0
    %1422 = vmatpush1.bf16.msra.mxu0 0
    %1423 = vmatprep.subr.bf16.mxu0 0
    %1424 = vmatpush1.bf16.msra.mxu0 0
    %1425 = vmatprep.subr.bf16.mxu0 0
    %1426 = vmatpush1.bf16.msra.mxu0 0
    %1427 = vmatprep.subr.bf16.mxu0 0
    %1428 = vmatpush1.bf16.msra.mxu0 0
    %1429 = vmatprep.subr.bf16.mxu0 0
    %1430 = vmatpush1.bf16.msra.mxu0 0
    %1431 = vmatprep.subr.bf16.mxu0 0
    %1432 = vmatpush1.bf16.msra.mxu0 0
    %1433 = vmatprep.subr.bf16.mxu0 0
    %1434 = vmatpush1.bf16.msra.mxu0 0
    %1435 = vmatprep.subr.bf16.mxu0 0
    %1436 = vmatpush1.bf16.msra.mxu0 0
    %1437 = vmatprep.subr.bf16.mxu0 0
    %1438 = vmatpush1.bf16.msra.mxu0 0
    %1439 = vmatprep.subr.bf16.mxu0 0
    %1440 = vmatpush1.bf16.msra.mxu0 0
    %1441 = vmatprep.subr.bf16.mxu0 0
    %1442 = vmatpush1.bf16.msra.mxu0 0
    %1443 = vmatprep.subr.bf16.mxu0 0
    %1444 = vmatpush1.bf16.msra.mxu0 0
    %1445 = vmatprep.subr.bf16.mxu0 0
    %1446 = vmatpush1.bf16.msra.mxu0 0
    %1447 = vmatprep.subr.bf16.mxu0 0
    %1448 = vmatpush1.bf16.msra.mxu0 0
    %1449 = vmatprep.subr.bf16.mxu0 0
    %1450 = vmatpush1.bf16.msra.mxu0 0
    %1451 = vmatprep.mubr.bf16.mxu0 0
    %1452 = vmatmul.mubr.bf16.gmra.mrb[0].mxu0 %v1414
    %v1453 = vpop.f32.mrb[0].mxu0
    %v1454 = vadd.f32 0.0, %v1453
    %v1455 = vpop.f32.mrb[0].mxu0
    %v1456 = vpop.f32.mrb[0].mxu0
    %v1457 = vpop.f32.mrb[0].mxu0
    %1458 = vdwg.mxu0
    %1461 = vrot.lane.b32.xlu0 %v1224, 32
    %v1462 = vpop.permute.xlu0 %1461
    %1463 = vrot.lane.b32.xlu0 %v1270, 32
    %v1464 = vpop.permute.xlu0 %1463
    %1469 = vrot.lane.b32.xlu0 %v1316, 64
    %v1470 = vpop.permute.xlu0 %1469
    %1471 = vrot.lane.b32.xlu0 %v1362, 64
    %v1472 = vpop.permute.xlu0 %1471
    %1477 = vrot.lane.b32.xlu0 %v1408, 96
    %v1478 = vpop.permute.xlu0 %1477
    %1479 = vrot.lane.b32.xlu0 %v1454, 96
    %v1480 = vpop.permute.xlu0 %1479
    %v1483 = vsel %vm624, %v1132, %v1462
    %v1484 = vsel %vm624, %v1178, %v1464
    %vm1485 = vcmask 523264
    %v1486 = vsel %vm1485, %v1483, %v1470
    %v1487 = vsel %vm1485, %v1484, %v1472
    %vm1488 = vcmask 785408
    %v1489 = vsel %vm1488, %v1486, %v1478
    %v1490 = vsel %vm1488, %v1487, %v1480
    %v1491 = vpack.c.bf16 %v1490, %v1489
    %v1492 = vld [vmem:[#allocation13] sm:$0xf]
    %v1493 = vld [vmem:[#allocation13 + $0x4] sm:$0xf]
    %v1494 = vld [vmem:[#allocation13 + $0x8] sm:$0xf]
    %v1495 = vld [vmem:[#allocation13 + $0xc] sm:$0xf]
    %v1496 = vld [vmem:[#allocation13 + $0x10] sm:$0xf]
    %v1497 = vld [vmem:[#allocation13 + $0x14] sm:$0xf]
    %v1498 = vld [vmem:[#allocation13 + $0x18] sm:$0xf]
    %v1499 = vld [vmem:[#allocation13 + $0x1c] sm:$0xf]
    %v1500 = vld [vmem:[#allocation13 + $0x20] sm:$0xf]
    %v1501 = vld [vmem:[#allocation13 + $0x24] sm:$0xf]
    %v1502 = vld [vmem:[#allocation13 + $0x28] sm:$0xf]
    %v1503 = vld [vmem:[#allocation13 + $0x2c] sm:$0xf]
    %v1504 = vld [vmem:[#allocation13 + $0x30] sm:$0xf]
    %v1505 = vld [vmem:[#allocation13 + $0x34] sm:$0xf]
    %v1506 = vld [vmem:[#allocation13 + $0x38] sm:$0xf]
    %v1507 = vld [vmem:[#allocation13 + $0x3c] sm:$0xf]
    %v1508 = vld [vmem:[%s8] sm:$0x1]
    %v1510 = vlaneseq
    %v1511 = vshrl.u32 %v1510, 7
    %v1512 = vsub.s32 0, %v1511
    %v1513 = vrot.slane %v1508, %v1512
    %v1531 = vunpack.c.l.b16 %v1492
    %v1532 = vunpack.c.l.b16 %v1493
    %v1533 = vunpack.c.l.b16 %v1494
    %v1534 = vunpack.c.l.b16 %v1495
    %v1535 = vunpack.c.l.b16 %v1496
    %v1536 = vunpack.c.l.b16 %v1497
    %v1537 = vunpack.c.l.b16 %v1498
    %v1538 = vunpack.c.l.b16 %v1499
    %v1539 = vunpack.c.l.b16 %v1500
    %v1540 = vunpack.c.l.b16 %v1501
    %v1541 = vunpack.c.l.b16 %v1502
    %v1542 = vunpack.c.l.b16 %v1503
    %v1543 = vunpack.c.l.b16 %v1504
    %v1544 = vunpack.c.l.b16 %v1505
    %v1545 = vunpack.c.l.b16 %v1506
    %v1546 = vunpack.c.l.b16 %v1507
    %v1547 = vpack.c.b16 %v1532, %v1531
    %v1548 = vpack.c.b16 %v1534, %v1533
    %v1549 = vpack.c.b16 %v1536, %v1535
    %v1550 = vpack.c.b16 %v1538, %v1537
    %v1551 = vpack.c.b16 %v1540, %v1539
    %v1552 = vpack.c.b16 %v1542, %v1541
    %v1553 = vpack.c.b16 %v1544, %v1543
    %v1554 = vpack.c.b16 %v1546, %v1545
    %1563 = vmatprep.subr.bf16.mxu0 0
    %1564 = vmatpush1.bf16.msra.mxu0 %v1547
    %1565 = vmatprep.subr.bf16.mxu0 0
    %1566 = vmatpush1.bf16.msra.mxu0 %v1548
    %1567 = vmatprep.subr.bf16.mxu0 0
    %1568 = vmatpush1.bf16.msra.mxu0 %v1549
    %1569 = vmatprep.subr.bf16.mxu0 0
    %1570 = vmatpush1.bf16.msra.mxu0 %v1550
    %1571 = vmatprep.subr.bf16.mxu0 0
    %1572 = vmatpush1.bf16.msra.mxu0 %v1551
    %1573 = vmatprep.subr.bf16.mxu0 0
    %1574 = vmatpush1.bf16.msra.mxu0 %v1552
    %1575 = vmatprep.subr.bf16.mxu0 0
    %1576 = vmatpush1.bf16.msra.mxu0 %v1553
    %1577 = vmatprep.subr.bf16.mxu0 0
    %1578 = vmatpush1.bf16.msra.mxu0 %v1554
    %1579 = vmatprep.subr.bf16.mxu0 0
    %1580 = vmatpush1.bf16.msra.mxu0 0
    %1581 = vmatprep.subr.bf16.mxu0 0
    %1582 = vmatpush1.bf16.msra.mxu0 0
    %1583 = vmatprep.subr.bf16.mxu0 0
    %1584 = vmatpush1.bf16.msra.mxu0 0
    %1585 = vmatprep.subr.bf16.mxu0 0
    %1586 = vmatpush1.bf16.msra.mxu0 0
    %1587 = vmatprep.subr.bf16.mxu0 0
    %1588 = vmatpush1.bf16.msra.mxu0 0
    %1589 = vmatprep.subr.bf16.mxu0 0
    %1590 = vmatpush1.bf16.msra.mxu0 0
    %1591 = vmatprep.subr.bf16.mxu0 0
    %1592 = vmatpush1.bf16.msra.mxu0 0
    %1593 = vmatprep.subr.bf16.mxu0 0
    %1594 = vmatpush1.bf16.msra.mxu0 0
    %1595 = vmatprep.mubr.bf16.mxu0 0
    %1596 = vmatmul.mubr.bf16.gmra.mrb[0].mxu0 %v1491
    %v1597 = vpop.f32.mrb[0].mxu0
    %v1598 = vadd.f32 %v1513, %v1597
    %v1599 = vpop.f32.mrb[0].mxu0
    %v1600 = vpop.f32.mrb[0].mxu0
    %v1601 = vadd.f32 %v1513, %v1600
    %v1602 = vpop.f32.mrb[0].mxu0
    %1603 = vdwg.mxu0
    %v1604 = vadd.f32 %v235, %v1598
    %v1605 = vadd.f32 %v236, %v1601
    %v1606 = vld [vmem:[%s9] sm:$0x1]
    %v1607 = vld [vmem:[%s10] sm:$0x1]
    %1608 = vadd.xlane.f32.xlu0 %v1604
    %v1609 = vpop.xlane.xlu0 %1608
    %1610 = vadd.xlane.f32.xlu0 %v1605
    %v1611 = vpop.xlane.xlu0 %1610
    %v1612 = vmul.f32 %v1609, %v243
    %v1613 = vmul.f32 %v1611, %v243
    %v1614 = vsub.f32 %v1604, %v1612
    %v1615 = vsub.f32 %v1605, %v1613
    %v1616 = vmul.f32 %v1614, %v1614
    %v1617 = vmul.f32 %v1615, %v1615
    %1618 = vadd.xlane.f32.xlu0 %v1616
    %v1619 = vpop.xlane.xlu0 %1618
    %1620 = vadd.xlane.f32.xlu0 %v1617
    %v1621 = vpop.xlane.xlu0 %1620
    %v1622 = vmul.f32 %v1619, %v243
    %v1623 = vmul.f32 %v1621, %v243
    %v1624 = vadd.f32 %v1622, 1e-05
    %v1625 = vadd.f32 %v1623, 1e-05
    %v1626 = vrsqrt.pop %v1624
    %v1627 = vrsqrt.pop %v1625
    %v1628 = vmul.f32 %v1614, %v1626
    %v1629 = vmul.f32 %v1615, %v1627
    %v1631 = vlaneseq
    %v1632 = vshrl.u32 %v1631, 7
    %v1633 = vsub.s32 0, %v1632
    %v1634 = vrot.slane %v1606, %v1633
    %v1636 = vmul.f32 %v1628, %v1634
    %v1637 = vmul.f32 %v1629, %v1634
    %v1639 = vlaneseq
    %v1640 = vshrl.u32 %v1639, 7
    %v1641 = vsub.s32 0, %v1640
    %v1642 = vrot.slane %v1607, %v1641
    %v1644 = vadd.f32 %v1636, %v1642
    %v1645 = vadd.f32 %v1637, %v1642
    %v1646 = vpack.c.bf16 %v1645, %v1644
    %v1647 = vld [vmem:[#allocation14] sm:$0xff]
    %v1648 = vld [vmem:[#allocation14 + $0x8] sm:$0xff]
    %v1649 = vld [vmem:[#allocation14 + $0x10] sm:$0xff]
    %v1650 = vld [vmem:[#allocation14 + $0x18] sm:$0xff]
    %v1651 = vld [vmem:[#allocation14 + $0x20] sm:$0xff]
    %v1652 = vld [vmem:[#allocation14 + $0x28] sm:$0xff]
    %v1653 = vld [vmem:[#allocation14 + $0x30] sm:$0xff]
    %v1654 = vld [vmem:[#allocation14 + $0x38] sm:$0xff]
    %v1655 = vld [vmem:[#allocation14 + $0x40] sm:$0xff]
    %v1656 = vld [vmem:[#allocation14 + $0x48] sm:$0xff]
    %v1657 = vld [vmem:[#allocation14 + $0x50] sm:$0xff]
    %v1658 = vld [vmem:[#allocation14 + $0x58] sm:$0xff]
    %v1659 = vld [vmem:[#allocation14 + $0x60] sm:$0xff]
    %v1660 = vld [vmem:[#allocation14 + $0x68] sm:$0xff]
    %v1661 = vld [vmem:[#allocation14 + $0x70] sm:$0xff]
    %v1662 = vld [vmem:[#allocation14 + $0x78] sm:$0xff]
    %v1663 = vld [vmem:[#allocation14 + $0x80] sm:$0xff]
    %v1664 = vld [vmem:[#allocation14 + $0x88] sm:$0xff]
    %v1665 = vld [vmem:[#allocation14 + $0x90] sm:$0xff]
    %v1666 = vld [vmem:[#allocation14 + $0x98] sm:$0xff]
    %v1667 = vld [vmem:[#allocation14 + $0xa0] sm:$0xff]
    %v1668 = vld [vmem:[#allocation14 + $0xa8] sm:$0xff]
    %v1669 = vld [vmem:[#allocation14 + $0xb0] sm:$0xff]
    %v1670 = vld [vmem:[#allocation14 + $0xb8] sm:$0xff]
    %v1671 = vld [vmem:[#allocation14 + $0xc0] sm:$0xff]
    %v1672 = vld [vmem:[#allocation14 + $0xc8] sm:$0xff]
    %v1673 = vld [vmem:[#allocation14 + $0xd0] sm:$0xff]
    %v1674 = vld [vmem:[#allocation14 + $0xd8] sm:$0xff]
    %v1675 = vld [vmem:[#allocation14 + $0xe0] sm:$0xff]
    %v1676 = vld [vmem:[#allocation14 + $0xe8] sm:$0xff]
    %v1677 = vld [vmem:[#allocation14 + $0xf0] sm:$0xff]
    %v1678 = vld [vmem:[#allocation14 + $0xf8] sm:$0xff]
    %v1679 = vld [vmem:[%s12] sm:$0xf]
    %v1681 = vlaneseq
    %v1682 = vshrl.u32 %v1681, 7
    %v1683 = vsub.s32 0, %v1682
    %v1684 = vrot.slane %v1679, %v1683
    %v1685 = vlaneseq
    %v1686 = vshrl.u32 %v1685, 7
    %v1687 = vsub.s32 1, %v1686
    %v1688 = vrot.slane %v1679, %v1687
    %v1689 = vlaneseq
    %v1690 = vshrl.u32 %v1689, 7
    %v1691 = vsub.s32 2, %v1690
    %v1692 = vrot.slane %v1679, %v1691
    %v1693 = vlaneseq
    %v1694 = vshrl.u32 %v1693, 7
    %v1695 = vsub.s32 3, %v1694
    %v1696 = vrot.slane %v1679, %v1695
    %v1733 = vunpack.c.l.b16 %v1647
    %v1734 = vunpack.c.h.b16 %v1647
    %v1735 = vunpack.c.l.b16 %v1648
    %v1736 = vunpack.c.h.b16 %v1648
    %v1737 = vunpack.c.l.b16 %v1649
    %v1738 = vunpack.c.h.b16 %v1649
    %v1739 = vunpack.c.l.b16 %v1650
    %v1740 = vunpack.c.h.b16 %v1650
    %v1741 = vunpack.c.l.b16 %v1651
    %v1742 = vunpack.c.h.b16 %v1651
    %v1743 = vunpack.c.l.b16 %v1652
    %v1744 = vunpack.c.h.b16 %v1652
    %v1745 = vunpack.c.l.b16 %v1653
    %v1746 = vunpack.c.h.b16 %v1653
    %v1747 = vunpack.c.l.b16 %v1654
    %v1748 = vunpack.c.h.b16 %v1654
    %v1749 = vunpack.c.l.b16 %v1655
    %v1750 = vunpack.c.h.b16 %v1655
    %v1751 = vunpack.c.l.b16 %v1656
    %v1752 = vunpack.c.h.b16 %v1656
    %v1753 = vunpack.c.l.b16 %v1657
    %v1754 = vunpack.c.h.b16 %v1657
    %v1755 = vunpack.c.l.b16 %v1658
    %v1756 = vunpack.c.h.b16 %v1658
    %v1757 = vunpack.c.l.b16 %v1659
    %v1758 = vunpack.c.h.b16 %v1659
    %v1759 = vunpack.c.l.b16 %v1660
    %v1760 = vunpack.c.h.b16 %v1660
    %v1761 = vunpack.c.l.b16 %v1661
    %v1762 = vunpack.c.h.b16 %v1661
    %v1763 = vunpack.c.l.b16 %v1662
    %v1764 = vunpack.c.h.b16 %v1662
    %v1765 = vunpack.c.l.b16 %v1663
    %v1766 = vunpack.c.h.b16 %v1663
    %v1767 = vunpack.c.l.b16 %v1664
    %v1768 = vunpack.c.h.b16 %v1664
    %v1769 = vunpack.c.l.b16 %v1665
    %v1770 = vunpack.c.h.b16 %v1665
    %v1771 = vunpack.c.l.b16 %v1666
    %v1772 = vunpack.c.h.b16 %v1666
    %v1773 = vunpack.c.l.b16 %v1667
    %v1774 = vunpack.c.h.b16 %v1667
    %v1775 = vunpack.c.l.b16 %v1668
    %v1776 = vunpack.c.h.b16 %v1668
    %v1777 = vunpack.c.l.b16 %v1669
    %v1778 = vunpack.c.h.b16 %v1669
    %v1779 = vunpack.c.l.b16 %v1670
    %v1780 = vunpack.c.h.b16 %v1670
    %v1781 = vunpack.c.l.b16 %v1671
    %v1782 = vunpack.c.h.b16 %v1671
    %v1783 = vunpack.c.l.b16 %v1672
    %v1784 = vunpack.c.h.b16 %v1672
    %v1785 = vunpack.c.l.b16 %v1673
    %v1786 = vunpack.c.h.b16 %v1673
    %v1787 = vunpack.c.l.b16 %v1674
    %v1788 = vunpack.c.h.b16 %v1674
    %v1789 = vunpack.c.l.b16 %v1675
    %v1790 = vunpack.c.h.b16 %v1675
    %v1791 = vunpack.c.l.b16 %v1676
    %v1792 = vunpack.c.h.b16 %v1676
    %v1793 = vunpack.c.l.b16 %v1677
    %v1794 = vunpack.c.h.b16 %v1677
    %v1795 = vunpack.c.l.b16 %v1678
    %v1796 = vunpack.c.h.b16 %v1678
    %v1797 = vpack.c.b16 %v1737, %v1733
    %v1798 = vpack.c.b16 %v1738, %v1734
    %v1799 = vpack.c.b16 %v1739, %v1735
    %v1800 = vpack.c.b16 %v1740, %v1736
    %v1801 = vpack.c.b16 %v1745, %v1741
    %v1802 = vpack.c.b16 %v1746, %v1742
    %v1803 = vpack.c.b16 %v1747, %v1743
    %v1804 = vpack.c.b16 %v1748, %v1744
    %v1805 = vpack.c.b16 %v1753, %v1749
    %v1806 = vpack.c.b16 %v1754, %v1750
    %v1807 = vpack.c.b16 %v1755, %v1751
    %v1808 = vpack.c.b16 %v1756, %v1752
    %v1809 = vpack.c.b16 %v1761, %v1757
    %v1810 = vpack.c.b16 %v1762, %v1758
    %v1811 = vpack.c.b16 %v1763, %v1759
    %v1812 = vpack.c.b16 %v1764, %v1760
    %v1813 = vpack.c.b16 %v1769, %v1765
    %v1814 = vpack.c.b16 %v1770, %v1766
    %v1815 = vpack.c.b16 %v1771, %v1767
    %v1816 = vpack.c.b16 %v1772, %v1768
    %v1817 = vpack.c.b16 %v1777, %v1773
    %v1818 = vpack.c.b16 %v1778, %v1774
    %v1819 = vpack.c.b16 %v1779, %v1775
    %v1820 = vpack.c.b16 %v1780, %v1776
    %v1821 = vpack.c.b16 %v1785, %v1781
    %v1822 = vpack.c.b16 %v1786, %v1782
    %v1823 = vpack.c.b16 %v1787, %v1783
    %v1824 = vpack.c.b16 %v1788, %v1784
    %v1825 = vpack.c.b16 %v1793, %v1789
    %v1826 = vpack.c.b16 %v1794, %v1790
    %v1827 = vpack.c.b16 %v1795, %v1791
    %v1828 = vpack.c.b16 %v1796, %v1792
    %1861 = vmatprep.subr.bf16.mxu0 %v1798
    %1862 = vmatpush1.bf16.msra.mxu0 %v1797
    %1863 = vmatprep.subr.bf16.mxu0 %v1802
    %1864 = vmatpush1.bf16.msra.mxu0 %v1801
    %1865 = vmatprep.subr.bf16.mxu0 %v1806
    %1866 = vmatpush1.bf16.msra.mxu0 %v1805
    %1867 = vmatprep.subr.bf16.mxu0 %v1810
    %1868 = vmatpush1.bf16.msra.mxu0 %v1809
    %1869 = vmatprep.subr.bf16.mxu0 %v1814
    %1870 = vmatpush1.bf16.msra.mxu0 %v1813
    %1871 = vmatprep.subr.bf16.mxu0 %v1818
    %1872 = vmatpush1.bf16.msra.mxu0 %v1817
    %1873 = vmatprep.subr.bf16.mxu0 %v1822
    %1874 = vmatpush1.bf16.msra.mxu0 %v1821
    %1875 = vmatprep.subr.bf16.mxu0 %v1826
    %1876 = vmatpush1.bf16.msra.mxu0 %v1825
    %1877 = vmatprep.subr.bf16.mxu0 0
    %1878 = vmatpush1.bf16.msra.mxu0 0
    %1879 = vmatprep.subr.bf16.mxu0 0
    %1880 = vmatpush1.bf16.msra.mxu0 0
    %1881 = vmatprep.subr.bf16.mxu0 0
    %1882 = vmatpush1.bf16.msra.mxu0 0
    %1883 = vmatprep.subr.bf16.mxu0 0
    %1884 = vmatpush1.bf16.msra.mxu0 0
    %1885 = vmatprep.subr.bf16.mxu0 0
    %1886 = vmatpush1.bf16.msra.mxu0 0
    %1887 = vmatprep.subr.bf16.mxu0 0
    %1888 = vmatpush1.bf16.msra.mxu0 0
    %1889 = vmatprep.subr.bf16.mxu0 0
    %1890 = vmatpush1.bf16.msra.mxu0 0
    %1891 = vmatprep.subr.bf16.mxu0 0
    %1892 = vmatpush1.bf16.msra.mxu0 0
    %1893 = vmatprep.mubr.bf16.mxu0 0
    %1894 = vmatmul.mubr.bf16.gmra.mrb[0].mxu0 %v1646
    %v1895 = vpop.f32.mrb[0].mxu0
    %v1896 = vadd.f32 %v1684, %v1895
    %v1897 = vpop.f32.mrb[0].mxu0
    %v1898 = vadd.f32 %v1688, %v1897
    %v1899 = vpop.f32.mrb[0].mxu0
    %v1900 = vadd.f32 %v1684, %v1899
    %v1901 = vpop.f32.mrb[0].mxu0
    %v1902 = vadd.f32 %v1688, %v1901
    %1903 = vdwg.mxu0
    %1904 = vmatprep.subr.bf16.mxu0 %v1800
    %1905 = vmatpush1.bf16.msra.mxu0 %v1799
    %1906 = vmatprep.subr.bf16.mxu0 %v1804
    %1907 = vmatpush1.bf16.msra.mxu0 %v1803
    %1908 = vmatprep.subr.bf16.mxu0 %v1808
    %1909 = vmatpush1.bf16.msra.mxu0 %v1807
    %1910 = vmatprep.subr.bf16.mxu0 %v1812
    %1911 = vmatpush1.bf16.msra.mxu0 %v1811
    %1912 = vmatprep.subr.bf16.mxu0 %v1816
    %1913 = vmatpush1.bf16.msra.mxu0 %v1815
    %1914 = vmatprep.subr.bf16.mxu0 %v1820
    %1915 = vmatpush1.bf16.msra.mxu0 %v1819
    %1916 = vmatprep.subr.bf16.mxu0 %v1824
    %1917 = vmatpush1.bf16.msra.mxu0 %v1823
    %1918 = vmatprep.subr.bf16.mxu0 %v1828
    %1919 = vmatpush1.bf16.msra.mxu0 %v1827
    %1920 = vmatprep.subr.bf16.mxu0 0
    %1921 = vmatpush1.bf16.msra.mxu0 0
    %1922 = vmatprep.subr.bf16.mxu0 0
    %1923 = vmatpush1.bf16.msra.mxu0 0
    %1924 = vmatprep.subr.bf16.mxu0 0
    %1925 = vmatpush1.bf16.msra.mxu0 0
    %1926 = vmatprep.subr.bf16.mxu0 0
    %1927 = vmatpush1.bf16.msra.mxu0 0
    %1928 = vmatprep.subr.bf16.mxu0 0
    %1929 = vmatpush1.bf16.msra.mxu0 0
    %1930 = vmatprep.subr.bf16.mxu0 0
    %1931 = vmatpush1.bf16.msra.mxu0 0
    %1932 = vmatprep.subr.bf16.mxu0 0
    %1933 = vmatpush1.bf16.msra.mxu0 0
    %1934 = vmatprep.subr.bf16.mxu0 0
    %1935 = vmatpush1.bf16.msra.mxu0 0
    %1936 = vmatprep.mubr.bf16.mxu0 0
    %1937 = vmatmul.mubr.bf16.gmra.mrb[0].mxu0 %v1646
    %v1938 = vpop.f32.mrb[0].mxu0
    %v1939 = vadd.f32 %v1692, %v1938
    %v1940 = vpop.f32.mrb[0].mxu0
    %v1941 = vadd.f32 %v1696, %v1940
    %v1942 = vpop.f32.mrb[0].mxu0
    %v1943 = vadd.f32 %v1692, %v1942
    %v1944 = vpop.f32.mrb[0].mxu0
    %v1945 = vadd.f32 %v1696, %v1944
    %1946 = vdwg.mxu0
    %v1947 = vmul.f32 %v1896, 0.5
    %v1948 = vmul.f32 %v1898, 0.5
    %v1949 = vmul.f32 %v1939, 0.5
    %v1950 = vmul.f32 %v1941, 0.5
    %v1951 = vmul.f32 %v1900, 0.5
    %v1952 = vmul.f32 %v1902, 0.5
    %v1953 = vmul.f32 %v1943, 0.5
    %v1954 = vmul.f32 %v1945, 0.5
    %v1955 = vmul.f32 %v1896, 0.70710677
    %v1956 = vmul.f32 %v1898, 0.70710677
    %v1957 = vmul.f32 %v1939, 0.70710677
    %v1958 = vmul.f32 %v1941, 0.70710677
    %v1959 = vmul.f32 %v1900, 0.70710677
    %v1960 = vmul.f32 %v1902, 0.70710677
    %v1961 = vmul.f32 %v1943, 0.70710677
    %v1962 = vmul.f32 %v1945, 0.70710677
    %v1963 = verf.f32.pop %v1955
    %v1964 = verf.f32.pop %v1956
    %v1965 = verf.f32.pop %v1957
    %v1966 = verf.f32.pop %v1958
    %v1967 = verf.f32.pop %v1959
    %v1968 = verf.f32.pop %v1960
    %v1969 = verf.f32.pop %v1961
    %v1970 = verf.f32.pop %v1962
    %v1971 = vadd.f32 %v1963, 1.0
    %v1972 = vadd.f32 %v1964, 1.0
    %v1973 = vadd.f32 %v1965, 1.0
    %v1974 = vadd.f32 %v1966, 1.0
    %v1975 = vadd.f32 %v1967, 1.0
    %v1976 = vadd.f32 %v1968, 1.0
    %v1977 = vadd.f32 %v1969, 1.0
    %v1978 = vadd.f32 %v1970, 1.0
    %v1979 = vmul.f32 %v1947, %v1971
    %v1980 = vmul.f32 %v1948, %v1972
    %v1981 = vmul.f32 %v1949, %v1973
    %v1982 = vmul.f32 %v1950, %v1974
    %v1983 = vmul.f32 %v1951, %v1975
    %v1984 = vmul.f32 %v1952, %v1976
    %v1985 = vmul.f32 %v1953, %v1977
    %v1986 = vmul.f32 %v1954, %v1978
    %v1987 = vpack.c.bf16 %v1983, %v1979
    %v1988 = vpack.c.bf16 %v1984, %v1980
    %v1989 = vpack.c.bf16 %v1985, %v1981
    %v1990 = vpack.c.bf16 %v1986, %v1982
    %v1991 = vld [vmem:[#allocation16] sm:$0xf]
    %v1992 = vld [vmem:[#allocation16 + $0x4] sm:$0xf]
    %v1993 = vld [vmem:[#allocation16 + $0x8] sm:$0xf]
    %v1994 = vld [vmem:[#allocation16 + $0xc] sm:$0xf]
    %v1995 = vld [vmem:[#allocation16 + $0x10] sm:$0xf]
    %v1996 = vld [vmem:[#allocation16 + $0x14] sm:$0xf]
    %v1997 = vld [vmem:[#allocation16 + $0x18] sm:$0xf]
    %v1998 = vld [vmem:[#allocation16 + $0x1c] sm:$0xf]
    %v1999 = vld [vmem:[#allocation16 + $0x20] sm:$0xf]
    %v2000 = vld [vmem:[#allocation16 + $0x24] sm:$0xf]
    %v2001 = vld [vmem:[#allocation16 + $0x28] sm:$0xf]
    %v2002 = vld [vmem:[#allocation16 + $0x2c] sm:$0xf]
    %v2003 = vld [vmem:[#allocation16 + $0x30] sm:$0xf]
    %v2004 = vld [vmem:[#allocation16 + $0x34] sm:$0xf]
    %v2005 = vld [vmem:[#allocation16 + $0x38] sm:$0xf]
    %v2006 = vld [vmem:[#allocation16 + $0x3c] sm:$0xf]
    %v2007 = vld [vmem:[#allocation16 + $0x40] sm:$0xf]
    %v2008 = vld [vmem:[#allocation16 + $0x44] sm:$0xf]
    %v2009 = vld [vmem:[#allocation16 + $0x48] sm:$0xf]
    %v2010 = vld [vmem:[#allocation16 + $0x4c] sm:$0xf]
    %v2011 = vld [vmem:[#allocation16 + $0x50] sm:$0xf]
    %v2012 = vld [vmem:[#allocation16 + $0x54] sm:$0xf]
    %v2013 = vld [vmem:[#allocation16 + $0x58] sm:$0xf]
    %v2014 = vld [vmem:[#allocation16 + $0x5c] sm:$0xf]
    %v2015 = vld [vmem:[#allocation16 + $0x60] sm:$0xf]
    %v2016 = vld [vmem:[#allocation16 + $0x64] sm:$0xf]
    %v2017 = vld [vmem:[#allocation16 + $0x68] sm:$0xf]
    %v2018 = vld [vmem:[#allocation16 + $0x6c] sm:$0xf]
    %v2019 = vld [vmem:[#allocation16 + $0x70] sm:$0xf]
    %v2020 = vld [vmem:[#allocation16 + $0x74] sm:$0xf]
    %v2021 = vld [vmem:[#allocation16 + $0x78] sm:$0xf]
    %v2022 = vld [vmem:[#allocation16 + $0x7c] sm:$0xf]
    %v2023 = vld [vmem:[#allocation16 + $0x80] sm:$0xf]
    %v2024 = vld [vmem:[#allocation16 + $0x84] sm:$0xf]
    %v2025 = vld [vmem:[#allocation16 + $0x88] sm:$0xf]
    %v2026 = vld [vmem:[#allocation16 + $0x8c] sm:$0xf]
    %v2027 = vld [vmem:[#allocation16 + $0x90] sm:$0xf]
    %v2028 = vld [vmem:[#allocation16 + $0x94] sm:$0xf]
    %v2029 = vld [vmem:[#allocation16 + $0x98] sm:$0xf]
    %v2030 = vld [vmem:[#allocation16 + $0x9c] sm:$0xf]
    %v2031 = vld [vmem:[#allocation16 + $0xa0] sm:$0xf]
    %v2032 = vld [vmem:[#allocation16 + $0xa4] sm:$0xf]
    %v2033 = vld [vmem:[#allocation16 + $0xa8] sm:$0xf]
    %v2034 = vld [vmem:[#allocation16 + $0xac] sm:$0xf]
    %v2035 = vld [vmem:[#allocation16 + $0xb0] sm:$0xf]
    %v2036 = vld [vmem:[#allocation16 + $0xb4] sm:$0xf]
    %v2037 = vld [vmem:[#allocation16 + $0xb8] sm:$0xf]
    %v2038 = vld [vmem:[#allocation16 + $0xbc] sm:$0xf]
    %v2039 = vld [vmem:[#allocation16 + $0xc0] sm:$0xf]
    %v2040 = vld [vmem:[#allocation16 + $0xc4] sm:$0xf]
    %v2041 = vld [vmem:[#allocation16 + $0xc8] sm:$0xf]
    %v2042 = vld [vmem:[#allocation16 + $0xcc] sm:$0xf]
    %v2043 = vld [vmem:[#allocation16 + $0xd0] sm:$0xf]
    %v2044 = vld [vmem:[#allocation16 + $0xd4] sm:$0xf]
    %v2045 = vld [vmem:[#allocation16 + $0xd8] sm:$0xf]
    %v2046 = vld [vmem:[#allocation16 + $0xdc] sm:$0xf]
    %v2047 = vld [vmem:[#allocation16 + $0xe0] sm:$0xf]
    %v2048 = vld [vmem:[#allocation16 + $0xe4] sm:$0xf]
    %v2049 = vld [vmem:[#allocation16 + $0xe8] sm:$0xf]
    %v2050 = vld [vmem:[#allocation16 + $0xec] sm:$0xf]
    %v2051 = vld [vmem:[#allocation16 + $0xf0] sm:$0xf]
    %v2052 = vld [vmem:[#allocation16 + $0xf4] sm:$0xf]
    %v2053 = vld [vmem:[#allocation16 + $0xf8] sm:$0xf]
    %v2054 = vld [vmem:[#allocation16 + $0xfc] sm:$0xf]
    %v2055 = vld [vmem:[%s14] sm:$0x1]
    %v2057 = vlaneseq
    %v2058 = vshrl.u32 %v2057, 7
    %v2059 = vsub.s32 0, %v2058
    %v2060 = vrot.slane %v2055, %v2059
    %v2126 = vunpack.c.l.b16 %v1991
    %v2127 = vunpack.c.l.b16 %v1992
    %v2128 = vunpack.c.l.b16 %v1993
    %v2129 = vunpack.c.l.b16 %v1994
    %v2130 = vunpack.c.l.b16 %v1995
    %v2131 = vunpack.c.l.b16 %v1996
    %v2132 = vunpack.c.l.b16 %v1997
    %v2133 = vunpack.c.l.b16 %v1998
    %v2134 = vunpack.c.l.b16 %v1999
    %v2135 = vunpack.c.l.b16 %v2000
    %v2136 = vunpack.c.l.b16 %v2001
    %v2137 = vunpack.c.l.b16 %v2002
    %v2138 = vunpack.c.l.b16 %v2003
    %v2139 = vunpack.c.l.b16 %v2004
    %v2140 = vunpack.c.l.b16 %v2005
    %v2141 = vunpack.c.l.b16 %v2006
    %v2142 = vunpack.c.l.b16 %v2007
    %v2143 = vunpack.c.l.b16 %v2008
    %v2144 = vunpack.c.l.b16 %v2009
    %v2145 = vunpack.c.l.b16 %v2010
    %v2146 = vunpack.c.l.b16 %v2011
    %v2147 = vunpack.c.l.b16 %v2012
    %v2148 = vunpack.c.l.b16 %v2013
    %v2149 = vunpack.c.l.b16 %v2014
    %v2150 = vunpack.c.l.b16 %v2015
    %v2151 = vunpack.c.l.b16 %v2016
    %v2152 = vunpack.c.l.b16 %v2017
    %v2153 = vunpack.c.l.b16 %v2018
    %v2154 = vunpack.c.l.b16 %v2019
    %v2155 = vunpack.c.l.b16 %v2020
    %v2156 = vunpack.c.l.b16 %v2021
    %v2157 = vunpack.c.l.b16 %v2022
    %v2158 = vunpack.c.l.b16 %v2023
    %v2159 = vunpack.c.l.b16 %v2024
    %v2160 = vunpack.c.l.b16 %v2025
    %v2161 = vunpack.c.l.b16 %v2026
    %v2162 = vunpack.c.l.b16 %v2027
    %v2163 = vunpack.c.l.b16 %v2028
    %v2164 = vunpack.c.l.b16 %v2029
    %v2165 = vunpack.c.l.b16 %v2030
    %v2166 = vunpack.c.l.b16 %v2031
    %v2167 = vunpack.c.l.b16 %v2032
    %v2168 = vunpack.c.l.b16 %v2033
    %v2169 = vunpack.c.l.b16 %v2034
    %v2170 = vunpack.c.l.b16 %v2035
    %v2171 = vunpack.c.l.b16 %v2036
    %v2172 = vunpack.c.l.b16 %v2037
    %v2173 = vunpack.c.l.b16 %v2038
    %v2174 = vunpack.c.l.b16 %v2039
    %v2175 = vunpack.c.l.b16 %v2040
    %v2176 = vunpack.c.l.b16 %v2041
    %v2177 = vunpack.c.l.b16 %v2042
    %v2178 = vunpack.c.l.b16 %v2043
    %v2179 = vunpack.c.l.b16 %v2044
    %v2180 = vunpack.c.l.b16 %v2045
    %v2181 = vunpack.c.l.b16 %v2046
    %v2182 = vunpack.c.l.b16 %v2047
    %v2183 = vunpack.c.l.b16 %v2048
    %v2184 = vunpack.c.l.b16 %v2049
    %v2185 = vunpack.c.l.b16 %v2050
    %v2186 = vunpack.c.l.b16 %v2051
    %v2187 = vunpack.c.l.b16 %v2052
    %v2188 = vunpack.c.l.b16 %v2053
    %v2189 = vunpack.c.l.b16 %v2054
    %v2190 = vpack.c.b16 %v2127, %v2126
    %v2191 = vpack.c.b16 %v2129, %v2128
    %v2192 = vpack.c.b16 %v2131, %v2130
    %v2193 = vpack.c.b16 %v2133, %v2132
    %v2194 = vpack.c.b16 %v2135, %v2134
    %v2195 = vpack.c.b16 %v2137, %v2136
    %v2196 = vpack.c.b16 %v2139, %v2138
    %v2197 = vpack.c.b16 %v2141, %v2140
    %v2198 = vpack.c.b16 %v2143, %v2142
    %v2199 = vpack.c.b16 %v2145, %v2144
    %v2200 = vpack.c.b16 %v2147, %v2146
    %v2201 = vpack.c.b16 %v2149, %v2148
    %v2202 = vpack.c.b16 %v2151, %v2150
    %v2203 = vpack.c.b16 %v2153, %v2152
    %v2204 = vpack.c.b16 %v2155, %v2154
    %v2205 = vpack.c.b16 %v2157, %v2156
    %v2206 = vpack.c.b16 %v2159, %v2158
    %v2207 = vpack.c.b16 %v2161, %v2160
    %v2208 = vpack.c.b16 %v2163, %v2162
    %v2209 = vpack.c.b16 %v2165, %v2164
    %v2210 = vpack.c.b16 %v2167, %v2166
    %v2211 = vpack.c.b16 %v2169, %v2168
    %v2212 = vpack.c.b16 %v2171, %v2170
    %v2213 = vpack.c.b16 %v2173, %v2172
    %v2214 = vpack.c.b16 %v2175, %v2174
    %v2215 = vpack.c.b16 %v2177, %v2176
    %v2216 = vpack.c.b16 %v2179, %v2178
    %v2217 = vpack.c.b16 %v2181, %v2180
    %v2218 = vpack.c.b16 %v2183, %v2182
    %v2219 = vpack.c.b16 %v2185, %v2184
    %v2220 = vpack.c.b16 %v2187, %v2186
    %v2221 = vpack.c.b16 %v2189, %v2188
    %2254 = vmatprep.subr.bf16.mxu0 0
    %2255 = vmatpush1.bf16.msra.mxu0 %v2190
    %2256 = vmatprep.subr.bf16.mxu0 0
    %2257 = vmatpush1.bf16.msra.mxu0 %v2191
    %2258 = vmatprep.subr.bf16.mxu0 0
    %2259 = vmatpush1.bf16.msra.mxu0 %v2192
    %2260 = vmatprep.subr.bf16.mxu0 0
    %2261 = vmatpush1.bf16.msra.mxu0 %v2193
    %2262 = vmatprep.subr.bf16.mxu0 0
    %2263 = vmatpush1.bf16.msra.mxu0 %v2194
    %2264 = vmatprep.subr.bf16.mxu0 0
    %2265 = vmatpush1.bf16.msra.mxu0 %v2195
    %2266 = vmatprep.subr.bf16.mxu0 0
    %2267 = vmatpush1.bf16.msra.mxu0 %v2196
    %2268 = vmatprep.subr.bf16.mxu0 0
    %2269 = vmatpush1.bf16.msra.mxu0 %v2197
    %2270 = vmatprep.subr.bf16.mxu0 0
    %2271 = vmatpush1.bf16.msra.mxu0 %v2198
    %2272 = vmatprep.subr.bf16.mxu0 0
    %2273 = vmatpush1.bf16.msra.mxu0 %v2199
    %2274 = vmatprep.subr.bf16.mxu0 0
    %2275 = vmatpush1.bf16.msra.mxu0 %v2200
    %2276 = vmatprep.subr.bf16.mxu0 0
    %2277 = vmatpush1.bf16.msra.mxu0 %v2201
    %2278 = vmatprep.subr.bf16.mxu0 0
    %2279 = vmatpush1.bf16.msra.mxu0 %v2202
    %2280 = vmatprep.subr.bf16.mxu0 0
    %2281 = vmatpush1.bf16.msra.mxu0 %v2203
    %2282 = vmatprep.subr.bf16.mxu0 0
    %2283 = vmatpush1.bf16.msra.mxu0 %v2204
    %2284 = vmatprep.subr.bf16.mxu0 0
    %2285 = vmatpush1.bf16.msra.mxu0 %v2205
    %2286 = vmatprep.mubr.bf16.mxu0 %v1988
    %2287 = vmatmul.mubr.bf16.gmra.mrb[0].mxu0 %v1987
    %v2288 = vpop.f32.mrb[0].mxu0
    %v2289 = vadd.f32 %v2060, %v2288
    %v2290 = vpop.f32.mrb[0].mxu0
    %v2291 = vpop.f32.mrb[0].mxu0
    %v2292 = vadd.f32 %v2060, %v2291
    %v2293 = vpop.f32.mrb[0].mxu0
    %2294 = vdwg.mxu0
    %2295 = vmatprep.subr.bf16.mxu0 0
    %2296 = vmatpush1.bf16.msra.mxu0 %v2206
    %2297 = vmatprep.subr.bf16.mxu0 0
    %2298 = vmatpush1.bf16.msra.mxu0 %v2207
    %2299 = vmatprep.subr.bf16.mxu0 0
    %2300 = vmatpush1.bf16.msra.mxu0 %v2208
    %2301 = vmatprep.subr.bf16.mxu0 0
    %2302 = vmatpush1.bf16.msra.mxu0 %v2209
    %2303 = vmatprep.subr.bf16.mxu0 0
    %2304 = vmatpush1.bf16.msra.mxu0 %v2210
    %2305 = vmatprep.subr.bf16.mxu0 0
    %2306 = vmatpush1.bf16.msra.mxu0 %v2211
    %2307 = vmatprep.subr.bf16.mxu0 0
    %2308 = vmatpush1.bf16.msra.mxu0 %v2212
    %2309 = vmatprep.subr.bf16.mxu0 0
    %2310 = vmatpush1.bf16.msra.mxu0 %v2213
    %2311 = vmatprep.subr.bf16.mxu0 0
    %2312 = vmatpush1.bf16.msra.mxu0 %v2214
    %2313 = vmatprep.subr.bf16.mxu0 0
    %2314 = vmatpush1.bf16.msra.mxu0 %v2215
    %2315 = vmatprep.subr.bf16.mxu0 0
    %2316 = vmatpush1.bf16.msra.mxu0 %v2216
    %2317 = vmatprep.subr.bf16.mxu0 0
    %2318 = vmatpush1.bf16.msra.mxu0 %v2217
    %2319 = vmatprep.subr.bf16.mxu0 0
    %2320 = vmatpush1.bf16.msra.mxu0 %v2218
    %2321 = vmatprep.subr.bf16.mxu0 0
    %2322 = vmatpush1.bf16.msra.mxu0 %v2219
    %2323 = vmatprep.subr.bf16.mxu0 0
    %2324 = vmatpush1.bf16.msra.mxu0 %v2220
    %2325 = vmatprep.subr.bf16.mxu0 0
    %2326 = vmatpush1.bf16.msra.mxu0 %v2221
    %2327 = vmatprep.mubr.bf16.mxu0 %v1990
    %2328 = vmatmul.mubr.bf16.gmra.mrb[0].mxu0 %v1989
    %v2329 = vpop.f32.mrb[0].mxu0
    %v2330 = vadd.f32 %v2289, %v2329
    %v2331 = vpop.f32.mrb[0].mxu0
    %v2332 = vpop.f32.mrb[0].mxu0
    %v2333 = vadd.f32 %v2292, %v2332
    %v2334 = vpop.f32.mrb[0].mxu0
    %2335 = vdwg.mxu0
    %v2336 = vadd.f32 %v1604, %v2330
    %v2337 = vadd.f32 %v1605, %v2333
    %s2338 = scalar_lea.vmem [#allocation8], 1
    %v2339 = vld [vmem:[%s2338] sm:$0x1]
    %s2340 = scalar_lea.vmem [#allocation10], 1
    %v2341 = vld [vmem:[%s2340] sm:$0x1]
    %2342 = vadd.xlane.f32.xlu0 %v2336
    %v2343 = vpop.xlane.xlu0 %2342
    %2344 = vadd.xlane.f32.xlu0 %v2337
    %v2345 = vpop.xlane.xlu0 %2344
    %v2346 = vmul.f32 %v2343, %v243
    %v2347 = vmul.f32 %v2345, %v243
    %v2348 = vsub.f32 %v2336, %v2346
    %v2349 = vsub.f32 %v2337, %v2347
    %v2350 = vmul.f32 %v2348, %v2348
    %v2351 = vmul.f32 %v2349, %v2349
    %2352 = vadd.xlane.f32.xlu0 %v2350
    %v2353 = vpop.xlane.xlu0 %2352
    %2354 = vadd.xlane.f32.xlu0 %v2351
    %v2355 = vpop.xlane.xlu0 %2354
    %v2356 = vmul.f32 %v2353, %v243
    %v2357 = vmul.f32 %v2355, %v243
    %v2358 = vadd.f32 %v2356, 1e-05
    %v2359 = vadd.f32 %v2357, 1e-05
    %v2360 = vrsqrt.pop %v2358
    %v2361 = vrsqrt.pop %v2359
    %v2362 = vmul.f32 %v2348, %v2360
    %v2363 = vmul.f32 %v2349, %v2361
    %v2365 = vlaneseq
    %v2366 = vshrl.u32 %v2365, 7
    %v2367 = vsub.s32 0, %v2366
    %v2368 = vrot.slane %v2339, %v2367
    %v2370 = vmul.f32 %v2362, %v2368
    %v2371 = vmul.f32 %v2363, %v2368
    %v2373 = vlaneseq
    %v2374 = vshrl.u32 %v2373, 7
    %v2375 = vsub.s32 0, %v2374
    %v2376 = vrot.slane %v2341, %v2375
    %v2378 = vadd.f32 %v2370, %v2376
    %v2379 = vadd.f32 %v2371, %v2376
    %v2380 = vpack.c.bf16 %v2379, %v2378
    %s2381 = scalar_lea.vmem [#allocation11], 192
    %v2382 = vld [vmem:[%s2381] sm:$0xff]
    %v2383 = vld [vmem:[%s2381 + $0x8] sm:$0xf]
    %v2384 = vld [vmem:[%s2381 + $0xc] sm:$0xff]
    %v2385 = vld [vmem:[%s2381 + $0x14] sm:$0xf]
    %v2386 = vld [vmem:[%s2381 + $0x18] sm:$0xff]
    %v2387 = vld [vmem:[%s2381 + $0x20] sm:$0xf]
    %v2388 = vld [vmem:[%s2381 + $0x24] sm:$0xff]
    %v2389 = vld [vmem:[%s2381 + $0x2c] sm:$0xf]
    %v2390 = vld [vmem:[%s2381 + $0x30] sm:$0xff]
    %v2391 = vld [vmem:[%s2381 + $0x38] sm:$0xf]
    %v2392 = vld [vmem:[%s2381 + $0x3c] sm:$0xff]
    %v2393 = vld [vmem:[%s2381 + $0x44] sm:$0xf]
    %v2394 = vld [vmem:[%s2381 + $0x48] sm:$0xff]
    %v2395 = vld [vmem:[%s2381 + $0x50] sm:$0xf]
    %v2396 = vld [vmem:[%s2381 + $0x54] sm:$0xff]
    %v2397 = vld [vmem:[%s2381 + $0x5c] sm:$0xf]
    %v2398 = vld [vmem:[%s2381 + $0x60] sm:$0xff]
    %v2399 = vld [vmem:[%s2381 + $0x68] sm:$0xf]
    %v2400 = vld [vmem:[%s2381 + $0x6c] sm:$0xff]
    %v2401 = vld [vmem:[%s2381 + $0x74] sm:$0xf]
    %v2402 = vld [vmem:[%s2381 + $0x78] sm:$0xff]
    %v2403 = vld [vmem:[%s2381 + $0x80] sm:$0xf]
    %v2404 = vld [vmem:[%s2381 + $0x84] sm:$0xff]
    %v2405 = vld [vmem:[%s2381 + $0x8c] sm:$0xf]
    %v2406 = vld [vmem:[%s2381 + $0x90] sm:$0xff]
    %v2407 = vld [vmem:[%s2381 + $0x98] sm:$0xf]
    %v2408 = vld [vmem:[%s2381 + $0x9c] sm:$0xff]
    %v2409 = vld [vmem:[%s2381 + $0xa4] sm:$0xf]
    %v2410 = vld [vmem:[%s2381 + $0xa8] sm:$0xff]
    %v2411 = vld [vmem:[%s2381 + $0xb0] sm:$0xf]
    %v2412 = vld [vmem:[%s2381 + $0xb4] sm:$0xff]
    %v2413 = vld [vmem:[%s2381 + $0xbc] sm:$0xf]
    %s2414 = scalar_lea.vmem %s6, 3
    %v2415 = vld [vmem:[%s2414] sm:$0x7]
    %v2417 = vlaneseq
    %v2418 = vshrl.u32 %v2417, 7
    %v2419 = vsub.s32 0, %v2418
    %v2420 = vrot.slane %v2415, %v2419
    %v2421 = vlaneseq
    %v2422 = vshrl.u32 %v2421, 7
    %v2423 = vsub.s32 1, %v2422
    %v2424 = vrot.slane %v2415, %v2423
    %v2425 = vlaneseq
    %v2426 = vshrl.u32 %v2425, 7
    %v2427 = vsub.s32 2, %v2426
    %v2428 = vrot.slane %v2415, %v2427
    %v2464 = vunpack.c.l.b16 %v2382
    %v2465 = vunpack.c.h.b16 %v2382
    %v2466 = vunpack.c.l.b16 %v2383
    %v2467 = vunpack.c.l.b16 %v2384
    %v2468 = vunpack.c.h.b16 %v2384
    %v2469 = vunpack.c.l.b16 %v2385
    %v2470 = vunpack.c.l.b16 %v2386
    %v2471 = vunpack.c.h.b16 %v2386
    %v2472 = vunpack.c.l.b16 %v2387
    %v2473 = vunpack.c.l.b16 %v2388
    %v2474 = vunpack.c.h.b16 %v2388
    %v2475 = vunpack.c.l.b16 %v2389
    %v2476 = vunpack.c.l.b16 %v2390
    %v2477 = vunpack.c.h.b16 %v2390
    %v2478 = vunpack.c.l.b16 %v2391
    %v2479 = vunpack.c.l.b16 %v2392
    %v2480 = vunpack.c.h.b16 %v2392
    %v2481 = vunpack.c.l.b16 %v2393
    %v2482 = vunpack.c.l.b16 %v2394
    %v2483 = vunpack.c.h.b16 %v2394
    %v2484 = vunpack.c.l.b16 %v2395
    %v2485 = vunpack.c.l.b16 %v2396
    %v2486 = vunpack.c.h.b16 %v2396
    %v2487 = vunpack.c.l.b16 %v2397
    %v2488 = vunpack.c.l.b16 %v2398
    %v2489 = vunpack.c.h.b16 %v2398
    %v2490 = vunpack.c.l.b16 %v2399
    %v2491 = vunpack.c.l.b16 %v2400
    %v2492 = vunpack.c.h.b16 %v2400
    %v2493 = vunpack.c.l.b16 %v2401
    %v2494 = vunpack.c.l.b16 %v2402
    %v2495 = vunpack.c.h.b16 %v2402
    %v2496 = vunpack.c.l.b16 %v2403
    %v2497 = vunpack.c.l.b16 %v2404
    %v2498 = vunpack.c.h.b16 %v2404
    %v2499 = vunpack.c.l.b16 %v2405
    %v2500 = vunpack.c.l.b16 %v2406
    %v2501 = vunpack.c.h.b16 %v2406
    %v2502 = vunpack.c.l.b16 %v2407
    %v2503 = vunpack.c.l.b16 %v2408
    %v2504 = vunpack.c.h.b16 %v2408
    %v2505 = vunpack.c.l.b16 %v2409
    %v2506 = vunpack.c.l.b16 %v2410
    %v2507 = vunpack.c.h.b16 %v2410
    %v2508 = vunpack.c.l.b16 %v2411
    %v2509 = vunpack.c.l.b16 %v2412
    %v2510 = vunpack.c.h.b16 %v2412
    %v2511 = vunpack.c.l.b16 %v2413
    %v2512 = vpack.c.b16 %v2467, %v2464
    %v2513 = vpack.c.b16 %v2468, %v2465
    %v2514 = vpack.c.b16 %v2469, %v2466
    %v2515 = vpack.c.b16 %v2473, %v2470
    %v2516 = vpack.c.b16 %v2474, %v2471
    %v2517 = vpack.c.b16 %v2475, %v2472
    %v2518 = vpack.c.b16 %v2479, %v2476
    %v2519 = vpack.c.b16 %v2480, %v2477
    %v2520 = vpack.c.b16 %v2481, %v2478
    %v2521 = vpack.c.b16 %v2485, %v2482
    %v2522 = vpack.c.b16 %v2486, %v2483
    %v2523 = vpack.c.b16 %v2487, %v2484
    %v2524 = vpack.c.b16 %v2491, %v2488
    %v2525 = vpack.c.b16 %v2492, %v2489
    %v2526 = vpack.c.b16 %v2493, %v2490
    %v2527 = vpack.c.b16 %v2497, %v2494
    %v2528 = vpack.c.b16 %v2498, %v2495
    %v2529 = vpack.c.b16 %v2499, %v2496
    %v2530 = vpack.c.b16 %v2503, %v2500
    %v2531 = vpack.c.b16 %v2504, %v2501
    %v2532 = vpack.c.b16 %v2505, %v2502
    %v2533 = vpack.c.b16 %v2509, %v2506
    %v2534 = vpack.c.b16 %v2510, %v2507
    %v2535 = vpack.c.b16 %v2511, %v2508
    %2560 = vmatprep.subr.bf16.mxu0 %v2513
    %2561 = vmatpush1.bf16.msra.mxu0 %v2512
    %2562 = vmatprep.subr.bf16.mxu0 %v2516
    %2563 = vmatpush1.bf16.msra.mxu0 %v2515
    %2564 = vmatprep.subr.bf16.mxu0 %v2519
    %2565 = vmatpush1.bf16.msra.mxu0 %v2518
    %2566 = vmatprep.subr.bf16.mxu0 %v2522
    %2567 = vmatpush1.bf16.msra.mxu0 %v2521
    %2568 = vmatprep.subr.bf16.mxu0 %v2525
    %2569 = vmatpush1.bf16.msra.mxu0 %v2524
    %2570 = vmatprep.subr.bf16.mxu0 %v2528
    %2571 = vmatpush1.bf16.msra.mxu0 %v2527
    %2572 = vmatprep.subr.bf16.mxu0 %v2531
    %2573 = vmatpush1.bf16.msra.mxu0 %v2530
    %2574 = vmatprep.subr.bf16.mxu0 %v2534
    %2575 = vmatpush1.bf16.msra.mxu0 %v2533
    %2576 = vmatprep.subr.bf16.mxu0 0
    %2577 = vmatpush1.bf16.msra.mxu0 0
    %2578 = vmatprep.subr.bf16.mxu0 0
    %2579 = vmatpush1.bf16.msra.mxu0 0
    %2580 = vmatprep.subr.bf16.mxu0 0
    %2581 = vmatpush1.bf16.msra.mxu0 0
    %2582 = vmatprep.subr.bf16.mxu0 0
    %2583 = vmatpush1.bf16.msra.mxu0 0
    %2584 = vmatprep.subr.bf16.mxu0 0
    %2585 = vmatpush1.bf16.msra.mxu0 0
    %2586 = vmatprep.subr.bf16.mxu0 0
    %2587 = vmatpush1.bf16.msra.mxu0 0
    %2588 = vmatprep.subr.bf16.mxu0 0
    %2589 = vmatpush1.bf16.msra.mxu0 0
    %2590 = vmatprep.subr.bf16.mxu0 0
    %2591 = vmatpush1.bf16.msra.mxu0 0
    %2592 = vmatprep.mubr.bf16.mxu0 0
    %2593 = vmatmul.mubr.bf16.gmra.mrb[0].mxu0 %v2380
    %v2594 = vpop.f32.mrb[0].mxu0
    %v2595 = vadd.f32 %v2420, %v2594
    %v2596 = vpop.f32.mrb[0].mxu0
    %v2597 = vadd.f32 %v2424, %v2596
    %v2598 = vpop.f32.mrb[0].mxu0
    %v2599 = vadd.f32 %v2420, %v2598
    %v2600 = vpop.f32.mrb[0].mxu0
    %v2601 = vadd.f32 %v2424, %v2600
    %2602 = vdwg.mxu0
    %2603 = vmatprep.subr.bf16.mxu0 0
    %2604 = vmatpush1.bf16.msra.mxu0 %v2514
    %2605 = vmatprep.subr.bf16.mxu0 0
    %2606 = vmatpush1.bf16.msra.mxu0 %v2517
    %2607 = vmatprep.subr.bf16.mxu0 0
    %2608 = vmatpush1.bf16.msra.mxu0 %v2520
    %2609 = vmatprep.subr.bf16.mxu0 0
    %2610 = vmatpush1.bf16.msra.mxu0 %v2523
    %2611 = vmatprep.subr.bf16.mxu0 0
    %2612 = vmatpush1.bf16.msra.mxu0 %v2526
    %2613 = vmatprep.subr.bf16.mxu0 0
    %2614 = vmatpush1.bf16.msra.mxu0 %v2529
    %2615 = vmatprep.subr.bf16.mxu0 0
    %2616 = vmatpush1.bf16.msra.mxu0 %v2532
    %2617 = vmatprep.subr.bf16.mxu0 0
    %2618 = vmatpush1.bf16.msra.mxu0 %v2535
    %2619 = vmatprep.subr.bf16.mxu0 0
    %2620 = vmatpush1.bf16.msra.mxu0 0
    %2621 = vmatprep.subr.bf16.mxu0 0
    %2622 = vmatpush1.bf16.msra.mxu0 0
    %2623 = vmatprep.subr.bf16.mxu0 0
    %2624 = vmatpush1.bf16.msra.mxu0 0
    %2625 = vmatprep.subr.bf16.mxu0 0
    %2626 = vmatpush1.bf16.msra.mxu0 0
    %2627 = vmatprep.subr.bf16.mxu0 0
    %2628 = vmatpush1.bf16.msra.mxu0 0
    %2629 = vmatprep.subr.bf16.mxu0 0
    %2630 = vmatpush1.bf16.msra.mxu0 0
    %2631 = vmatprep.subr.bf16.mxu0 0
    %2632 = vmatpush1.bf16.msra.mxu0 0
    %2633 = vmatprep.subr.bf16.mxu0 0
    %2634 = vmatpush1.bf16.msra.mxu0 0
    %2635 = vmatprep.mubr.bf16.mxu0 0
    %2636 = vmatmul.mubr.bf16.gmra.mrb[0].mxu0 %v2380
    %v2637 = vpop.f32.mrb[0].mxu0
    %v2638 = vadd.f32 %v2428, %v2637
    %v2639 = vpop.f32.mrb[0].mxu0
    %v2640 = vpop.f32.mrb[0].mxu0
    %v2641 = vadd.f32 %v2428, %v2640
    %v2642 = vpop.f32.mrb[0].mxu0
    %2643 = vdwg.mxu0
    %2646 = vrot.lane.b32.xlu0 %v2595, 96
    %v2647 = vpop.permute.xlu0 %2646
    %2648 = vrot.lane.b32.xlu0 %v2599, 96
    %v2649 = vpop.permute.xlu0 %2648
    %2652 = vrot.lane.b32.xlu0 %v2595, 64
    %v2653 = vpop.permute.xlu0 %2652
    %2654 = vrot.lane.b32.xlu0 %v2599, 64
    %v2655 = vpop.permute.xlu0 %2654
    %2658 = vrot.lane.b32.xlu0 %v2595, 32
    %v2659 = vpop.permute.xlu0 %2658
    %2660 = vrot.lane.b32.xlu0 %v2599, 32
    %v2661 = vpop.permute.xlu0 %2660
    %v2664 = vpack.c.bf16 %v2595, %v2595
    %v2665 = vpack.c.bf16 %v2599, %v2599
    %v2666 = vpack.c.bf16 %v2647, %v2647
    %v2667 = vpack.c.bf16 %v2649, %v2649
    %v2668 = vpack.c.bf16 %v2653, %v2653
    %v2669 = vpack.c.bf16 %v2655, %v2655
    %v2670 = vpack.c.bf16 %v2659, %v2659
    %v2671 = vpack.c.bf16 %v2661, %v2661
    %2674 = vrot.lane.b32.xlu0 %v2597, 96
    %v2675 = vpop.permute.xlu0 %2674
    %2676 = vrot.lane.b32.xlu0 %v2601, 96
    %v2677 = vpop.permute.xlu0 %2676
    %2680 = vrot.lane.b32.xlu0 %v2597, 64
    %v2681 = vpop.permute.xlu0 %2680
    %2682 = vrot.lane.b32.xlu0 %v2601, 64
    %v2683 = vpop.permute.xlu0 %2682
    %2686 = vrot.lane.b32.xlu0 %v2597, 32
    %v2687 = vpop.permute.xlu0 %2686
    %2688 = vrot.lane.b32.xlu0 %v2601, 32
    %v2689 = vpop.permute.xlu0 %2688
    %v2692 = vpack.c.bf16 %v2597, %v2597
    %v2693 = vpack.c.bf16 %v2601, %v2601
    %v2694 = vpack.c.bf16 %v2675, %v2675
    %v2695 = vpack.c.bf16 %v2677, %v2677
    %v2696 = vpack.c.bf16 %v2681, %v2681
    %v2697 = vpack.c.bf16 %v2683, %v2683
    %v2698 = vpack.c.bf16 %v2687, %v2687
    %v2699 = vpack.c.bf16 %v2689, %v2689
    %2702 = vrot.lane.b32.xlu0 %v2638, 96
    %v2703 = vpop.permute.xlu0 %2702
    %2704 = vrot.lane.b32.xlu0 %v2641, 96
    %v2705 = vpop.permute.xlu0 %2704
    %2708 = vrot.lane.b32.xlu0 %v2638, 64
    %v2709 = vpop.permute.xlu0 %2708
    %2710 = vrot.lane.b32.xlu0 %v2641, 64
    %v2711 = vpop.permute.xlu0 %2710
    %2714 = vrot.lane.b32.xlu0 %v2638, 32
    %v2715 = vpop.permute.xlu0 %2714
    %2716 = vrot.lane.b32.xlu0 %v2641, 32
    %v2717 = vpop.permute.xlu0 %2716
    %v2720 = vpack.c.bf16 %v2638, %v2638
    %v2721 = vpack.c.bf16 %v2641, %v2641
    %v2722 = vpack.c.bf16 %v2703, %v2703
    %v2723 = vpack.c.bf16 %v2705, %v2705
    %v2724 = vpack.c.bf16 %v2709, %v2709
    %v2725 = vpack.c.bf16 %v2711, %v2711
    %v2726 = vpack.c.bf16 %v2715, %v2715
    %v2727 = vpack.c.bf16 %v2717, %v2717
    %v2729 = vsel %vm624, %v2664, 0
    %v2732 = vsel %vm624, %v2692, 0
    %2734 = vmatprep.subr.bf16.mxu0 0
    %2735 = vmatpush1.bf16.xpose.msra.mxu0 %v2732
    %2736 = vmatprep.subr.bf16.mxu0 0
    %2737 = vmatpush1.bf16.xpose.msra.mxu0 0
    %2738 = vmatprep.subr.bf16.mxu0 0
    %2739 = vmatpush1.bf16.xpose.msra.mxu0 0
    %2740 = vmatprep.subr.bf16.mxu0 0
    %2741 = vmatpush1.bf16.xpose.msra.mxu0 0
    %2742 = vmatprep.subr.bf16.mxu0 0
    %2743 = vmatpush1.bf16.xpose.msra.mxu0 0
    %2744 = vmatprep.subr.bf16.mxu0 0
    %2745 = vmatpush1.bf16.xpose.msra.mxu0 0
    %2746 = vmatprep.subr.bf16.mxu0 0
    %2747 = vmatpush1.bf16.xpose.msra.mxu0 0
    %2748 = vmatprep.subr.bf16.mxu0 0
    %2749 = vmatpush1.bf16.xpose.msra.mxu0 0
    %2750 = vmatprep.subr.bf16.mxu0 0
    %2751 = vmatpush1.bf16.xpose.msra.mxu0 0
    %2752 = vmatprep.subr.bf16.mxu0 0
    %2753 = vmatpush1.bf16.xpose.msra.mxu0 0
    %2754 = vmatprep.subr.bf16.mxu0 0
    %2755 = vmatpush1.bf16.xpose.msra.mxu0 0
    %2756 = vmatprep.subr.bf16.mxu0 0
    %2757 = vmatpush1.bf16.xpose.msra.mxu0 0
    %2758 = vmatprep.subr.bf16.mxu0 0
    %2759 = vmatpush1.bf16.xpose.msra.mxu0 0
    %2760 = vmatprep.subr.bf16.mxu0 0
    %2761 = vmatpush1.bf16.xpose.msra.mxu0 0
    %2762 = vmatprep.subr.bf16.mxu0 0
    %2763 = vmatpush1.bf16.xpose.msra.mxu0 0
    %2764 = vmatprep.subr.bf16.mxu0 0
    %2765 = vmatpush1.bf16.xpose.msra.mxu0 0
    %2766 = vmatprep.mubr.bf16.mxu0 0
    %2767 = vmatmul.mubr.bf16.gmra.mrb[0].mxu0 %v2729
    %v2768 = vpop.f32.mrb[0].mxu0
    %v2769 = vadd.f32 0.0, %v2768
    %v2770 = vpop.f32.mrb[0].mxu0
    %v2771 = vpop.f32.mrb[0].mxu0
    %v2772 = vpop.f32.mrb[0].mxu0
    %2773 = vdwg.mxu0
    %v2775 = vsel %vm624, %v2665, 0
    %v2778 = vsel %vm624, %v2693, 0
    %2780 = vmatprep.subr.bf16.mxu0 0
    %2781 = vmatpush1.bf16.xpose.msra.mxu0 %v2778
    %2782 = vmatprep.subr.bf16.mxu0 0
    %2783 = vmatpush1.bf16.xpose.msra.mxu0 0
    %2784 = vmatprep.subr.bf16.mxu0 0
    %2785 = vmatpush1.bf16.xpose.msra.mxu0 0
    %2786 = vmatprep.subr.bf16.mxu0 0
    %2787 = vmatpush1.bf16.xpose.msra.mxu0 0
    %2788 = vmatprep.subr.bf16.mxu0 0
    %2789 = vmatpush1.bf16.xpose.msra.mxu0 0
    %2790 = vmatprep.subr.bf16.mxu0 0
    %2791 = vmatpush1.bf16.xpose.msra.mxu0 0
    %2792 = vmatprep.subr.bf16.mxu0 0
    %2793 = vmatpush1.bf16.xpose.msra.mxu0 0
    %2794 = vmatprep.subr.bf16.mxu0 0
    %2795 = vmatpush1.bf16.xpose.msra.mxu0 0
    %2796 = vmatprep.subr.bf16.mxu0 0
    %2797 = vmatpush1.bf16.xpose.msra.mxu0 0
    %2798 = vmatprep.subr.bf16.mxu0 0
    %2799 = vmatpush1.bf16.xpose.msra.mxu0 0
    %2800 = vmatprep.subr.bf16.mxu0 0
    %2801 = vmatpush1.bf16.xpose.msra.mxu0 0
    %2802 = vmatprep.subr.bf16.mxu0 0
    %2803 = vmatpush1.bf16.xpose.msra.mxu0 0
    %2804 = vmatprep.subr.bf16.mxu0 0
    %2805 = vmatpush1.bf16.xpose.msra.mxu0 0
    %2806 = vmatprep.subr.bf16.mxu0 0
    %2807 = vmatpush1.bf16.xpose.msra.mxu0 0
    %2808 = vmatprep.subr.bf16.mxu0 0
    %2809 = vmatpush1.bf16.xpose.msra.mxu0 0
    %2810 = vmatprep.subr.bf16.mxu0 0
    %2811 = vmatpush1.bf16.xpose.msra.mxu0 0
    %2812 = vmatprep.mubr.bf16.mxu0 0
    %2813 = vmatmul.mubr.bf16.gmra.mrb[0].mxu0 %v2775
    %v2814 = vpop.f32.mrb[0].mxu0
    %v2815 = vadd.f32 0.0, %v2814
    %v2816 = vpop.f32.mrb[0].mxu0
    %v2817 = vpop.f32.mrb[0].mxu0
    %v2818 = vpop.f32.mrb[0].mxu0
    %2819 = vdwg.mxu0
    %v2821 = vsel %vm624, %v2666, 0
    %v2824 = vsel %vm624, %v2694, 0
    %2826 = vmatprep.subr.bf16.mxu0 0
    %2827 = vmatpush1.bf16.xpose.msra.mxu0 %v2824
    %2828 = vmatprep.subr.bf16.mxu0 0
    %2829 = vmatpush1.bf16.xpose.msra.mxu0 0
    %2830 = vmatprep.subr.bf16.mxu0 0
    %2831 = vmatpush1.bf16.xpose.msra.mxu0 0
    %2832 = vmatprep.subr.bf16.mxu0 0
    %2833 = vmatpush1.bf16.xpose.msra.mxu0 0
    %2834 = vmatprep.subr.bf16.mxu0 0
    %2835 = vmatpush1.bf16.xpose.msra.mxu0 0
    %2836 = vmatprep.subr.bf16.mxu0 0
    %2837 = vmatpush1.bf16.xpose.msra.mxu0 0
    %2838 = vmatprep.subr.bf16.mxu0 0
    %2839 = vmatpush1.bf16.xpose.msra.mxu0 0
    %2840 = vmatprep.subr.bf16.mxu0 0
    %2841 = vmatpush1.bf16.xpose.msra.mxu0 0
    %2842 = vmatprep.subr.bf16.mxu0 0
    %2843 = vmatpush1.bf16.xpose.msra.mxu0 0
    %2844 = vmatprep.subr.bf16.mxu0 0
    %2845 = vmatpush1.bf16.xpose.msra.mxu0 0
    %2846 = vmatprep.subr.bf16.mxu0 0
    %2847 = vmatpush1.bf16.xpose.msra.mxu0 0
    %2848 = vmatprep.subr.bf16.mxu0 0
    %2849 = vmatpush1.bf16.xpose.msra.mxu0 0
    %2850 = vmatprep.subr.bf16.mxu0 0
    %2851 = vmatpush1.bf16.xpose.msra.mxu0 0
    %2852 = vmatprep.subr.bf16.mxu0 0
    %2853 = vmatpush1.bf16.xpose.msra.mxu0 0
    %2854 = vmatprep.subr.bf16.mxu0 0
    %2855 = vmatpush1.bf16.xpose.msra.mxu0 0
    %2856 = vmatprep.subr.bf16.mxu0 0
    %2857 = vmatpush1.bf16.xpose.msra.mxu0 0
    %2858 = vmatprep.mubr.bf16.mxu0 0
    %2859 = vmatmul.mubr.bf16.gmra.mrb[0].mxu0 %v2821
    %v2860 = vpop.f32.mrb[0].mxu0
    %v2861 = vadd.f32 0.0, %v2860
    %v2862 = vpop.f32.mrb[0].mxu0
    %v2863 = vpop.f32.mrb[0].mxu0
    %v2864 = vpop.f32.mrb[0].mxu0
    %2865 = vdwg.mxu0
    %v2867 = vsel %vm624, %v2667, 0
    %v2870 = vsel %vm624, %v2695, 0
    %2872 = vmatprep.subr.bf16.mxu0 0
    %2873 = vmatpush1.bf16.xpose.msra.mxu0 %v2870
    %2874 = vmatprep.subr.bf16.mxu0 0
    %2875 = vmatpush1.bf16.xpose.msra.mxu0 0
    %2876 = vmatprep.subr.bf16.mxu0 0
    %2877 = vmatpush1.bf16.xpose.msra.mxu0 0
    %2878 = vmatprep.subr.bf16.mxu0 0
    %2879 = vmatpush1.bf16.xpose.msra.mxu0 0
    %2880 = vmatprep.subr.bf16.mxu0 0
    %2881 = vmatpush1.bf16.xpose.msra.mxu0 0
    %2882 = vmatprep.subr.bf16.mxu0 0
    %2883 = vmatpush1.bf16.xpose.msra.mxu0 0
    %2884 = vmatprep.subr.bf16.mxu0 0
    %2885 = vmatpush1.bf16.xpose.msra.mxu0 0
    %2886 = vmatprep.subr.bf16.mxu0 0
    %2887 = vmatpush1.bf16.xpose.msra.mxu0 0
    %2888 = vmatprep.subr.bf16.mxu0 0
    %2889 = vmatpush1.bf16.xpose.msra.mxu0 0
    %2890 = vmatprep.subr.bf16.mxu0 0
    %2891 = vmatpush1.bf16.xpose.msra.mxu0 0
    %2892 = vmatprep.subr.bf16.mxu0 0
    %2893 = vmatpush1.bf16.xpose.msra.mxu0 0
    %2894 = vmatprep.subr.bf16.mxu0 0
    %2895 = vmatpush1.bf16.xpose.msra.mxu0 0
    %2896 = vmatprep.subr.bf16.mxu0 0
    %2897 = vmatpush1.bf16.xpose.msra.mxu0 0
    %2898 = vmatprep.subr.bf16.mxu0 0
    %2899 = vmatpush1.bf16.xpose.msra.mxu0 0
    %2900 = vmatprep.subr.bf16.mxu0 0
    %2901 = vmatpush1.bf16.xpose.msra.mxu0 0
    %2902 = vmatprep.subr.bf16.mxu0 0
    %2903 = vmatpush1.bf16.xpose.msra.mxu0 0
    %2904 = vmatprep.mubr.bf16.mxu0 0
    %2905 = vmatmul.mubr.bf16.gmra.mrb[0].mxu0 %v2867
    %v2906 = vpop.f32.mrb[0].mxu0
    %v2907 = vadd.f32 0.0, %v2906
    %v2908 = vpop.f32.mrb[0].mxu0
    %v2909 = vpop.f32.mrb[0].mxu0
    %v2910 = vpop.f32.mrb[0].mxu0
    %2911 = vdwg.mxu0
    %v2913 = vsel %vm624, %v2668, 0
    %v2916 = vsel %vm624, %v2696, 0
    %2918 = vmatprep.subr.bf16.mxu0 0
    %2919 = vmatpush1.bf16.xpose.msra.mxu0 %v2916
    %2920 = vmatprep.subr.bf16.mxu0 0
    %2921 = vmatpush1.bf16.xpose.msra.mxu0 0
    %2922 = vmatprep.subr.bf16.mxu0 0
    %2923 = vmatpush1.bf16.xpose.msra.mxu0 0
    %2924 = vmatprep.subr.bf16.mxu0 0
    %2925 = vmatpush1.bf16.xpose.msra.mxu0 0
    %2926 = vmatprep.subr.bf16.mxu0 0
    %2927 = vmatpush1.bf16.xpose.msra.mxu0 0
    %2928 = vmatprep.subr.bf16.mxu0 0
    %2929 = vmatpush1.bf16.xpose.msra.mxu0 0
    %2930 = vmatprep.subr.bf16.mxu0 0
    %2931 = vmatpush1.bf16.xpose.msra.mxu0 0
    %2932 = vmatprep.subr.bf16.mxu0 0
    %2933 = vmatpush1.bf16.xpose.msra.mxu0 0
    %2934 = vmatprep.subr.bf16.mxu0 0
    %2935 = vmatpush1.bf16.xpose.msra.mxu0 0
    %2936 = vmatprep.subr.bf16.mxu0 0
    %2937 = vmatpush1.bf16.xpose.msra.mxu0 0
    %2938 = vmatprep.subr.bf16.mxu0 0
    %2939 = vmatpush1.bf16.xpose.msra.mxu0 0
    %2940 = vmatprep.subr.bf16.mxu0 0
    %2941 = vmatpush1.bf16.xpose.msra.mxu0 0
    %2942 = vmatprep.subr.bf16.mxu0 0
    %2943 = vmatpush1.bf16.xpose.msra.mxu0 0
    %2944 = vmatprep.subr.bf16.mxu0 0
    %2945 = vmatpush1.bf16.xpose.msra.mxu0 0
    %2946 = vmatprep.subr.bf16.mxu0 0
    %2947 = vmatpush1.bf16.xpose.msra.mxu0 0
    %2948 = vmatprep.subr.bf16.mxu0 0
    %2949 = vmatpush1.bf16.xpose.msra.mxu0 0
    %2950 = vmatprep.mubr.bf16.mxu0 0
    %2951 = vmatmul.mubr.bf16.gmra.mrb[0].mxu0 %v2913
    %v2952 = vpop.f32.mrb[0].mxu0
    %v2953 = vadd.f32 0.0, %v2952
    %v2954 = vpop.f32.mrb[0].mxu0
    %v2955 = vpop.f32.mrb[0].mxu0
    %v2956 = vpop.f32.mrb[0].mxu0
    %2957 = vdwg.mxu0
    %v2959 = vsel %vm624, %v2669, 0
    %v2962 = vsel %vm624, %v2697, 0
    %2964 = vmatprep.subr.bf16.mxu0 0
    %2965 = vmatpush1.bf16.xpose.msra.mxu0 %v2962
    %2966 = vmatprep.subr.bf16.mxu0 0
    %2967 = vmatpush1.bf16.xpose.msra.mxu0 0
    %2968 = vmatprep.subr.bf16.mxu0 0
    %2969 = vmatpush1.bf16.xpose.msra.mxu0 0
    %2970 = vmatprep.subr.bf16.mxu0 0
    %2971 = vmatpush1.bf16.xpose.msra.mxu0 0
    %2972 = vmatprep.subr.bf16.mxu0 0
    %2973 = vmatpush1.bf16.xpose.msra.mxu0 0
    %2974 = vmatprep.subr.bf16.mxu0 0
    %2975 = vmatpush1.bf16.xpose.msra.mxu0 0
    %2976 = vmatprep.subr.bf16.mxu0 0
    %2977 = vmatpush1.bf16.xpose.msra.mxu0 0
    %2978 = vmatprep.subr.bf16.mxu0 0
    %2979 = vmatpush1.bf16.xpose.msra.mxu0 0
    %2980 = vmatprep.subr.bf16.mxu0 0
    %2981 = vmatpush1.bf16.xpose.msra.mxu0 0
    %2982 = vmatprep.subr.bf16.mxu0 0
    %2983 = vmatpush1.bf16.xpose.msra.mxu0 0
    %2984 = vmatprep.subr.bf16.mxu0 0
    %2985 = vmatpush1.bf16.xpose.msra.mxu0 0
    %2986 = vmatprep.subr.bf16.mxu0 0
    %2987 = vmatpush1.bf16.xpose.msra.mxu0 0
    %2988 = vmatprep.subr.bf16.mxu0 0
    %2989 = vmatpush1.bf16.xpose.msra.mxu0 0
    %2990 = vmatprep.subr.bf16.mxu0 0
    %2991 = vmatpush1.bf16.xpose.msra.mxu0 0
    %2992 = vmatprep.subr.bf16.mxu0 0
    %2993 = vmatpush1.bf16.xpose.msra.mxu0 0
    %2994 = vmatprep.subr.bf16.mxu0 0
    %2995 = vmatpush1.bf16.xpose.msra.mxu0 0
    %2996 = vmatprep.mubr.bf16.mxu0 0
    %2997 = vmatmul.mubr.bf16.gmra.mrb[0].mxu0 %v2959
    %v2998 = vpop.f32.mrb[0].mxu0
    %v2999 = vadd.f32 0.0, %v2998
    %v3000 = vpop.f32.mrb[0].mxu0
    %v3001 = vpop.f32.mrb[0].mxu0
    %v3002 = vpop.f32.mrb[0].mxu0
    %3003 = vdwg.mxu0
    %v3005 = vsel %vm624, %v2670, 0
    %v3008 = vsel %vm624, %v2698, 0
    %3010 = vmatprep.subr.bf16.mxu0 0
    %3011 = vmatpush1.bf16.xpose.msra.mxu0 %v3008
    %3012 = vmatprep.subr.bf16.mxu0 0
    %3013 = vmatpush1.bf16.xpose.msra.mxu0 0
    %3014 = vmatprep.subr.bf16.mxu0 0
    %3015 = vmatpush1.bf16.xpose.msra.mxu0 0
    %3016 = vmatprep.subr.bf16.mxu0 0
    %3017 = vmatpush1.bf16.xpose.msra.mxu0 0
    %3018 = vmatprep.subr.bf16.mxu0 0
    %3019 = vmatpush1.bf16.xpose.msra.mxu0 0
    %3020 = vmatprep.subr.bf16.mxu0 0
    %3021 = vmatpush1.bf16.xpose.msra.mxu0 0
    %3022 = vmatprep.subr.bf16.mxu0 0
    %3023 = vmatpush1.bf16.xpose.msra.mxu0 0
    %3024 = vmatprep.subr.bf16.mxu0 0
    %3025 = vmatpush1.bf16.xpose.msra.mxu0 0
    %3026 = vmatprep.subr.bf16.mxu0 0
    %3027 = vmatpush1.bf16.xpose.msra.mxu0 0
    %3028 = vmatprep.subr.bf16.mxu0 0
    %3029 = vmatpush1.bf16.xpose.msra.mxu0 0
    %3030 = vmatprep.subr.bf16.mxu0 0
    %3031 = vmatpush1.bf16.xpose.msra.mxu0 0
    %3032 = vmatprep.subr.bf16.mxu0 0
    %3033 = vmatpush1.bf16.xpose.msra.mxu0 0
    %3034 = vmatprep.subr.bf16.mxu0 0
    %3035 = vmatpush1.bf16.xpose.msra.mxu0 0
    %3036 = vmatprep.subr.bf16.mxu0 0
    %3037 = vmatpush1.bf16.xpose.msra.mxu0 0
    %3038 = vmatprep.subr.bf16.mxu0 0
    %3039 = vmatpush1.bf16.xpose.msra.mxu0 0
    %3040 = vmatprep.subr.bf16.mxu0 0
    %3041 = vmatpush1.bf16.xpose.msra.mxu0 0
    %3042 = vmatprep.mubr.bf16.mxu0 0
    %3043 = vmatmul.mubr.bf16.gmra.mrb[0].mxu0 %v3005
    %v3044 = vpop.f32.mrb[0].mxu0
    %v3045 = vadd.f32 0.0, %v3044
    %v3046 = vpop.f32.mrb[0].mxu0
    %v3047 = vpop.f32.mrb[0].mxu0
    %v3048 = vpop.f32.mrb[0].mxu0
    %3049 = vdwg.mxu0
    %v3051 = vsel %vm624, %v2671, 0
    %v3054 = vsel %vm624, %v2699, 0
    %3056 = vmatprep.subr.bf16.mxu0 0
    %3057 = vmatpush1.bf16.xpose.msra.mxu0 %v3054
    %3058 = vmatprep.subr.bf16.mxu0 0
    %3059 = vmatpush1.bf16.xpose.msra.mxu0 0
    %3060 = vmatprep.subr.bf16.mxu0 0
    %3061 = vmatpush1.bf16.xpose.msra.mxu0 0
    %3062 = vmatprep.subr.bf16.mxu0 0
    %3063 = vmatpush1.bf16.xpose.msra.mxu0 0
    %3064 = vmatprep.subr.bf16.mxu0 0
    %3065 = vmatpush1.bf16.xpose.msra.mxu0 0
    %3066 = vmatprep.subr.bf16.mxu0 0
    %3067 = vmatpush1.bf16.xpose.msra.mxu0 0
    %3068 = vmatprep.subr.bf16.mxu0 0
    %3069 = vmatpush1.bf16.xpose.msra.mxu0 0
    %3070 = vmatprep.subr.bf16.mxu0 0
    %3071 = vmatpush1.bf16.xpose.msra.mxu0 0
    %3072 = vmatprep.subr.bf16.mxu0 0
    %3073 = vmatpush1.bf16.xpose.msra.mxu0 0
    %3074 = vmatprep.subr.bf16.mxu0 0
    %3075 = vmatpush1.bf16.xpose.msra.mxu0 0
    %3076 = vmatprep.subr.bf16.mxu0 0
    %3077 = vmatpush1.bf16.xpose.msra.mxu0 0
    %3078 = vmatprep.subr.bf16.mxu0 0
    %3079 = vmatpush1.bf16.xpose.msra.mxu0 0
    %3080 = vmatprep.subr.bf16.mxu0 0
    %3081 = vmatpush1.bf16.xpose.msra.mxu0 0
    %3082 = vmatprep.subr.bf16.mxu0 0
    %3083 = vmatpush1.bf16.xpose.msra.mxu0 0
    %3084 = vmatprep.subr.bf16.mxu0 0
    %3085 = vmatpush1.bf16.xpose.msra.mxu0 0
    %3086 = vmatprep.subr.bf16.mxu0 0
    %3087 = vmatpush1.bf16.xpose.msra.mxu0 0
    %3088 = vmatprep.mubr.bf16.mxu0 0
    %3089 = vmatmul.mubr.bf16.gmra.mrb[0].mxu0 %v3051
    %v3090 = vpop.f32.mrb[0].mxu0
    %v3091 = vadd.f32 0.0, %v3090
    %v3092 = vpop.f32.mrb[0].mxu0
    %v3093 = vpop.f32.mrb[0].mxu0
    %v3094 = vpop.f32.mrb[0].mxu0
    %3095 = vdwg.mxu0
    %v3096 = vsel %vm993, %v2769, -inf
    %3097 = vmax.xlane.f32.xlu0 %v3096
    %v3098 = vpop.xlane.xlu0 %3097
    %v3099 = vsel %vm993, %v2815, -inf
    %3100 = vmax.xlane.f32.xlu0 %v3099
    %v3101 = vpop.xlane.xlu0 %3100
    %v3102 = vsel %vm993, %v2861, -inf
    %3103 = vmax.xlane.f32.xlu0 %v3102
    %v3104 = vpop.xlane.xlu0 %3103
    %v3105 = vsel %vm993, %v2907, -inf
    %3106 = vmax.xlane.f32.xlu0 %v3105
    %v3107 = vpop.xlane.xlu0 %3106
    %v3108 = vsel %vm993, %v2953, -inf
    %3109 = vmax.xlane.f32.xlu0 %v3108
    %v3110 = vpop.xlane.xlu0 %3109
    %v3111 = vsel %vm993, %v2999, -inf
    %3112 = vmax.xlane.f32.xlu0 %v3111
    %v3113 = vpop.xlane.xlu0 %3112
    %v3114 = vsel %vm993, %v3045, -inf
    %3115 = vmax.xlane.f32.xlu0 %v3114
    %v3116 = vpop.xlane.xlu0 %3115
    %v3117 = vsel %vm993, %v3091, -inf
    %3118 = vmax.xlane.f32.xlu0 %v3117
    %v3119 = vpop.xlane.xlu0 %3118
    %v3120 = vsub.f32 %v2769, %v3098
    %v3121 = vsub.f32 %v2815, %v3101
    %v3122 = vsub.f32 %v2861, %v3104
    %v3123 = vsub.f32 %v2907, %v3107
    %v3124 = vsub.f32 %v2953, %v3110
    %v3125 = vsub.f32 %v2999, %v3113
    %v3126 = vsub.f32 %v3045, %v3116
    %v3127 = vsub.f32 %v3091, %v3119
    %v3128 = vmul.f32 %v3120, 1.442695
    %v3129 = vpow.pop %v3128
    %v3130 = vmul.f32 %v3121, 1.442695
    %v3131 = vpow.pop %v3130
    %v3132 = vmul.f32 %v3122, 1.442695
    %v3133 = vpow.pop %v3132
    %v3134 = vmul.f32 %v3123, 1.442695
    %v3135 = vpow.pop %v3134
    %v3136 = vmul.f32 %v3124, 1.442695
    %v3137 = vpow.pop %v3136
    %v3138 = vmul.f32 %v3125, 1.442695
    %v3139 = vpow.pop %v3138
    %v3140 = vmul.f32 %v3126, 1.442695
    %v3141 = vpow.pop %v3140
    %v3142 = vmul.f32 %v3127, 1.442695
    %v3143 = vpow.pop %v3142
    %v3144 = vsel %vm993, %v3129, 0.0
    %3145 = vadd.xlane.f32.xlu0 %v3144
    %v3146 = vpop.xlane.xlu0 %3145
    %v3147 = vsel %vm993, %v3131, 0.0
    %3148 = vadd.xlane.f32.xlu0 %v3147
    %v3149 = vpop.xlane.xlu0 %3148
    %v3150 = vsel %vm993, %v3133, 0.0
    %3151 = vadd.xlane.f32.xlu0 %v3150
    %v3152 = vpop.xlane.xlu0 %3151
    %v3153 = vsel %vm993, %v3135, 0.0
    %3154 = vadd.xlane.f32.xlu0 %v3153
    %v3155 = vpop.xlane.xlu0 %3154
    %v3156 = vsel %vm993, %v3137, 0.0
    %3157 = vadd.xlane.f32.xlu0 %v3156
    %v3158 = vpop.xlane.xlu0 %3157
    %v3159 = vsel %vm993, %v3139, 0.0
    %3160 = vadd.xlane.f32.xlu0 %v3159
    %v3161 = vpop.xlane.xlu0 %3160
    %v3162 = vsel %vm993, %v3141, 0.0
    %3163 = vadd.xlane.f32.xlu0 %v3162
    %v3164 = vpop.xlane.xlu0 %3163
    %v3165 = vsel %vm993, %v3143, 0.0
    %3166 = vadd.xlane.f32.xlu0 %v3165
    %v3167 = vpop.xlane.xlu0 %3166
    %v3168 = vrcp.pop %v3146
    %v3169 = vrcp.pop %v3149
    %v3170 = vrcp.pop %v3152
    %v3171 = vrcp.pop %v3155
    %v3172 = vrcp.pop %v3158
    %v3173 = vrcp.pop %v3161
    %v3174 = vrcp.pop %v3164
    %v3175 = vrcp.pop %v3167
    %v3176 = vmul.f32 %v3129, %v3168
    %v3177 = vmul.f32 %v3131, %v3169
    %v3178 = vmul.f32 %v3133, %v3170
    %v3179 = vmul.f32 %v3135, %v3171
    %v3180 = vmul.f32 %v3137, %v3172
    %v3181 = vmul.f32 %v3139, %v3173
    %v3182 = vmul.f32 %v3141, %v3174
    %v3183 = vmul.f32 %v3143, %v3175
    %v3184 = vpack.c.bf16 %v3176, %v3176
    %v3185 = vpack.c.bf16 %v3177, %v3177
    %v3186 = vpack.c.bf16 %v3178, %v3178
    %v3187 = vpack.c.bf16 %v3179, %v3179
    %v3188 = vpack.c.bf16 %v3180, %v3180
    %v3189 = vpack.c.bf16 %v3181, %v3181
    %v3190 = vpack.c.bf16 %v3182, %v3182
    %v3191 = vpack.c.bf16 %v3183, %v3183
    %v3193 = vsel %vm993, %v3184, 0
    %v3196 = vsel %vm1093, %v2720, 0
    %3198 = vmatprep.subr.bf16.mxu0 0
    %3199 = vmatpush1.bf16.msra.mxu0 %v3196
    %3200 = vmatprep.subr.bf16.mxu0 0
    %3201 = vmatpush1.bf16.msra.mxu0 0
    %3202 = vmatprep.subr.bf16.mxu0 0
    %3203 = vmatpush1.bf16.msra.mxu0 0
    %3204 = vmatprep.subr.bf16.mxu0 0
    %3205 = vmatpush1.bf16.msra.mxu0 0
    %3206 = vmatprep.subr.bf16.mxu0 0
    %3207 = vmatpush1.bf16.msra.mxu0 0
    %3208 = vmatprep.subr.bf16.mxu0 0
    %3209 = vmatpush1.bf16.msra.mxu0 0
    %3210 = vmatprep.subr.bf16.mxu0 0
    %3211 = vmatpush1.bf16.msra.mxu0 0
    %3212 = vmatprep.subr.bf16.mxu0 0
    %3213 = vmatpush1.bf16.msra.mxu0 0
    %3214 = vmatprep.subr.bf16.mxu0 0
    %3215 = vmatpush1.bf16.msra.mxu0 0
    %3216 = vmatprep.subr.bf16.mxu0 0
    %3217 = vmatpush1.bf16.msra.mxu0 0
    %3218 = vmatprep.subr.bf16.mxu0 0
    %3219 = vmatpush1.bf16.msra.mxu0 0
    %3220 = vmatprep.subr.bf16.mxu0 0
    %3221 = vmatpush1.bf16.msra.mxu0 0
    %3222 = vmatprep.subr.bf16.mxu0 0
    %3223 = vmatpush1.bf16.msra.mxu0 0
    %3224 = vmatprep.subr.bf16.mxu0 0
    %3225 = vmatpush1.bf16.msra.mxu0 0
    %3226 = vmatprep.subr.bf16.mxu0 0
    %3227 = vmatpush1.bf16.msra.mxu0 0
    %3228 = vmatprep.subr.bf16.mxu0 0
    %3229 = vmatpush1.bf16.msra.mxu0 0
    %3230 = vmatprep.mubr.bf16.mxu0 0
    %3231 = vmatmul.mubr.bf16.gmra.mrb[0].mxu0 %v3193
    %v3232 = vpop.f32.mrb[0].mxu0
    %v3233 = vadd.f32 0.0, %v3232
    %v3234 = vpop.f32.mrb[0].mxu0
    %v3235 = vpop.f32.mrb[0].mxu0
    %v3236 = vpop.f32.mrb[0].mxu0
    %3237 = vdwg.mxu0
    %v3239 = vsel %vm993, %v3185, 0
    %v3242 = vsel %vm1093, %v2721, 0
    %3244 = vmatprep.subr.bf16.mxu0 0
    %3245 = vmatpush1.bf16.msra.mxu0 %v3242
    %3246 = vmatprep.subr.bf16.mxu0 0
    %3247 = vmatpush1.bf16.msra.mxu0 0
    %3248 = vmatprep.subr.bf16.mxu0 0
    %3249 = vmatpush1.bf16.msra.mxu0 0
    %3250 = vmatprep.subr.bf16.mxu0 0
    %3251 = vmatpush1.bf16.msra.mxu0 0
    %3252 = vmatprep.subr.bf16.mxu0 0
    %3253 = vmatpush1.bf16.msra.mxu0 0
    %3254 = vmatprep.subr.bf16.mxu0 0
    %3255 = vmatpush1.bf16.msra.mxu0 0
    %3256 = vmatprep.subr.bf16.mxu0 0
    %3257 = vmatpush1.bf16.msra.mxu0 0
    %3258 = vmatprep.subr.bf16.mxu0 0
    %3259 = vmatpush1.bf16.msra.mxu0 0
    %3260 = vmatprep.subr.bf16.mxu0 0
    %3261 = vmatpush1.bf16.msra.mxu0 0
    %3262 = vmatprep.subr.bf16.mxu0 0
    %3263 = vmatpush1.bf16.msra.mxu0 0
    %3264 = vmatprep.subr.bf16.mxu0 0
    %3265 = vmatpush1.bf16.msra.mxu0 0
    %3266 = vmatprep.subr.bf16.mxu0 0
    %3267 = vmatpush1.bf16.msra.mxu0 0
    %3268 = vmatprep.subr.bf16.mxu0 0
    %3269 = vmatpush1.bf16.msra.mxu0 0
    %3270 = vmatprep.subr.bf16.mxu0 0
    %3271 = vmatpush1.bf16.msra.mxu0 0
    %3272 = vmatprep.subr.bf16.mxu0 0
    %3273 = vmatpush1.bf16.msra.mxu0 0
    %3274 = vmatprep.subr.bf16.mxu0 0
    %3275 = vmatpush1.bf16.msra.mxu0 0
    %3276 = vmatprep.mubr.bf16.mxu0 0
    %3277 = vmatmul.mubr.bf16.gmra.mrb[0].mxu0 %v3239
    %v3278 = vpop.f32.mrb[0].mxu0
    %v3279 = vadd.f32 0.0, %v3278
    %v3280 = vpop.f32.mrb[0].mxu0
    %v3281 = vpop.f32.mrb[0].mxu0
    %v3282 = vpop.f32.mrb[0].mxu0
    %3283 = vdwg.mxu0
    %v3285 = vsel %vm993, %v3186, 0
    %v3288 = vsel %vm1093, %v2722, 0
    %3290 = vmatprep.subr.bf16.mxu0 0
    %3291 = vmatpush1.bf16.msra.mxu0 %v3288
    %3292 = vmatprep.subr.bf16.mxu0 0
    %3293 = vmatpush1.bf16.msra.mxu0 0
    %3294 = vmatprep.subr.bf16.mxu0 0
    %3295 = vmatpush1.bf16.msra.mxu0 0
    %3296 = vmatprep.subr.bf16.mxu0 0
    %3297 = vmatpush1.bf16.msra.mxu0 0
    %3298 = vmatprep.subr.bf16.mxu0 0
    %3299 = vmatpush1.bf16.msra.mxu0 0
    %3300 = vmatprep.subr.bf16.mxu0 0
    %3301 = vmatpush1.bf16.msra.mxu0 0
    %3302 = vmatprep.subr.bf16.mxu0 0
    %3303 = vmatpush1.bf16.msra.mxu0 0
    %3304 = vmatprep.subr.bf16.mxu0 0
    %3305 = vmatpush1.bf16.msra.mxu0 0
    %3306 = vmatprep.subr.bf16.mxu0 0
    %3307 = vmatpush1.bf16.msra.mxu0 0
    %3308 = vmatprep.subr.bf16.mxu0 0
    %3309 = vmatpush1.bf16.msra.mxu0 0
    %3310 = vmatprep.subr.bf16.mxu0 0
    %3311 = vmatpush1.bf16.msra.mxu0 0
    %3312 = vmatprep.subr.bf16.mxu0 0
    %3313 = vmatpush1.bf16.msra.mxu0 0
    %3314 = vmatprep.subr.bf16.mxu0 0
    %3315 = vmatpush1.bf16.msra.mxu0 0
    %3316 = vmatprep.subr.bf16.mxu0 0
    %3317 = vmatpush1.bf16.msra.mxu0 0
    %3318 = vmatprep.subr.bf16.mxu0 0
    %3319 = vmatpush1.bf16.msra.mxu0 0
    %3320 = vmatprep.subr.bf16.mxu0 0
    %3321 = vmatpush1.bf16.msra.mxu0 0
    %3322 = vmatprep.mubr.bf16.mxu0 0
    %3323 = vmatmul.mubr.bf16.gmra.mrb[0].mxu0 %v3285
    %v3324 = vpop.f32.mrb[0].mxu0
    %v3325 = vadd.f32 0.0, %v3324
    %v3326 = vpop.f32.mrb[0].mxu0
    %v3327 = vpop.f32.mrb[0].mxu0
    %v3328 = vpop.f32.mrb[0].mxu0
    %3329 = vdwg.mxu0
    %v3331 = vsel %vm993, %v3187, 0
    %v3334 = vsel %vm1093, %v2723, 0
    %3336 = vmatprep.subr.bf16.mxu0 0
    %3337 = vmatpush1.bf16.msra.mxu0 %v3334
    %3338 = vmatprep.subr.bf16.mxu0 0
    %3339 = vmatpush1.bf16.msra.mxu0 0
    %3340 = vmatprep.subr.bf16.mxu0 0
    %3341 = vmatpush1.bf16.msra.mxu0 0
    %3342 = vmatprep.subr.bf16.mxu0 0
    %3343 = vmatpush1.bf16.msra.mxu0 0
    %3344 = vmatprep.subr.bf16.mxu0 0
    %3345 = vmatpush1.bf16.msra.mxu0 0
    %3346 = vmatprep.subr.bf16.mxu0 0
    %3347 = vmatpush1.bf16.msra.mxu0 0
    %3348 = vmatprep.subr.bf16.mxu0 0
    %3349 = vmatpush1.bf16.msra.mxu0 0
    %3350 = vmatprep.subr.bf16.mxu0 0
    %3351 = vmatpush1.bf16.msra.mxu0 0
    %3352 = vmatprep.subr.bf16.mxu0 0
    %3353 = vmatpush1.bf16.msra.mxu0 0
    %3354 = vmatprep.subr.bf16.mxu0 0
    %3355 = vmatpush1.bf16.msra.mxu0 0
    %3356 = vmatprep.subr.bf16.mxu0 0
    %3357 = vmatpush1.bf16.msra.mxu0 0
    %3358 = vmatprep.subr.bf16.mxu0 0
    %3359 = vmatpush1.bf16.msra.mxu0 0
    %3360 = vmatprep.subr.bf16.mxu0 0
    %3361 = vmatpush1.bf16.msra.mxu0 0
    %3362 = vmatprep.subr.bf16.mxu0 0
    %3363 = vmatpush1.bf16.msra.mxu0 0
    %3364 = vmatprep.subr.bf16.mxu0 0
    %3365 = vmatpush1.bf16.msra.mxu0 0
    %3366 = vmatprep.subr.bf16.mxu0 0
    %3367 = vmatpush1.bf16.msra.mxu0 0
    %3368 = vmatprep.mubr.bf16.mxu0 0
    %3369 = vmatmul.mubr.bf16.gmra.mrb[0].mxu0 %v3331
    %v3370 = vpop.f32.mrb[0].mxu0
    %v3371 = vadd.f32 0.0, %v3370
    %v3372 = vpop.f32.mrb[0].mxu0
    %v3373 = vpop.f32.mrb[0].mxu0
    %v3374 = vpop.f32.mrb[0].mxu0
    %3375 = vdwg.mxu0
    %v3377 = vsel %vm993, %v3188, 0
    %v3380 = vsel %vm1093, %v2724, 0
    %3382 = vmatprep.subr.bf16.mxu0 0
    %3383 = vmatpush1.bf16.msra.mxu0 %v3380
    %3384 = vmatprep.subr.bf16.mxu0 0
    %3385 = vmatpush1.bf16.msra.mxu0 0
    %3386 = vmatprep.subr.bf16.mxu0 0
    %3387 = vmatpush1.bf16.msra.mxu0 0
    %3388 = vmatprep.subr.bf16.mxu0 0
    %3389 = vmatpush1.bf16.msra.mxu0 0
    %3390 = vmatprep.subr.bf16.mxu0 0
    %3391 = vmatpush1.bf16.msra.mxu0 0
    %3392 = vmatprep.subr.bf16.mxu0 0
    %3393 = vmatpush1.bf16.msra.mxu0 0
    %3394 = vmatprep.subr.bf16.mxu0 0
    %3395 = vmatpush1.bf16.msra.mxu0 0
    %3396 = vmatprep.subr.bf16.mxu0 0
    %3397 = vmatpush1.bf16.msra.mxu0 0
    %3398 = vmatprep.subr.bf16.mxu0 0
    %3399 = vmatpush1.bf16.msra.mxu0 0
    %3400 = vmatprep.subr.bf16.mxu0 0
    %3401 = vmatpush1.bf16.msra.mxu0 0
    %3402 = vmatprep.subr.bf16.mxu0 0
    %3403 = vmatpush1.bf16.msra.mxu0 0
    %3404 = vmatprep.subr.bf16.mxu0 0
    %3405 = vmatpush1.bf16.msra.mxu0 0
    %3406 = vmatprep.subr.bf16.mxu0 0
    %3407 = vmatpush1.bf16.msra.mxu0 0
    %3408 = vmatprep.subr.bf16.mxu0 0
    %3409 = vmatpush1.bf16.msra.mxu0 0
    %3410 = vmatprep.subr.bf16.mxu0 0
    %3411 = vmatpush1.bf16.msra.mxu0 0
    %3412 = vmatprep.subr.bf16.mxu0 0
    %3413 = vmatpush1.bf16.msra.mxu0 0
    %3414 = vmatprep.mubr.bf16.mxu0 0
    %3415 = vmatmul.mubr.bf16.gmra.mrb[0].mxu0 %v3377
    %v3416 = vpop.f32.mrb[0].mxu0
    %v3417 = vadd.f32 0.0, %v3416
    %v3418 = vpop.f32.mrb[0].mxu0
    %v3419 = vpop.f32.mrb[0].mxu0
    %v3420 = vpop.f32.mrb[0].mxu0
    %3421 = vdwg.mxu0
    %v3423 = vsel %vm993, %v3189, 0
    %v3426 = vsel %vm1093, %v2725, 0
    %3428 = vmatprep.subr.bf16.mxu0 0
    %3429 = vmatpush1.bf16.msra.mxu0 %v3426
    %3430 = vmatprep.subr.bf16.mxu0 0
    %3431 = vmatpush1.bf16.msra.mxu0 0
    %3432 = vmatprep.subr.bf16.mxu0 0
    %3433 = vmatpush1.bf16.msra.mxu0 0
    %3434 = vmatprep.subr.bf16.mxu0 0
    %3435 = vmatpush1.bf16.msra.mxu0 0
    %3436 = vmatprep.subr.bf16.mxu0 0
    %3437 = vmatpush1.bf16.msra.mxu0 0
    %3438 = vmatprep.subr.bf16.mxu0 0
    %3439 = vmatpush1.bf16.msra.mxu0 0
    %3440 = vmatprep.subr.bf16.mxu0 0
    %3441 = vmatpush1.bf16.msra.mxu0 0
    %3442 = vmatprep.subr.bf16.mxu0 0
    %3443 = vmatpush1.bf16.msra.mxu0 0
    %3444 = vmatprep.subr.bf16.mxu0 0
    %3445 = vmatpush1.bf16.msra.mxu0 0
    %3446 = vmatprep.subr.bf16.mxu0 0
    %3447 = vmatpush1.bf16.msra.mxu0 0
    %3448 = vmatprep.subr.bf16.mxu0 0
    %3449 = vmatpush1.bf16.msra.mxu0 0
    %3450 = vmatprep.subr.bf16.mxu0 0
    %3451 = vmatpush1.bf16.msra.mxu0 0
    %3452 = vmatprep.subr.bf16.mxu0 0
    %3453 = vmatpush1.bf16.msra.mxu0 0
    %3454 = vmatprep.subr.bf16.mxu0 0
    %3455 = vmatpush1.bf16.msra.mxu0 0
    %3456 = vmatprep.subr.bf16.mxu0 0
    %3457 = vmatpush1.bf16.msra.mxu0 0
    %3458 = vmatprep.subr.bf16.mxu0 0
    %3459 = vmatpush1.bf16.msra.mxu0 0
    %3460 = vmatprep.mubr.bf16.mxu0 0
    %3461 = vmatmul.mubr.bf16.gmra.mrb[0].mxu0 %v3423
    %v3462 = vpop.f32.mrb[0].mxu0
    %v3463 = vadd.f32 0.0, %v3462
    %v3464 = vpop.f32.mrb[0].mxu0
    %v3465 = vpop.f32.mrb[0].mxu0
    %v3466 = vpop.f32.mrb[0].mxu0
    %3467 = vdwg.mxu0
    %v3469 = vsel %vm993, %v3190, 0
    %v3472 = vsel %vm1093, %v2726, 0
    %3474 = vmatprep.subr.bf16.mxu0 0
    %3475 = vmatpush1.bf16.msra.mxu0 %v3472
    %3476 = vmatprep.subr.bf16.mxu0 0
    %3477 = vmatpush1.bf16.msra.mxu0 0
    %3478 = vmatprep.subr.bf16.mxu0 0
    %3479 = vmatpush1.bf16.msra.mxu0 0
    %3480 = vmatprep.subr.bf16.mxu0 0
    %3481 = vmatpush1.bf16.msra.mxu0 0
    %3482 = vmatprep.subr.bf16.mxu0 0
    %3483 = vmatpush1.bf16.msra.mxu0 0
    %3484 = vmatprep.subr.bf16.mxu0 0
    %3485 = vmatpush1.bf16.msra.mxu0 0
    %3486 = vmatprep.subr.bf16.mxu0 0
    %3487 = vmatpush1.bf16.msra.mxu0 0
    %3488 = vmatprep.subr.bf16.mxu0 0
    %3489 = vmatpush1.bf16.msra.mxu0 0
    %3490 = vmatprep.subr.bf16.mxu0 0
    %3491 = vmatpush1.bf16.msra.mxu0 0
    %3492 = vmatprep.subr.bf16.mxu0 0
    %3493 = vmatpush1.bf16.msra.mxu0 0
    %3494 = vmatprep.subr.bf16.mxu0 0
    %3495 = vmatpush1.bf16.msra.mxu0 0
    %3496 = vmatprep.subr.bf16.mxu0 0
    %3497 = vmatpush1.bf16.msra.mxu0 0
    %3498 = vmatprep.subr.bf16.mxu0 0
    %3499 = vmatpush1.bf16.msra.mxu0 0
    %3500 = vmatprep.subr.bf16.mxu0 0
    %3501 = vmatpush1.bf16.msra.mxu0 0
    %3502 = vmatprep.subr.bf16.mxu0 0
    %3503 = vmatpush1.bf16.msra.mxu0 0
    %3504 = vmatprep.subr.bf16.mxu0 0
    %3505 = vmatpush1.bf16.msra.mxu0 0
    %3506 = vmatprep.mubr.bf16.mxu0 0
    %3507 = vmatmul.mubr.bf16.gmra.mrb[0].mxu0 %v3469
    %v3508 = vpop.f32.mrb[0].mxu0
    %v3509 = vadd.f32 0.0, %v3508
    %v3510 = vpop.f32.mrb[0].mxu0
    %v3511 = vpop.f32.mrb[0].mxu0
    %v3512 = vpop.f32.mrb[0].mxu0
    %3513 = vdwg.mxu0
    %v3515 = vsel %vm993, %v3191, 0
    %v3518 = vsel %vm1093, %v2727, 0
    %3520 = vmatprep.subr.bf16.mxu0 0
    %3521 = vmatpush1.bf16.msra.mxu0 %v3518
    %3522 = vmatprep.subr.bf16.mxu0 0
    %3523 = vmatpush1.bf16.msra.mxu0 0
    %3524 = vmatprep.subr.bf16.mxu0 0
    %3525 = vmatpush1.bf16.msra.mxu0 0
    %3526 = vmatprep.subr.bf16.mxu0 0
    %3527 = vmatpush1.bf16.msra.mxu0 0
    %3528 = vmatprep.subr.bf16.mxu0 0
    %3529 = vmatpush1.bf16.msra.mxu0 0
    %3530 = vmatprep.subr.bf16.mxu0 0
    %3531 = vmatpush1.bf16.msra.mxu0 0
    %3532 = vmatprep.subr.bf16.mxu0 0
    %3533 = vmatpush1.bf16.msra.mxu0 0
    %3534 = vmatprep.subr.bf16.mxu0 0
    %3535 = vmatpush1.bf16.msra.mxu0 0
    %3536 = vmatprep.subr.bf16.mxu0 0
    %3537 = vmatpush1.bf16.msra.mxu0 0
    %3538 = vmatprep.subr.bf16.mxu0 0
    %3539 = vmatpush1.bf16.msra.mxu0 0
    %3540 = vmatprep.subr.bf16.mxu0 0
    %3541 = vmatpush1.bf16.msra.mxu0 0
    %3542 = vmatprep.subr.bf16.mxu0 0
    %3543 = vmatpush1.bf16.msra.mxu0 0
    %3544 = vmatprep.subr.bf16.mxu0 0
    %3545 = vmatpush1.bf16.msra.mxu0 0
    %3546 = vmatprep.subr.bf16.mxu0 0
    %3547 = vmatpush1.bf16.msra.mxu0 0
    %3548 = vmatprep.subr.bf16.mxu0 0
    %3549 = vmatpush1.bf16.msra.mxu0 0
    %3550 = vmatprep.subr.bf16.mxu0 0
    %3551 = vmatpush1.bf16.msra.mxu0 0
    %3552 = vmatprep.mubr.bf16.mxu0 0
    %3553 = vmatmul.mubr.bf16.gmra.mrb[0].mxu0 %v3515
    %v3554 = vpop.f32.mrb[0].mxu0
    %v3555 = vadd.f32 0.0, %v3554
    %v3556 = vpop.f32.mrb[0].mxu0
    %v3557 = vpop.f32.mrb[0].mxu0
    %v3558 = vpop.f32.mrb[0].mxu0
    %3559 = vdwg.mxu0
    %3562 = vrot.lane.b32.xlu0 %v3325, 32
    %v3563 = vpop.permute.xlu0 %3562
    %3564 = vrot.lane.b32.xlu0 %v3371, 32
    %v3565 = vpop.permute.xlu0 %3564
    %3570 = vrot.lane.b32.xlu0 %v3417, 64
    %v3571 = vpop.permute.xlu0 %3570
    %3572 = vrot.lane.b32.xlu0 %v3463, 64
    %v3573 = vpop.permute.xlu0 %3572
    %3578 = vrot.lane.b32.xlu0 %v3509, 96
    %v3579 = vpop.permute.xlu0 %3578
    %3580 = vrot.lane.b32.xlu0 %v3555, 96
    %v3581 = vpop.permute.xlu0 %3580
    %v3584 = vsel %vm624, %v3233, %v3563
    %v3585 = vsel %vm624, %v3279, %v3565
    %v3586 = vsel %vm1485, %v3584, %v3571
    %v3587 = vsel %vm1485, %v3585, %v3573
    %v3588 = vsel %vm1488, %v3586, %v3579
    %v3589 = vsel %vm1488, %v3587, %v3581
    %v3590 = vpack.c.bf16 %v3589, %v3588
    %s3591 = scalar_lea.vmem [#allocation13], 64
    %v3592 = vld [vmem:[%s3591] sm:$0xf]
    %v3593 = vld [vmem:[%s3591 + $0x4] sm:$0xf]
    %v3594 = vld [vmem:[%s3591 + $0x8] sm:$0xf]
    %v3595 = vld [vmem:[%s3591 + $0xc] sm:$0xf]
    %v3596 = vld [vmem:[%s3591 + $0x10] sm:$0xf]
    %v3597 = vld [vmem:[%s3591 + $0x14] sm:$0xf]
    %v3598 = vld [vmem:[%s3591 + $0x18] sm:$0xf]
    %v3599 = vld [vmem:[%s3591 + $0x1c] sm:$0xf]
    %v3600 = vld [vmem:[%s3591 + $0x20] sm:$0xf]
    %v3601 = vld [vmem:[%s3591 + $0x24] sm:$0xf]
    %v3602 = vld [vmem:[%s3591 + $0x28] sm:$0xf]
    %v3603 = vld [vmem:[%s3591 + $0x2c] sm:$0xf]
    %v3604 = vld [vmem:[%s3591 + $0x30] sm:$0xf]
    %v3605 = vld [vmem:[%s3591 + $0x34] sm:$0xf]
    %v3606 = vld [vmem:[%s3591 + $0x38] sm:$0xf]
    %v3607 = vld [vmem:[%s3591 + $0x3c] sm:$0xf]
    %s3608 = scalar_lea.vmem %s8, 1
    %v3609 = vld [vmem:[%s3608] sm:$0x1]
    %v3611 = vlaneseq
    %v3612 = vshrl.u32 %v3611, 7
    %v3613 = vsub.s32 0, %v3612
    %v3614 = vrot.slane %v3609, %v3613
    %v3632 = vunpack.c.l.b16 %v3592
    %v3633 = vunpack.c.l.b16 %v3593
    %v3634 = vunpack.c.l.b16 %v3594
    %v3635 = vunpack.c.l.b16 %v3595
    %v3636 = vunpack.c.l.b16 %v3596
    %v3637 = vunpack.c.l.b16 %v3597
    %v3638 = vunpack.c.l.b16 %v3598
    %v3639 = vunpack.c.l.b16 %v3599
    %v3640 = vunpack.c.l.b16 %v3600
    %v3641 = vunpack.c.l.b16 %v3601
    %v3642 = vunpack.c.l.b16 %v3602
    %v3643 = vunpack.c.l.b16 %v3603
    %v3644 = vunpack.c.l.b16 %v3604
    %v3645 = vunpack.c.l.b16 %v3605
    %v3646 = vunpack.c.l.b16 %v3606
    %v3647 = vunpack.c.l.b16 %v3607
    %v3648 = vpack.c.b16 %v3633, %v3632
    %v3649 = vpack.c.b16 %v3635, %v3634
    %v3650 = vpack.c.b16 %v3637, %v3636
    %v3651 = vpack.c.b16 %v3639, %v3638
    %v3652 = vpack.c.b16 %v3641, %v3640
    %v3653 = vpack.c.b16 %v3643, %v3642
    %v3654 = vpack.c.b16 %v3645, %v3644
    %v3655 = vpack.c.b16 %v3647, %v3646
    %3664 = vmatprep.subr.bf16.mxu0 0
    %3665 = vmatpush1.bf16.msra.mxu0 %v3648
    %3666 = vmatprep.subr.bf16.mxu0 0
    %3667 = vmatpush1.bf16.msra.mxu0 %v3649
    %3668 = vmatprep.subr.bf16.mxu0 0
    %3669 = vmatpush1.bf16.msra.mxu0 %v3650
    %3670 = vmatprep.subr.bf16.mxu0 0
    %3671 = vmatpush1.bf16.msra.mxu0 %v3651
    %3672 = vmatprep.subr.bf16.mxu0 0
    %3673 = vmatpush1.bf16.msra.mxu0 %v3652
    %3674 = vmatprep.subr.bf16.mxu0 0
    %3675 = vmatpush1.bf16.msra.mxu0 %v3653
    %3676 = vmatprep.subr.bf16.mxu0 0
    %3677 = vmatpush1.bf16.msra.mxu0 %v3654
    %3678 = vmatprep.subr.bf16.mxu0 0
    %3679 = vmatpush1.bf16.msra.mxu0 %v3655
    %3680 = vmatprep.subr.bf16.mxu0 0
    %3681 = vmatpush1.bf16.msra.mxu0 0
    %3682 = vmatprep.subr.bf16.mxu0 0
    %3683 = vmatpush1.bf16.msra.mxu0 0
    %3684 = vmatprep.subr.bf16.mxu0 0
    %3685 = vmatpush1.bf16.msra.mxu0 0
    %3686 = vmatprep.subr.bf16.mxu0 0
    %3687 = vmatpush1.bf16.msra.mxu0 0
    %3688 = vmatprep.subr.bf16.mxu0 0
    %3689 = vmatpush1.bf16.msra.mxu0 0
    %3690 = vmatprep.subr.bf16.mxu0 0
    %3691 = vmatpush1.bf16.msra.mxu0 0
    %3692 = vmatprep.subr.bf16.mxu0 0
    %3693 = vmatpush1.bf16.msra.mxu0 0
    %3694 = vmatprep.subr.bf16.mxu0 0
    %3695 = vmatpush1.bf16.msra.mxu0 0
    %3696 = vmatprep.mubr.bf16.mxu0 0
    %3697 = vmatmul.mubr.bf16.gmra.mrb[0].mxu0 %v3590
    %v3698 = vpop.f32.mrb[0].mxu0
    %v3699 = vadd.f32 %v3614, %v3698
    %v3700 = vpop.f32.mrb[0].mxu0
    %v3701 = vpop.f32.mrb[0].mxu0
    %v3702 = vadd.f32 %v3614, %v3701
    %v3703 = vpop.f32.mrb[0].mxu0
    %3704 = vdwg.mxu0
    %v3705 = vadd.f32 %v2336, %v3699
    %v3706 = vadd.f32 %v2337, %v3702
    %s3707 = scalar_lea.vmem %s9, 1
    %v3708 = vld [vmem:[%s3707] sm:$0x1]
    %s3709 = scalar_lea.vmem %s10, 1
    %v3710 = vld [vmem:[%s3709] sm:$0x1]
    %3711 = vadd.xlane.f32.xlu0 %v3705
    %v3712 = vpop.xlane.xlu0 %3711
    %3713 = vadd.xlane.f32.xlu0 %v3706
    %v3714 = vpop.xlane.xlu0 %3713
    %v3715 = vmul.f32 %v3712, %v243
    %v3716 = vmul.f32 %v3714, %v243
    %v3717 = vsub.f32 %v3705, %v3715
    %v3718 = vsub.f32 %v3706, %v3716
    %v3719 = vmul.f32 %v3717, %v3717
    %v3720 = vmul.f32 %v3718, %v3718
    %3721 = vadd.xlane.f32.xlu0 %v3719
    %v3722 = vpop.xlane.xlu0 %3721
    %3723 = vadd.xlane.f32.xlu0 %v3720
    %v3724 = vpop.xlane.xlu0 %3723
    %v3725 = vmul.f32 %v3722, %v243
    %v3726 = vmul.f32 %v3724, %v243
    %v3727 = vadd.f32 %v3725, 1e-05
    %v3728 = vadd.f32 %v3726, 1e-05
    %v3729 = vrsqrt.pop %v3727
    %v3730 = vrsqrt.pop %v3728
    %v3731 = vmul.f32 %v3717, %v3729
    %v3732 = vmul.f32 %v3718, %v3730
    %v3734 = vlaneseq
    %v3735 = vshrl.u32 %v3734, 7
    %v3736 = vsub.s32 0, %v3735
    %v3737 = vrot.slane %v3708, %v3736
    %v3739 = vmul.f32 %v3731, %v3737
    %v3740 = vmul.f32 %v3732, %v3737
    %v3742 = vlaneseq
    %v3743 = vshrl.u32 %v3742, 7
    %v3744 = vsub.s32 0, %v3743
    %v3745 = vrot.slane %v3710, %v3744
    %v3747 = vadd.f32 %v3739, %v3745
    %v3748 = vadd.f32 %v3740, %v3745
    %v3749 = vpack.c.bf16 %v3748, %v3747
    %s3750 = scalar_lea.vmem [#allocation14], 256
    %v3751 = vld [vmem:[%s3750] sm:$0xff]
    %v3752 = vld [vmem:[%s3750 + $0x8] sm:$0xff]
    %v3753 = vld [vmem:[%s3750 + $0x10] sm:$0xff]
    %v3754 = vld [vmem:[%s3750 + $0x18] sm:$0xff]
    %v3755 = vld [vmem:[%s3750 + $0x20] sm:$0xff]
    %v3756 = vld [vmem:[%s3750 + $0x28] sm:$0xff]
    %v3757 = vld [vmem:[%s3750 + $0x30] sm:$0xff]
    %v3758 = vld [vmem:[%s3750 + $0x38] sm:$0xff]
    %v3759 = vld [vmem:[%s3750 + $0x40] sm:$0xff]
    %v3760 = vld [vmem:[%s3750 + $0x48] sm:$0xff]
    %v3761 = vld [vmem:[%s3750 + $0x50] sm:$0xff]
    %v3762 = vld [vmem:[%s3750 + $0x58] sm:$0xff]
    %v3763 = vld [vmem:[%s3750 + $0x60] sm:$0xff]
    %v3764 = vld [vmem:[%s3750 + $0x68] sm:$0xff]
    %v3765 = vld [vmem:[%s3750 + $0x70] sm:$0xff]
    %v3766 = vld [vmem:[%s3750 + $0x78] sm:$0xff]
    %v3767 = vld [vmem:[%s3750 + $0x80] sm:$0xff]
    %v3768 = vld [vmem:[%s3750 + $0x88] sm:$0xff]
    %v3769 = vld [vmem:[%s3750 + $0x90] sm:$0xff]
    %v3770 = vld [vmem:[%s3750 + $0x98] sm:$0xff]
    %v3771 = vld [vmem:[%s3750 + $0xa0] sm:$0xff]
    %v3772 = vld [vmem:[%s3750 + $0xa8] sm:$0xff]
    %v3773 = vld [vmem:[%s3750 + $0xb0] sm:$0xff]
    %v3774 = vld [vmem:[%s3750 + $0xb8] sm:$0xff]
    %v3775 = vld [vmem:[%s3750 + $0xc0] sm:$0xff]
    %v3776 = vld [vmem:[%s3750 + $0xc8] sm:$0xff]
    %v3777 = vld [vmem:[%s3750 + $0xd0] sm:$0xff]
    %v3778 = vld [vmem:[%s3750 + $0xd8] sm:$0xff]
    %v3779 = vld [vmem:[%s3750 + $0xe0] sm:$0xff]
    %v3780 = vld [vmem:[%s3750 + $0xe8] sm:$0xff]
    %v3781 = vld [vmem:[%s3750 + $0xf0] sm:$0xff]
    %v3782 = vld [vmem:[%s3750 + $0xf8] sm:$0xff]
    %s3783 = scalar_lea.vmem %s12, 4
    %v3784 = vld [vmem:[%s3783] sm:$0xf]
    %v3786 = vlaneseq
    %v3787 = vshrl.u32 %v3786, 7
    %v3788 = vsub.s32 0, %v3787
    %v3789 = vrot.slane %v3784, %v3788
    %v3790 = vlaneseq
    %v3791 = vshrl.u32 %v3790, 7
    %v3792 = vsub.s32 1, %v3791
    %v3793 = vrot.slane %v3784, %v3792
    %v3794 = vlaneseq
    %v3795 = vshrl.u32 %v3794, 7
    %v3796 = vsub.s32 2, %v3795
    %v3797 = vrot.slane %v3784, %v3796
    %v3798 = vlaneseq
    %v3799 = vshrl.u32 %v3798, 7
    %v3800 = vsub.s32 3, %v3799
    %v3801 = vrot.slane %v3784, %v3800
    %v3838 = vunpack.c.l.b16 %v3751
    %v3839 = vunpack.c.h.b16 %v3751
    %v3840 = vunpack.c.l.b16 %v3752
    %v3841 = vunpack.c.h.b16 %v3752
    %v3842 = vunpack.c.l.b16 %v3753
    %v3843 = vunpack.c.h.b16 %v3753
    %v3844 = vunpack.c.l.b16 %v3754
    %v3845 = vunpack.c.h.b16 %v3754
    %v3846 = vunpack.c.l.b16 %v3755
    %v3847 = vunpack.c.h.b16 %v3755
    %v3848 = vunpack.c.l.b16 %v3756
    %v3849 = vunpack.c.h.b16 %v3756
    %v3850 = vunpack.c.l.b16 %v3757
    %v3851 = vunpack.c.h.b16 %v3757
    %v3852 = vunpack.c.l.b16 %v3758
    %v3853 = vunpack.c.h.b16 %v3758
    %v3854 = vunpack.c.l.b16 %v3759
    %v3855 = vunpack.c.h.b16 %v3759
    %v3856 = vunpack.c.l.b16 %v3760
    %v3857 = vunpack.c.h.b16 %v3760
    %v3858 = vunpack.c.l.b16 %v3761
    %v3859 = vunpack.c.h.b16 %v3761
    %v3860 = vunpack.c.l.b16 %v3762
    %v3861 = vunpack.c.h.b16 %v3762
    %v3862 = vunpack.c.l.b16 %v3763
    %v3863 = vunpack.c.h.b16 %v3763
    %v3864 = vunpack.c.l.b16 %v3764
    %v3865 = vunpack.c.h.b16 %v3764
    %v3866 = vunpack.c.l.b16 %v3765
    %v3867 = vunpack.c.h.b16 %v3765
    %v3868 = vunpack.c.l.b16 %v3766
    %v3869 = vunpack.c.h.b16 %v3766
    %v3870 = vunpack.c.l.b16 %v3767
    %v3871 = vunpack.c.h.b16 %v3767
    %v3872 = vunpack.c.l.b16 %v3768
    %v3873 = vunpack.c.h.b16 %v3768
    %v3874 = vunpack.c.l.b16 %v3769
    %v3875 = vunpack.c.h.b16 %v3769
    %v3876 = vunpack.c.l.b16 %v3770
    %v3877 = vunpack.c.h.b16 %v3770
    %v3878 = vunpack.c.l.b16 %v3771
    %v3879 = vunpack.c.h.b16 %v3771
    %v3880 = vunpack.c.l.b16 %v3772
    %v3881 = vunpack.c.h.b16 %v3772
    %v3882 = vunpack.c.l.b16 %v3773
    %v3883 = vunpack.c.h.b16 %v3773
    %v3884 = vunpack.c.l.b16 %v3774
    %v3885 = vunpack.c.h.b16 %v3774
    %v3886 = vunpack.c.l.b16 %v3775
    %v3887 = vunpack.c.h.b16 %v3775
    %v3888 = vunpack.c.l.b16 %v3776
    %v3889 = vunpack.c.h.b16 %v3776
    %v3890 = vunpack.c.l.b16 %v3777
    %v3891 = vunpack.c.h.b16 %v3777
    %v3892 = vunpack.c.l.b16 %v3778
    %v3893 = vunpack.c.h.b16 %v3778
    %v3894 = vunpack.c.l.b16 %v3779
    %v3895 = vunpack.c.h.b16 %v3779
    %v3896 = vunpack.c.l.b16 %v3780
    %v3897 = vunpack.c.h.b16 %v3780
    %v3898 = vunpack.c.l.b16 %v3781
    %v3899 = vunpack.c.h.b16 %v3781
    %v3900 = vunpack.c.l.b16 %v3782
    %v3901 = vunpack.c.h.b16 %v3782
    %v3902 = vpack.c.b16 %v3842, %v3838
    %v3903 = vpack.c.b16 %v3843, %v3839
    %v3904 = vpack.c.b16 %v3844, %v3840
    %v3905 = vpack.c.b16 %v3845, %v3841
    %v3906 = vpack.c.b16 %v3850, %v3846
    %v3907 = vpack.c.b16 %v3851, %v3847
    %v3908 = vpack.c.b16 %v3852, %v3848
    %v3909 = vpack.c.b16 %v3853, %v3849
    %v3910 = vpack.c.b16 %v3858, %v3854
    %v3911 = vpack.c.b16 %v3859, %v3855
    %v3912 = vpack.c.b16 %v3860, %v3856
    %v3913 = vpack.c.b16 %v3861, %v3857
    %v3914 = vpack.c.b16 %v3866, %v3862
    %v3915 = vpack.c.b16 %v3867, %v3863
    %v3916 = vpack.c.b16 %v3868, %v3864
    %v3917 = vpack.c.b16 %v3869, %v3865
    %v3918 = vpack.c.b16 %v3874, %v3870
    %v3919 = vpack.c.b16 %v3875, %v3871
    %v3920 = vpack.c.b16 %v3876, %v3872
    %v3921 = vpack.c.b16 %v3877, %v3873
    %v3922 = vpack.c.b16 %v3882, %v3878
    %v3923 = vpack.c.b16 %v3883, %v3879
    %v3924 = vpack.c.b16 %v3884, %v3880
    %v3925 = vpack.c.b16 %v3885, %v3881
    %v3926 = vpack.c.b16 %v3890, %v3886
    %v3927 = vpack.c.b16 %v3891, %v3887
    %v3928 = vpack.c.b16 %v3892, %v3888
    %v3929 = vpack.c.b16 %v3893, %v3889
    %v3930 = vpack.c.b16 %v3898, %v3894
    %v3931 = vpack.c.b16 %v3899, %v3895
    %v3932 = vpack.c.b16 %v3900, %v3896
    %v3933 = vpack.c.b16 %v3901, %v3897
    %3966 = vmatprep.subr.bf16.mxu0 %v3903
    %3967 = vmatpush1.bf16.msra.mxu0 %v3902
    %3968 = vmatprep.subr.bf16.mxu0 %v3907
    %3969 = vmatpush1.bf16.msra.mxu0 %v3906
    %3970 = vmatprep.subr.bf16.mxu0 %v3911
    %3971 = vmatpush1.bf16.msra.mxu0 %v3910
    %3972 = vmatprep.subr.bf16.mxu0 %v3915
    %3973 = vmatpush1.bf16.msra.mxu0 %v3914
    %3974 = vmatprep.subr.bf16.mxu0 %v3919
    %3975 = vmatpush1.bf16.msra.mxu0 %v3918
    %3976 = vmatprep.subr.bf16.mxu0 %v3923
    %3977 = vmatpush1.bf16.msra.mxu0 %v3922
    %3978 = vmatprep.subr.bf16.mxu0 %v3927
    %3979 = vmatpush1.bf16.msra.mxu0 %v3926
    %3980 = vmatprep.subr.bf16.mxu0 %v3931
    %3981 = vmatpush1.bf16.msra.mxu0 %v3930
    %3982 = vmatprep.subr.bf16.mxu0 0
    %3983 = vmatpush1.bf16.msra.mxu0 0
    %3984 = vmatprep.subr.bf16.mxu0 0
    %3985 = vmatpush1.bf16.msra.mxu0 0
    %3986 = vmatprep.subr.bf16.mxu0 0
    %3987 = vmatpush1.bf16.msra.mxu0 0
    %3988 = vmatprep.subr.bf16.mxu0 0
    %3989 = vmatpush1.bf16.msra.mxu0 0
    %3990 = vmatprep.subr.bf16.mxu0 0
    %3991 = vmatpush1.bf16.msra.mxu0 0
    %3992 = vmatprep.subr.bf16.mxu0 0
    %3993 = vmatpush1.bf16.msra.mxu0 0
    %3994 = vmatprep.subr.bf16.mxu0 0
    %3995 = vmatpush1.bf16.msra.mxu0 0
    %3996 = vmatprep.subr.bf16.mxu0 0
    %3997 = vmatpush1.bf16.msra.mxu0 0
    %3998 = vmatprep.mubr.bf16.mxu0 0
    %3999 = vmatmul.mubr.bf16.gmra.mrb[0].mxu0 %v3749
    %v4000 = vpop.f32.mrb[0].mxu0
    %v4001 = vadd.f32 %v3789, %v4000
    %v4002 = vpop.f32.mrb[0].mxu0
    %v4003 = vadd.f32 %v3793, %v4002
    %v4004 = vpop.f32.mrb[0].mxu0
    %v4005 = vadd.f32 %v3789, %v4004
    %v4006 = vpop.f32.mrb[0].mxu0
    %v4007 = vadd.f32 %v3793, %v4006
    %4008 = vdwg.mxu0
    %4009 = vmatprep.subr.bf16.mxu0 %v3905
    %4010 = vmatpush1.bf16.msra.mxu0 %v3904
    %4011 = vmatprep.subr.bf16.mxu0 %v3909
    %4012 = vmatpush1.bf16.msra.mxu0 %v3908
    %4013 = vmatprep.subr.bf16.mxu0 %v3913
    %4014 = vmatpush1.bf16.msra.mxu0 %v3912
    %4015 = vmatprep.subr.bf16.mxu0 %v3917
    %4016 = vmatpush1.bf16.msra.mxu0 %v3916
    %4017 = vmatprep.subr.bf16.mxu0 %v3921
    %4018 = vmatpush1.bf16.msra.mxu0 %v3920
    %4019 = vmatprep.subr.bf16.mxu0 %v3925
    %4020 = vmatpush1.bf16.msra.mxu0 %v3924
    %4021 = vmatprep.subr.bf16.mxu0 %v3929
    %4022 = vmatpush1.bf16.msra.mxu0 %v3928
    %4023 = vmatprep.subr.bf16.mxu0 %v3933
    %4024 = vmatpush1.bf16.msra.mxu0 %v3932
    %4025 = vmatprep.subr.bf16.mxu0 0
    %4026 = vmatpush1.bf16.msra.mxu0 0
    %4027 = vmatprep.subr.bf16.mxu0 0
    %4028 = vmatpush1.bf16.msra.mxu0 0
    %4029 = vmatprep.subr.bf16.mxu0 0
    %4030 = vmatpush1.bf16.msra.mxu0 0
    %4031 = vmatprep.subr.bf16.mxu0 0
    %4032 = vmatpush1.bf16.msra.mxu0 0
    %4033 = vmatprep.subr.bf16.mxu0 0
    %4034 = vmatpush1.bf16.msra.mxu0 0
    %4035 = vmatprep.subr.bf16.mxu0 0
    %4036 = vmatpush1.bf16.msra.mxu0 0
    %4037 = vmatprep.subr.bf16.mxu0 0
    %4038 = vmatpush1.bf16.msra.mxu0 0
    %4039 = vmatprep.subr.bf16.mxu0 0
    %4040 = vmatpush1.bf16.msra.mxu0 0
    %4041 = vmatprep.mubr.bf16.mxu0 0
    %4042 = vmatmul.mubr.bf16.gmra.mrb[0].mxu0 %v3749
    %v4043 = vpop.f32.mrb[0].mxu0
    %v4044 = vadd.f32 %v3797, %v4043
    %v4045 = vpop.f32.mrb[0].mxu0
    %v4046 = vadd.f32 %v3801, %v4045
    %v4047 = vpop.f32.mrb[0].mxu0
    %v4048 = vadd.f32 %v3797, %v4047
    %v4049 = vpop.f32.mrb[0].mxu0
    %v4050 = vadd.f32 %v3801, %v4049
    %4051 = vdwg.mxu0
    %v4052 = vmul.f32 %v4001, 0.5
    %v4053 = vmul.f32 %v4003, 0.5
    %v4054 = vmul.f32 %v4044, 0.5
    %v4055 = vmul.f32 %v4046, 0.5
    %v4056 = vmul.f32 %v4005, 0.5
    %v4057 = vmul.f32 %v4007, 0.5
    %v4058 = vmul.f32 %v4048, 0.5
    %v4059 = vmul.f32 %v4050, 0.5
    %v4060 = vmul.f32 %v4001, 0.70710677
    %v4061 = vmul.f32 %v4003, 0.70710677
    %v4062 = vmul.f32 %v4044, 0.70710677
    %v4063 = vmul.f32 %v4046, 0.70710677
    %v4064 = vmul.f32 %v4005, 0.70710677
    %v4065 = vmul.f32 %v4007, 0.70710677
    %v4066 = vmul.f32 %v4048, 0.70710677
    %v4067 = vmul.f32 %v4050, 0.70710677
    %v4068 = verf.f32.pop %v4060
    %v4069 = verf.f32.pop %v4061
    %v4070 = verf.f32.pop %v4062
    %v4071 = verf.f32.pop %v4063
    %v4072 = verf.f32.pop %v4064
    %v4073 = verf.f32.pop %v4065
    %v4074 = verf.f32.pop %v4066
    %v4075 = verf.f32.pop %v4067
    %v4076 = vadd.f32 %v4068, 1.0
    %v4077 = vadd.f32 %v4069, 1.0
    %v4078 = vadd.f32 %v4070, 1.0
    %v4079 = vadd.f32 %v4071, 1.0
    %v4080 = vadd.f32 %v4072, 1.0
    %v4081 = vadd.f32 %v4073, 1.0
    %v4082 = vadd.f32 %v4074, 1.0
    %v4083 = vadd.f32 %v4075, 1.0
    %v4084 = vmul.f32 %v4052, %v4076
    %v4085 = vmul.f32 %v4053, %v4077
    %v4086 = vmul.f32 %v4054, %v4078
    %v4087 = vmul.f32 %v4055, %v4079
    %v4088 = vmul.f32 %v4056, %v4080
    %v4089 = vmul.f32 %v4057, %v4081
    %v4090 = vmul.f32 %v4058, %v4082
    %v4091 = vmul.f32 %v4059, %v4083
    %v4092 = vpack.c.bf16 %v4088, %v4084
    %v4093 = vpack.c.bf16 %v4089, %v4085
    %v4094 = vpack.c.bf16 %v4090, %v4086
    %v4095 = vpack.c.bf16 %v4091, %v4087
    %s4096 = scalar_lea.vmem [#allocation16], 256
    %v4097 = vld [vmem:[%s4096] sm:$0xf]
    %v4098 = vld [vmem:[%s4096 + $0x4] sm:$0xf]
    %v4099 = vld [vmem:[%s4096 + $0x8] sm:$0xf]
    %v4100 = vld [vmem:[%s4096 + $0xc] sm:$0xf]
    %v4101 = vld [vmem:[%s4096 + $0x10] sm:$0xf]
    %v4102 = vld [vmem:[%s4096 + $0x14] sm:$0xf]
    %v4103 = vld [vmem:[%s4096 + $0x18] sm:$0xf]
    %v4104 = vld [vmem:[%s4096 + $0x1c] sm:$0xf]
    %v4105 = vld [vmem:[%s4096 + $0x20] sm:$0xf]
    %v4106 = vld [vmem:[%s4096 + $0x24] sm:$0xf]
    %v4107 = vld [vmem:[%s4096 + $0x28] sm:$0xf]
    %v4108 = vld [vmem:[%s4096 + $0x2c] sm:$0xf]
    %v4109 = vld [vmem:[%s4096 + $0x30] sm:$0xf]
    %v4110 = vld [vmem:[%s4096 + $0x34] sm:$0xf]
    %v4111 = vld [vmem:[%s4096 + $0x38] sm:$0xf]
    %v4112 = vld [vmem:[%s4096 + $0x3c] sm:$0xf]
    %v4113 = vld [vmem:[%s4096 + $0x40] sm:$0xf]
    %v4114 = vld [vmem:[%s4096 + $0x44] sm:$0xf]
    %v4115 = vld [vmem:[%s4096 + $0x48] sm:$0xf]
    %v4116 = vld [vmem:[%s4096 + $0x4c] sm:$0xf]
    %v4117 = vld [vmem:[%s4096 + $0x50] sm:$0xf]
    %v4118 = vld [vmem:[%s4096 + $0x54] sm:$0xf]
    %v4119 = vld [vmem:[%s4096 + $0x58] sm:$0xf]
    %v4120 = vld [vmem:[%s4096 + $0x5c] sm:$0xf]
    %v4121 = vld [vmem:[%s4096 + $0x60] sm:$0xf]
    %v4122 = vld [vmem:[%s4096 + $0x64] sm:$0xf]
    %v4123 = vld [vmem:[%s4096 + $0x68] sm:$0xf]
    %v4124 = vld [vmem:[%s4096 + $0x6c] sm:$0xf]
    %v4125 = vld [vmem:[%s4096 + $0x70] sm:$0xf]
    %v4126 = vld [vmem:[%s4096 + $0x74] sm:$0xf]
    %v4127 = vld [vmem:[%s4096 + $0x78] sm:$0xf]
    %v4128 = vld [vmem:[%s4096 + $0x7c] sm:$0xf]
    %v4129 = vld [vmem:[%s4096 + $0x80] sm:$0xf]
    %v4130 = vld [vmem:[%s4096 + $0x84] sm:$0xf]
    %v4131 = vld [vmem:[%s4096 + $0x88] sm:$0xf]
    %v4132 = vld [vmem:[%s4096 + $0x8c] sm:$0xf]
    %v4133 = vld [vmem:[%s4096 + $0x90] sm:$0xf]
    %v4134 = vld [vmem:[%s4096 + $0x94] sm:$0xf]
    %v4135 = vld [vmem:[%s4096 + $0x98] sm:$0xf]
    %v4136 = vld [vmem:[%s4096 + $0x9c] sm:$0xf]
    %v4137 = vld [vmem:[%s4096 + $0xa0] sm:$0xf]
    %v4138 = vld [vmem:[%s4096 + $0xa4] sm:$0xf]
    %v4139 = vld [vmem:[%s4096 + $0xa8] sm:$0xf]
    %v4140 = vld [vmem:[%s4096 + $0xac] sm:$0xf]
    %v4141 = vld [vmem:[%s4096 + $0xb0] sm:$0xf]
    %v4142 = vld [vmem:[%s4096 + $0xb4] sm:$0xf]
    %v4143 = vld [vmem:[%s4096 + $0xb8] sm:$0xf]
    %v4144 = vld [vmem:[%s4096 + $0xbc] sm:$0xf]
    %v4145 = vld [vmem:[%s4096 + $0xc0] sm:$0xf]
    %v4146 = vld [vmem:[%s4096 + $0xc4] sm:$0xf]
    %v4147 = vld [vmem:[%s4096 + $0xc8] sm:$0xf]
    %v4148 = vld [vmem:[%s4096 + $0xcc] sm:$0xf]
    %v4149 = vld [vmem:[%s4096 + $0xd0] sm:$0xf]
    %v4150 = vld [vmem:[%s4096 + $0xd4] sm:$0xf]
    %v4151 = vld [vmem:[%s4096 + $0xd8] sm:$0xf]
    %v4152 = vld [vmem:[%s4096 + $0xdc] sm:$0xf]
    %v4153 = vld [vmem:[%s4096 + $0xe0] sm:$0xf]
    %v4154 = vld [vmem:[%s4096 + $0xe4] sm:$0xf]
    %v4155 = vld [vmem:[%s4096 + $0xe8] sm:$0xf]
    %v4156 = vld [vmem:[%s4096 + $0xec] sm:$0xf]
    %v4157 = vld [vmem:[%s4096 + $0xf0] sm:$0xf]
    %v4158 = vld [vmem:[%s4096 + $0xf4] sm:$0xf]
    %v4159 = vld [vmem:[%s4096 + $0xf8] sm:$0xf]
    %v4160 = vld [vmem:[%s4096 + $0xfc] sm:$0xf]
    %s4161 = scalar_lea.vmem %s14, 1
    %v4162 = vld [vmem:[%s4161] sm:$0x1]
    %v4164 = vlaneseq
    %v4165 = vshrl.u32 %v4164, 7
    %v4166 = vsub.s32 0, %v4165
    %v4167 = vrot.slane %v4162, %v4166
    %v4233 = vunpack.c.l.b16 %v4097
    %v4234 = vunpack.c.l.b16 %v4098
    %v4235 = vunpack.c.l.b16 %v4099
    %v4236 = vunpack.c.l.b16 %v4100
    %v4237 = vunpack.c.l.b16 %v4101
    %v4238 = vunpack.c.l.b16 %v4102
    %v4239 = vunpack.c.l.b16 %v4103
    %v4240 = vunpack.c.l.b16 %v4104
    %v4241 = vunpack.c.l.b16 %v4105
    %v4242 = vunpack.c.l.b16 %v4106
    %v4243 = vunpack.c.l.b16 %v4107
    %v4244 = vunpack.c.l.b16 %v4108
    %v4245 = vunpack.c.l.b16 %v4109
    %v4246 = vunpack.c.l.b16 %v4110
    %v4247 = vunpack.c.l.b16 %v4111
    %v4248 = vunpack.c.l.b16 %v4112
    %v4249 = vunpack.c.l.b16 %v4113
    %v4250 = vunpack.c.l.b16 %v4114
    %v4251 = vunpack.c.l.b16 %v4115
    %v4252 = vunpack.c.l.b16 %v4116
    %v4253 = vunpack.c.l.b16 %v4117
    %v4254 = vunpack.c.l.b16 %v4118
    %v4255 = vunpack.c.l.b16 %v4119
    %v4256 = vunpack.c.l.b16 %v4120
    %v4257 = vunpack.c.l.b16 %v4121
    %v4258 = vunpack.c.l.b16 %v4122
    %v4259 = vunpack.c.l.b16 %v4123
    %v4260 = vunpack.c.l.b16 %v4124
    %v4261 = vunpack.c.l.b16 %v4125
    %v4262 = vunpack.c.l.b16 %v4126
    %v4263 = vunpack.c.l.b16 %v4127
    %v4264 = vunpack.c.l.b16 %v4128
    %v4265 = vunpack.c.l.b16 %v4129
    %v4266 = vunpack.c.l.b16 %v4130
    %v4267 = vunpack.c.l.b16 %v4131
    %v4268 = vunpack.c.l.b16 %v4132
    %v4269 = vunpack.c.l.b16 %v4133
    %v4270 = vunpack.c.l.b16 %v4134
    %v4271 = vunpack.c.l.b16 %v4135
    %v4272 = vunpack.c.l.b16 %v4136
    %v4273 = vunpack.c.l.b16 %v4137
    %v4274 = vunpack.c.l.b16 %v4138
    %v4275 = vunpack.c.l.b16 %v4139
    %v4276 = vunpack.c.l.b16 %v4140
    %v4277 = vunpack.c.l.b16 %v4141
    %v4278 = vunpack.c.l.b16 %v4142
    %v4279 = vunpack.c.l.b16 %v4143
    %v4280 = vunpack.c.l.b16 %v4144
    %v4281 = vunpack.c.l.b16 %v4145
    %v4282 = vunpack.c.l.b16 %v4146
    %v4283 = vunpack.c.l.b16 %v4147
    %v4284 = vunpack.c.l.b16 %v4148
    %v4285 = vunpack.c.l.b16 %v4149
    %v4286 = vunpack.c.l.b16 %v4150
    %v4287 = vunpack.c.l.b16 %v4151
    %v4288 = vunpack.c.l.b16 %v4152
    %v4289 = vunpack.c.l.b16 %v4153
    %v4290 = vunpack.c.l.b16 %v4154
    %v4291 = vunpack.c.l.b16 %v4155
    %v4292 = vunpack.c.l.b16 %v4156
    %v4293 = vunpack.c.l.b16 %v4157
    %v4294 = vunpack.c.l.b16 %v4158
    %v4295 = vunpack.c.l.b16 %v4159
    %v4296 = vunpack.c.l.b16 %v4160
    %v4297 = vpack.c.b16 %v4234, %v4233
    %v4298 = vpack.c.b16 %v4236, %v4235
    %v4299 = vpack.c.b16 %v4238, %v4237
    %v4300 = vpack.c.b16 %v4240, %v4239
    %v4301 = vpack.c.b16 %v4242, %v4241
    %v4302 = vpack.c.b16 %v4244, %v4243
    %v4303 = vpack.c.b16 %v4246, %v4245
    %v4304 = vpack.c.b16 %v4248, %v4247
    %v4305 = vpack.c.b16 %v4250, %v4249
    %v4306 = vpack.c.b16 %v4252, %v4251
    %v4307 = vpack.c.b16 %v4254, %v4253
    %v4308 = vpack.c.b16 %v4256, %v4255
    %v4309 = vpack.c.b16 %v4258, %v4257
    %v4310 = vpack.c.b16 %v4260, %v4259
    %v4311 = vpack.c.b16 %v4262, %v4261
    %v4312 = vpack.c.b16 %v4264, %v4263
    %v4313 = vpack.c.b16 %v4266, %v4265
    %v4314 = vpack.c.b16 %v4268, %v4267
    %v4315 = vpack.c.b16 %v4270, %v4269
    %v4316 = vpack.c.b16 %v4272, %v4271
    %v4317 = vpack.c.b16 %v4274, %v4273
    %v4318 = vpack.c.b16 %v4276, %v4275
    %v4319 = vpack.c.b16 %v4278, %v4277
    %v4320 = vpack.c.b16 %v4280, %v4279
    %v4321 = vpack.c.b16 %v4282, %v4281
    %v4322 = vpack.c.b16 %v4284, %v4283
    %v4323 = vpack.c.b16 %v4286, %v4285
    %v4324 = vpack.c.b16 %v4288, %v4287
    %v4325 = vpack.c.b16 %v4290, %v4289
    %v4326 = vpack.c.b16 %v4292, %v4291
    %v4327 = vpack.c.b16 %v4294, %v4293
    %v4328 = vpack.c.b16 %v4296, %v4295
    %4361 = vmatprep.subr.bf16.mxu0 0
    %4362 = vmatpush1.bf16.msra.mxu0 %v4297
    %4363 = vmatprep.subr.bf16.mxu0 0
    %4364 = vmatpush1.bf16.msra.mxu0 %v4298
    %4365 = vmatprep.subr.bf16.mxu0 0
    %4366 = vmatpush1.bf16.msra.mxu0 %v4299
    %4367 = vmatprep.subr.bf16.mxu0 0
    %4368 = vmatpush1.bf16.msra.mxu0 %v4300
    %4369 = vmatprep.subr.bf16.mxu0 0
    %4370 = vmatpush1.bf16.msra.mxu0 %v4301
    %4371 = vmatprep.subr.bf16.mxu0 0
    %4372 = vmatpush1.bf16.msra.mxu0 %v4302
    %4373 = vmatprep.subr.bf16.mxu0 0
    %4374 = vmatpush1.bf16.msra.mxu0 %v4303
    %4375 = vmatprep.subr.bf16.mxu0 0
    %4376 = vmatpush1.bf16.msra.mxu0 %v4304
    %4377 = vmatprep.subr.bf16.mxu0 0
    %4378 = vmatpush1.bf16.msra.mxu0 %v4305
    %4379 = vmatprep.subr.bf16.mxu0 0
    %4380 = vmatpush1.bf16.msra.mxu0 %v4306
    %4381 = vmatprep.subr.bf16.mxu0 0
    %4382 = vmatpush1.bf16.msra.mxu0 %v4307
    %4383 = vmatprep.subr.bf16.mxu0 0
    %4384 = vmatpush1.bf16.msra.mxu0 %v4308
    %4385 = vmatprep.subr.bf16.mxu0 0
    %4386 = vmatpush1.bf16.msra.mxu0 %v4309
    %4387 = vmatprep.subr.bf16.mxu0 0
    %4388 = vmatpush1.bf16.msra.mxu0 %v4310
    %4389 = vmatprep.subr.bf16.mxu0 0
    %4390 = vmatpush1.bf16.msra.mxu0 %v4311
    %4391 = vmatprep.subr.bf16.mxu0 0
    %4392 = vmatpush1.bf16.msra.mxu0 %v4312
    %4393 = vmatprep.mubr.bf16.mxu0 %v4093
    %4394 = vmatmul.mubr.bf16.gmra.mrb[0].mxu0 %v4092
    %v4395 = vpop.f32.mrb[0].mxu0
    %v4396 = vadd.f32 %v4167, %v4395
    %v4397 = vpop.f32.mrb[0].mxu0
    %v4398 = vpop.f32.mrb[0].mxu0
    %v4399 = vadd.f32 %v4167, %v4398
    %v4400 = vpop.f32.mrb[0].mxu0
    %4401 = vdwg.mxu0
    %4402 = vmatprep.subr.bf16.mxu0 0
    %4403 = vmatpush1.bf16.msra.mxu0 %v4313
    %4404 = vmatprep.subr.bf16.mxu0 0
    %4405 = vmatpush1.bf16.msra.mxu0 %v4314
    %4406 = vmatprep.subr.bf16.mxu0 0
    %4407 = vmatpush1.bf16.msra.mxu0 %v4315
    %4408 = vmatprep.subr.bf16.mxu0 0
    %4409 = vmatpush1.bf16.msra.mxu0 %v4316
    %4410 = vmatprep.subr.bf16.mxu0 0
    %4411 = vmatpush1.bf16.msra.mxu0 %v4317
    %4412 = vmatprep.subr.bf16.mxu0 0
    %4413 = vmatpush1.bf16.msra.mxu0 %v4318
    %4414 = vmatprep.subr.bf16.mxu0 0
    %4415 = vmatpush1.bf16.msra.mxu0 %v4319
    %4416 = vmatprep.subr.bf16.mxu0 0
    %4417 = vmatpush1.bf16.msra.mxu0 %v4320
    %4418 = vmatprep.subr.bf16.mxu0 0
    %4419 = vmatpush1.bf16.msra.mxu0 %v4321
    %4420 = vmatprep.subr.bf16.mxu0 0
    %4421 = vmatpush1.bf16.msra.mxu0 %v4322
    %4422 = vmatprep.subr.bf16.mxu0 0
    %4423 = vmatpush1.bf16.msra.mxu0 %v4323
    %4424 = vmatprep.subr.bf16.mxu0 0
    %4425 = vmatpush1.bf16.msra.mxu0 %v4324
    %4426 = vmatprep.subr.bf16.mxu0 0
    %4427 = vmatpush1.bf16.msra.mxu0 %v4325
    %4428 = vmatprep.subr.bf16.mxu0 0
    %4429 = vmatpush1.bf16.msra.mxu0 %v4326
    %4430 = vmatprep.subr.bf16.mxu0 0
    %4431 = vmatpush1.bf16.msra.mxu0 %v4327
    %4432 = vmatprep.subr.bf16.mxu0 0
    %4433 = vmatpush1.bf16.msra.mxu0 %v4328
    %4434 = vmatprep.mubr.bf16.mxu0 %v4095
    %4435 = vmatmul.mubr.bf16.gmra.mrb[0].mxu0 %v4094
    %v4436 = vpop.f32.mrb[0].mxu0
    %v4437 = vadd.f32 %v4396, %v4436
    %v4438 = vpop.f32.mrb[0].mxu0
    %v4439 = vpop.f32.mrb[0].mxu0
    %v4440 = vadd.f32 %v4399, %v4439
    %v4441 = vpop.f32.mrb[0].mxu0
    %4442 = vdwg.mxu0
    %v4443 = vadd.f32 %v3705, %v4437
    %v4444 = vadd.f32 %v3706, %v4440
    %v4445 = vld [vmem:[%s15] sm:$0x1]
    %v4446 = vld [vmem:[%s16] sm:$0x1]
    %4447 = vadd.xlane.f32.xlu0 %v4443
    %v4448 = vpop.xlane.xlu0 %4447
    %4449 = vadd.xlane.f32.xlu0 %v4444
    %v4450 = vpop.xlane.xlu0 %4449
    %v4451 = vmul.f32 %v4448, %v243
    %v4452 = vmul.f32 %v4450, %v243
    %v4453 = vsub.f32 %v4443, %v4451
    %v4454 = vsub.f32 %v4444, %v4452
    %v4455 = vmul.f32 %v4453, %v4453
    %v4456 = vmul.f32 %v4454, %v4454
    %4457 = vadd.xlane.f32.xlu0 %v4455
    %v4458 = vpop.xlane.xlu0 %4457
    %4459 = vadd.xlane.f32.xlu0 %v4456
    %v4460 = vpop.xlane.xlu0 %4459
    %v4461 = vmul.f32 %v4458, %v243
    %v4462 = vmul.f32 %v4460, %v243
    %v4463 = vadd.f32 %v4461, 1e-05
    %v4464 = vadd.f32 %v4462, 1e-05
    %v4465 = vrsqrt.pop %v4463
    %v4466 = vrsqrt.pop %v4464
    %v4467 = vmul.f32 %v4453, %v4465
    %v4468 = vmul.f32 %v4454, %v4466
    %v4470 = vlaneseq
    %v4471 = vshrl.u32 %v4470, 7
    %v4472 = vsub.s32 0, %v4471
    %v4473 = vrot.slane %v4445, %v4472
    %v4475 = vmul.f32 %v4467, %v4473
    %v4476 = vmul.f32 %v4468, %v4473
    %v4478 = vlaneseq
    %v4479 = vshrl.u32 %v4478, 7
    %v4480 = vsub.s32 0, %v4479
    %v4481 = vrot.slane %v4446, %v4480
    %v4483 = vadd.f32 %v4475, %v4481
    %v4484 = vadd.f32 %v4476, %v4481
    %4485 = vst [vmem:[#allocation17] sm:$0xff] %v4483
    %4486 = vst [vmem:[#allocation17 + $0x8] sm:$0xff] %v4484
    // Predicated region
    $region106: #{tpu_custom_call.1} parent=1 // pred_check
      _
    $region107: #{tpu_custom_call.1} parent=1 // pred_check_branch
      %4488 = sbr.rel (0) target = $region109
    $region108: #{tpu_custom_call.1} parent=1 // pred_region
      %s4490 = ssub.s32 256, 256
      %4491 = vsyncadd [#allocation4], %s4490
      %s4492 = sshll.u32 [#allocation17], 4
      %s4493 = int_to_ptr.vmem [resolvable:$true] %s4492
      %4498 = dma.vmem_to_hbm [thread:$0]  %s4493, 256, %s17, [#allocation4], 128, 128, 8
    $region109: #{tpu_custom_call.1} parent=1 // pred_fallthru
      _
    // Predicated region
    $region110: #{tpu_custom_call.1} parent=1 // pred_check
      _
    $region111: #{tpu_custom_call.1} parent=1 // pred_check_branch
      %4500 = sbr.rel (0) target = $region113
    $region112: #{tpu_custom_call.1} parent=1 // pred_region
      %4501 = dma.done [#allocation4], 256
    $region113: #{tpu_custom_call.1} parent=1 // pred_fallthru
      _
    %4502 = vsyncpa [#allocation3], 1
    %4503 = vsyncpa [#allocation6], 1
    %4504 = vsyncpa [#allocation9], 1
    %4505 = vsyncpa [#allocation12], 1
    %4506 = vsyncpa [#allocation15], 1
    %4507 = vsyncpa [#allocation4], 1

</llo_original>
